<compile_context>
chip_gen: v7x
topology: tpu7x:2x2x1
jax: 0.10.0
libtpu: 0.0.40
codegen_flags: <defaults>
</compile_context>

<pallas_src>
import functools

import jax
import jax.numpy as jnp
from jax.experimental import pallas as pl
from jax.experimental.pallas import tpu as pltpu

LEAKY_SLOPE = 0.1
BN_EPS = 1e-5


def _vmem_limit_bytes():
    """Explicit scoped-VMEM budget (defaults are only 16/32 MiB)."""
    try:
        cap = pltpu.get_tpu_info().vmem_capacity_bytes  # 128 MiB v5e/v6e, 64 MiB v7x
    except Exception:
        cap = 64 * 1024 * 1024
    return int(max(32 * 1024 * 1024, min(int(cap * 0.85), 116 * 1024 * 1024)))


def _cout_tile(cout):
    # One lane-dense tile for every ResNet12-MTL stage (Cout <= 640) so the
    # folded weight is DMA'd exactly once; fall back to 128-wide tiles only
    # for very large Cout.
    if cout <= 640 or cout % 128 != 0:
        return cout
    return 128


# ---------------------------------------------------------------------------
# Kernel A: 3x3 conv (pad=1, stride=1) for one image + partial BN statistics
# ---------------------------------------------------------------------------
def _conv3x3_stats_kernel(x_ref, w_ref, conv_ref, stats_ref, xk_ref, *, H, W):
    """Flattened-row layout: spatial positions are rows (sublanes), channels
    are lanes, so every matmul is a plain 2D (rows, K) x (K, TC) contraction.

    x_ref    : (H*W, Cin)        bf16 image (flattened NHWC rows)
    w_ref    : (3, 3*Cin, TC)    bf16 weights; (kw, cin) folded into K, kh major
    conv_ref : (H*W, TC)         bf16 conv output (pre-BN)
    stats_ref: (2, TC)           f32 [sum, sum-of-squares] over this image
    xk_ref   : ((H+2)*W, 3*Cin)  bf16 scratch: kw-unrolled, zero-padded rows
    """
    hw = H * W
    cin = x_ref.shape[-1]

    # Build the kw-unrolled padded buffer once per image.  The Cout grid axis
    # is the inner "arbitrary" axis, so the scratch persists across it and is
    # NOT rebuilt (or re-zeroed) for every Cout tile.  Only the two padding
    # row-slabs are zeroed, never the whole buffer.
    @pl.when(pl.program_id(1) == 0)
    def _build():
        x2 = x_ref[...]                                          # (H*W, Cin)
        zrow = jnp.zeros((1, cin), jnp.bfloat16)
        # +-1 column shifts become +-1 row shifts in the flattened layout;
        # w==0 / w==W-1 edges are masked to zero (left / right padding).
        col = jax.lax.broadcasted_iota(jnp.int32, (hw, 1), 0) % W
        shift_dn = jnp.concatenate([zrow, x2[:hw - 1, :]], axis=0)  # j <- j-1
        shift_up = jnp.concatenate([x2[1:, :], zrow], axis=0)       # j <- j+1
        left = jnp.where(col != 0, shift_dn, jnp.zeros_like(shift_dn))
        right = jnp.where(col != W - 1, shift_up, jnp.zeros_like(shift_up))
        zpad = jnp.zeros((W, 3 * cin), jnp.bfloat16)
        xk_ref[0:W, :] = zpad                         # top padding row (h=-1)
        xk_ref[W + hw:2 * W + hw, :] = zpad           # bottom padding row (h=H)
        xk_ref[W:W + hw, :] = jnp.concatenate([left, x2, right], axis=1)

    # 3x3 conv = 3 kh-taps of a K = 3*Cin matmul (kw folded into K).  The
    # first tap assigns (no redundant accumulator zero), the rest accumulate
    # in f32.
    if W % 8 == 0:
        acc = jnp.dot(xk_ref[0:hw, :], w_ref[0],
                      preferred_element_type=jnp.float32)
        acc = acc + jnp.dot(xk_ref[W:W + hw, :], w_ref[1],
                            preferred_element_type=jnp.float32)
        acc = acc + jnp.dot(xk_ref[2 * W:2 * W + hw, :], w_ref[2],
                            preferred_element_type=jnp.float32)
    else:
        # W not a multiple of 8: keep the wide bf16 MXU reads aligned and
        # row-shift the narrow f32 results instead (tiny relayout).
        xk = xk_ref[...]
        acc = jnp.dot(xk, w_ref[0],
                      preferred_element_type=jnp.float32)[0:hw, :]
        acc = acc + jnp.dot(xk, w_ref[1],
                            preferred_element_type=jnp.float32)[W:W + hw, :]
        acc = acc + jnp.dot(xk, w_ref[2],
                            preferred_element_type=jnp.float32)[2 * W:2 * W + hw, :]

    conv_ref[...] = acc.astype(conv_ref.dtype)

    # Partial BatchNorm statistics (this image, this Cout tile) in f32.
    stats_ref[0:1, :] = jnp.sum(acc, axis=0, keepdims=True)
    stats_ref[1:2, :] = jnp.sum(acc * acc, axis=0, keepdims=True)


def _conv3x3_stats(x_flat, w_fold, *, H, W):
    """x_flat: (N, H*W, Cin) bf16; w_fold: (3, 3*Cin, Cout) bf16."""
    N, HW, Cin = x_flat.shape
    assert HW == H * W
    Cout = w_fold.shape[-1]
    tc = _cout_tile(Cout)
    n_ct = Cout // tc
    grid = (N, n_ct)

    if n_ct == 1 and Cout >= 256:
        # Weight block index never changes across the grid -> single-buffer it
        # (double-buffering a constant block only doubles its VMEM footprint).
        w_spec = pl.BlockSpec((3, 3 * Cin, tc), lambda bi, ci: (0, 0, ci),
                              pipeline_mode=pl.Buffered(1))
    else:
        w_spec = pl.BlockSpec((3, 3 * Cin, tc), lambda bi, ci: (0, 0, ci))

    return pl.pallas_call(
        functools.partial(_conv3x3_stats_kernel, H=H, W=W),
        out_shape=(
            jax.ShapeDtypeStruct((N, HW, Cout), jnp.bfloat16),   # conv output
            jax.ShapeDtypeStruct((N, 2, Cout), jnp.float32),     # partial stats
        ),
        grid=grid,
        in_specs=[
            pl.BlockSpec((None, HW, Cin), lambda bi, ci: (bi, 0, 0)),
            w_spec,
        ],
        out_specs=(
            pl.BlockSpec((None, HW, tc), lambda bi, ci: (bi, 0, ci)),
            pl.BlockSpec((None, 2, tc), lambda bi, ci: (bi, 0, ci)),
        ),
        scratch_shapes=[pltpu.VMEM(((H + 2) * W, 3 * Cin), jnp.bfloat16)],
        compiler_params=pltpu.CompilerParams(
            dimension_semantics=("parallel", "arbitrary"),
            vmem_limit_bytes=_vmem_limit_bytes()),
    )(x_flat, w_fold)


# ---------------------------------------------------------------------------
# Kernel B: BatchNorm normalize + LeakyReLU (+ residual) -- elementwise pass
# ---------------------------------------------------------------------------
def _bn_act_kernel(conv_ref, stats_ref, gamma_ref, beta_ref, *rest,
                   add_residual):
    """conv_ref: (H*W, TC) bf16; stats_ref: (N, 2, TC) f32 partial sums;
    gamma/beta: (1, TC) f32; res_ref: (H*W, TC) bf16 (only if add_residual);
    out_ref: (H*W, TC)."""
    if add_residual:
        res_ref, out_ref = rest
    else:
        (out_ref,) = rest

    hw = conv_ref.shape[0]
    n = stats_ref.shape[0]
    inv_count = 1.0 / float(n * hw)

    s = jnp.sum(stats_ref[...], axis=0)                       # (2, TC)
    mean = s[0:1, :] * inv_count
    # TODO(synk): one-pass E[x^2] - mean^2 can cancel badly when |mean| >> std;
    # a centered second reduction pass would match PyTorch BN more tightly.
    var = jnp.maximum(s[1:2, :] * inv_count - mean * mean, 0.0)

    scale = gamma_ref[...] * jax.lax.rsqrt(var + BN_EPS)      # (1, TC)
    shift = beta_ref[...] - mean * scale

    y = conv_ref[...].astype(jnp.float32) * scale + shift
    if add_residual:
        # conv3 path: bn3 -> add residual -> single LeakyReLU (PyTorch order).
        y = y + res_ref[...].astype(jnp.float32)
    out_ref[...] = jnp.where(y > 0, y, LEAKY_SLOPE * y).astype(out_ref.dtype)


def _bn_act(conv, stats, gamma, beta, residual=None, out_dtype=jnp.bfloat16):
    N, HW, Cout = conv.shape
    assert stats.shape == (N, 2, Cout)
    tc = _cout_tile(Cout)
    n_ct = Cout // tc
    grid = (N, n_ct)

    in_specs = [
        pl.BlockSpec((None, HW, tc), lambda bi, ci: (bi, 0, ci)),
        pl.BlockSpec((N, 2, tc), lambda bi, ci: (0, 0, ci)),
        pl.BlockSpec((1, tc), lambda bi, ci: (0, ci)),
        pl.BlockSpec((1, tc), lambda bi, ci: (0, ci)),
    ]
    args = [conv, stats, gamma, beta]
    if residual is not None:
        in_specs.append(pl.BlockSpec((None, HW, tc), lambda bi, ci: (bi, 0, ci)))
        args.append(residual)

    return pl.pallas_call(
        functools.partial(_bn_act_kernel, add_residual=residual is not None),
        out_shape=jax.ShapeDtypeStruct((N, HW, Cout), out_dtype),
        grid=grid,
        in_specs=in_specs,
        out_specs=pl.BlockSpec((None, HW, tc), lambda bi, ci: (bi, 0, ci)),
        compiler_params=pltpu.CompilerParams(
            dimension_semantics=("parallel", "parallel"),
            vmem_limit_bytes=_vmem_limit_bytes()),
    )(*args)


def _conv_bn_act(x_flat, w, gamma, beta, H, W, residual=None,
                 out_dtype=jnp.bfloat16):
    conv, stats = _conv3x3_stats(x_flat, w, H=H, W=W)
    return _bn_act(conv, stats, gamma, beta, residual=residual,
                   out_dtype=out_dtype)


# ---------------------------------------------------------------------------
# Parameters and block forward
# ---------------------------------------------------------------------------
def init_basic_block_params(key, inplanes, planes):
    """Deterministic parameter init (Conv2dMtl with default mtl params is a
    plain 3x3 conv, bias=False; BatchNorm2d default gamma=1, beta=0)."""
    k1, k2, k3 = jax.random.split(key, 3)

    def conv_w(k, cin, cout):
        w = jax.random.normal(k, (3, 3, cin, cout), jnp.float32)
        w = w * (0.1 / jnp.sqrt(9.0 * cin))
        # Fold (kw, cin) into the contraction dim: (kh, kw*cin + ci, cout).
        return w.reshape(3, 3 * cin, cout).astype(jnp.bfloat16)

    return {
        "w1": conv_w(k1, inplanes, planes),
        "w2": conv_w(k2, planes, planes),
        "w3": conv_w(k3, planes, planes),
        "g1": jnp.ones((1, planes), jnp.float32),
        "b1": jnp.zeros((1, planes), jnp.float32),
        "g2": jnp.ones((1, planes), jnp.float32),
        "b2": jnp.zeros((1, planes), jnp.float32),
        "g3": jnp.ones((1, planes), jnp.float32),
        "b3": jnp.zeros((1, planes), jnp.float32),
    }


def basic_block_forward_nhwc(x_nhwc, params, stride=1):
    """NHWC forward of BasicBlock (downsample=None, drop_rate=0.0).
    Preferred entry point for a full NHWC network (no per-block transposes)."""
    N, H, W, C = x_nhwc.shape
    # Cast to bf16 once at the block boundary (halves HBM read traffic); the
    # flat (N, H*W, C) view is a free, layout-preserving reshape.
    xb = x_nhwc.astype(jnp.bfloat16).reshape(N, H * W, C)

    o = _conv_bn_act(xb, params["w1"], params["g1"], params["b1"], H, W)
    o = _conv_bn_act(o, params["w2"], params["g2"], params["b2"], H, W)
    # conv3 + bn3 + residual add + LeakyReLU fused in the normalize kernel.
    o = _conv_bn_act(o, params["w3"], params["g3"], params["b3"], H, W,
                     residual=xb, out_dtype=jnp.float32)

    out = o.reshape(N, H, W, params["w3"].shape[-1])

    # nn.MaxPool2d(stride): default stride=1 -> kernel_size=1 -> identity.
    if stride > 1:
        # TODO(synk): fold the strided max-pool into the bn/act kernel epilogue.
        Hs, Ws = (H // stride) * stride, (W // stride) * stride
        out = out[:, :Hs, :Ws, :]
        out = out.reshape(N, H // stride, stride, W // stride, stride,
                          out.shape[-1]).max(axis=(2, 4))

    # drop_rate == 0.0 -> dropout is a no-op.  BatchNorm running stats /
    # num_batches_tracked bookkeeping is intentionally not modelled.
    return out


@functools.partial(jax.jit, static_argnames=("stride",))
def basic_block_forward(x_nchw, params, stride=1):
    """NCHW wrapper matching the PyTorch interface.  For a full NHWC network,
    call basic_block_forward_nhwc directly and hoist these two transposes to
    the model boundary (they are two extra HBM passes per block)."""
    x = jnp.transpose(x_nchw, (0, 2, 3, 1))      # NCHW -> NHWC
    out = basic_block_forward_nhwc(x, params, stride=stride)
    return jnp.transpose(out, (0, 3, 1, 2))      # NHWC -> NCHW


if __name__ == "__main__":
    key = jax.random.PRNGKey(0)
    k_x, k_p = jax.random.split(key)

    # Small shapes: batch=2, inplanes=planes=4, spatial=16 (NCHW like PyTorch).
    N, C, H, W = 2, 4, 16, 16
    x = jax.random.normal(k_x, (N, C, H, W), jnp.float32)
    params = init_basic_block_params(k_p, inplanes=C, planes=C)

    out = basic_block_forward(x, params, stride=1)
    out = jax.block_until_ready(out)

    assert out.shape == (N, C, H, W), out.shape
    assert out.dtype == jnp.float32, out.dtype
    print("KERNEL_OK")
</pallas_src>

<mosaic_0001>
module attributes {stable_mosaic.version = 11 : i64} {
  func.func @_conv3x3_stats_kernel(%arg0: i32, %arg1: i32, %arg2: memref<1x256x4xbf16, #tpu.memory_space<vmem>>, %arg3: memref<3x12x4xbf16, #tpu.memory_space<vmem>>, %arg4: memref<1x256x4xbf16, #tpu.memory_space<vmem>>, %arg5: memref<1x2x4xf32, #tpu.memory_space<vmem>>, %arg6: memref<288x12xbf16, #tpu.memory_space<vmem>>) attributes {dimension_semantics = [#tpu.dimension_semantics<parallel>, #tpu.dimension_semantics<arbitrary>], iteration_bounds = array<i64: 2, 1>, scalar_prefetch = 0 : i64, scratch_operands = 1 : i64, tpu.core_type = #tpu.core_type<tc>, window_params = [{transform_indices = @transform_0, window_bounds = array<i64: 1, 256, 4>}, {transform_indices = @transform_1, window_bounds = array<i64: 3, 12, 4>}, {transform_indices = @transform_2, window_bounds = array<i64: 1, 256, 4>}, {transform_indices = @transform_3, window_bounds = array<i64: 1, 2, 4>}]} {
    %c0_i32 = arith.constant 0 : i32
    %0 = arith.cmpi eq, %arg1, %c0_i32 : i32
    %1 = arith.extui %0 : i1 to i32
    %c0_i32_0 = arith.constant 0 : i32
    %2 = arith.cmpi ne, %1, %c0_i32_0 : i32
    scf.if %2 {
      %c0_24 = arith.constant 0 : index
      %c0_25 = arith.constant 0 : index
      %c0_26 = arith.constant 0 : index
      %32 = vector.load %arg2[%c0_24, %c0_25, %c0_26] : memref<1x256x4xbf16, #tpu.memory_space<vmem>>, vector<1x256x4xbf16>
      %33 = vector.shape_cast %32 : vector<1x256x4xbf16> to vector<256x4xbf16>
      %cst_27 = arith.constant 0.000000e+00 : bf16
      %34 = vector.broadcast %cst_27 : bf16 to vector<1x4xbf16>
      %35 = tpu.iota {dimensions = array<i32: 0>} : vector<256x1xi32>
      %c16_i32 = arith.constant 16 : i32
      %c0_i32_28 = arith.constant 0 : i32
      %36 = arith.cmpi eq, %c16_i32, %c0_i32_28 : i32
      %c1_i32 = arith.constant 1 : i32
      %37 = arith.select %36, %c1_i32, %c16_i32 : i32
      %38 = vector.broadcast %37 : i32 to vector<256x1xi32>
      %39 = arith.remsi %35, %38 : vector<256x1xi32>
      %c0_i32_29 = arith.constant 0 : i32
      %40 = vector.broadcast %c0_i32_29 : i32 to vector<256x1xi32>
      %41 = arith.cmpi ne, %39, %40 : vector<256x1xi32>
      %c0_i32_30 = arith.constant 0 : i32
      %42 = vector.broadcast %c0_i32_30 : i32 to vector<256x1xi32>
      %43 = arith.cmpi slt, %39, %42 : vector<256x1xi32>
      %c0_i32_31 = arith.constant 0 : i32
      %44 = arith.cmpi slt, %37, %c0_i32_31 : i32
      %45 = vector.broadcast %44 : i1 to vector<256x1xi1>
      %46 = vector.broadcast %45 : vector<256x1xi1> to vector<256x1xi1>
      %47 = arith.xori %43, %46 : vector<256x1xi1>
      %48 = arith.andi %47, %41 : vector<256x1xi1>
      %49 = vector.broadcast %37 : i32 to vector<256x1xi32>
      %50 = arith.addi %39, %49 : vector<256x1xi32>
      %51 = arith.select %48, %50, %39 : vector<256x1xi1>, vector<256x1xi32>
      %52 = vector.extract_strided_slice %33 {offsets = [0, 0], sizes = [255, 4], strides = [1, 1]} : vector<256x4xbf16> to vector<255x4xbf16>
      %53 = tpu.concatenate %34, %52 in 0 : vector<1x4xbf16>, vector<255x4xbf16> -> vector<256x4xbf16>
      %54 = vector.extract_strided_slice %33 {offsets = [1, 0], sizes = [255, 4], strides = [1, 1]} : vector<256x4xbf16> to vector<255x4xbf16>
      %55 = tpu.concatenate %54, %34 in 0 : vector<255x4xbf16>, vector<1x4xbf16> -> vector<256x4xbf16>
      %c0_i32_32 = arith.constant 0 : i32
      %56 = vector.broadcast %c0_i32_32 : i32 to vector<256x1xi32>
      %57 = arith.cmpi ne, %51, %56 : vector<256x1xi32>
      %cst_33 = arith.constant 0.000000e+00 : bf16
      %58 = vector.broadcast %cst_33 : bf16 to vector<256x4xbf16>
      %59 = vector.shape_cast %57 : vector<256x1xi1> to vector<256x1xi1>
      %60 = vector.broadcast %59 : vector<256x1xi1> to vector<256x4xi1>
      %61 = arith.select %60, %53, %58 : vector<256x4xi1>, vector<256x4xbf16>
      %c15_i32 = arith.constant 15 : i32
      %62 = vector.broadcast %c15_i32 : i32 to vector<256x1xi32>
      %63 = arith.cmpi ne, %51, %62 : vector<256x1xi32>
      %cst_34 = arith.constant 0.000000e+00 : bf16
      %64 = vector.broadcast %cst_34 : bf16 to vector<256x4xbf16>
      %65 = vector.shape_cast %63 : vector<256x1xi1> to vector<256x1xi1>
      %66 = vector.broadcast %65 : vector<256x1xi1> to vector<256x4xi1>
      %67 = arith.select %66, %55, %64 : vector<256x4xi1>, vector<256x4xbf16>
      %cst_35 = arith.constant 0.000000e+00 : bf16
      %68 = vector.broadcast %cst_35 : bf16 to vector<16x12xbf16>
      %c0_36 = arith.constant 0 : index
      %c0_37 = arith.constant 0 : index
      %69 = vector.load %arg6[%c0_36, %c0_37] : memref<288x12xbf16, #tpu.memory_space<vmem>>, vector<16x12xbf16>
      tpu.vector_store %arg6[%c0_36, %c0_37], %68 {strides = array<i32>} : memref<288x12xbf16, #tpu.memory_space<vmem>>, vector<16x12xbf16>,
      %c272 = arith.constant 272 : index
      %c0_38 = arith.constant 0 : index
      %70 = vector.load %arg6[%c272, %c0_38] : memref<288x12xbf16, #tpu.memory_space<vmem>>, vector<16x12xbf16>
      tpu.vector_store %arg6[%c272, %c0_38], %68 {strides = array<i32>} : memref<288x12xbf16, #tpu.memory_space<vmem>>, vector<16x12xbf16>,
      %71 = tpu.concatenate %61, %33, %67 in 1 : vector<256x4xbf16>, vector<256x4xbf16>, vector<256x4xbf16> -> vector<256x12xbf16>
      %c16_39 = arith.constant 16 : index
      %c0_40 = arith.constant 0 : index
      %72 = vector.load %arg6[%c16_39, %c0_40] : memref<288x12xbf16, #tpu.memory_space<vmem>>, vector<256x12xbf16>
      tpu.vector_store %arg6[%c16_39, %c0_40], %71 {strides = array<i32>} : memref<288x12xbf16, #tpu.memory_space<vmem>>, vector<256x12xbf16>,
    } else {
    }
    %c0 = arith.constant 0 : index
    %c0_1 = arith.constant 0 : index
    %3 = vector.load %arg6[%c0, %c0_1] : memref<288x12xbf16, #tpu.memory_space<vmem>>, vector<256x12xbf16>
    %c0_2 = arith.constant 0 : index
    %c0_3 = arith.constant 0 : index
    %c0_4 = arith.constant 0 : index
    %4 = vector.load %arg3[%c0_2, %c0_3, %c0_4] : memref<3x12x4xbf16, #tpu.memory_space<vmem>>, vector<1x12x4xbf16>
    %5 = vector.shape_cast %4 : vector<1x12x4xbf16> to vector<12x4xbf16>
    %cst = arith.constant dense<0.000000e+00> : vector<256x4xf32>
    %6 = tpu.matmul %3, %5, %cst {dimension_numbers = #tpu.dot_dimension_numbers<[1], [0], [0], [1], [0, 0, 1, 1], [], []>} : vector<256x12xbf16>, vector<12x4xbf16>, vector<256x4xf32> -> vector<256x4xf32>
    %c16 = arith.constant 16 : index
    %c0_5 = arith.constant 0 : index
    %7 = vector.load %arg6[%c16, %c0_5] : memref<288x12xbf16, #tpu.memory_space<vmem>>, vector<256x12xbf16>
    %c1 = arith.constant 1 : index
    %c0_6 = arith.constant 0 : index
    %c0_7 = arith.constant 0 : index
    %8 = vector.load %arg3[%c1, %c0_6, %c0_7] : memref<3x12x4xbf16, #tpu.memory_space<vmem>>, vector<1x12x4xbf16>
    %9 = vector.shape_cast %8 : vector<1x12x4xbf16> to vector<12x4xbf16>
    %cst_8 = arith.constant dense<0.000000e+00> : vector<256x4xf32>
    %10 = tpu.matmul %7, %9, %cst_8 {dimension_numbers = #tpu.dot_dimension_numbers<[1], [0], [0], [1], [0, 0, 1, 1], [], []>} : vector<256x12xbf16>, vector<12x4xbf16>, vector<256x4xf32> -> vector<256x4xf32>
    %11 = arith.addf %6, %10 : vector<256x4xf32>
    %c32 = arith.constant 32 : index
    %c0_9 = arith.constant 0 : index
    %12 = vector.load %arg6[%c32, %c0_9] : memref<288x12xbf16, #tpu.memory_space<vmem>>, vector<256x12xbf16>
    %c2 = arith.constant 2 : index
    %c0_10 = arith.constant 0 : index
    %c0_11 = arith.constant 0 : index
    %13 = vector.load %arg3[%c2, %c0_10, %c0_11] : memref<3x12x4xbf16, #tpu.memory_space<vmem>>, vector<1x12x4xbf16>
    %14 = vector.shape_cast %13 : vector<1x12x4xbf16> to vector<12x4xbf16>
    %cst_12 = arith.constant dense<0.000000e+00> : vector<256x4xf32>
    %15 = tpu.matmul %12, %14, %cst_12 {dimension_numbers = #tpu.dot_dimension_numbers<[1], [0], [0], [1], [0, 0, 1, 1], [], []>} : vector<256x12xbf16>, vector<12x4xbf16>, vector<256x4xf32> -> vector<256x4xf32>
    %16 = arith.addf %11, %15 : vector<256x4xf32>
    %17 = arith.truncf %16 : vector<256x4xf32> to vector<256x4xbf16>
    %c0_13 = arith.constant 0 : index
    %c0_14 = arith.constant 0 : index
    %c0_15 = arith.constant 0 : index
    %18 = vector.load %arg4[%c0_13, %c0_14, %c0_15] : memref<1x256x4xbf16, #tpu.memory_space<vmem>>, vector<1x256x4xbf16>
    %19 = vector.shape_cast %18 : vector<1x256x4xbf16> to vector<256x4xbf16>
    %20 = vector.shape_cast %17 : vector<256x4xbf16> to vector<1x256x4xbf16>
    tpu.vector_store %arg4[%c0_13, %c0_14, %c0_15], %20 {strides = array<i32>} : memref<1x256x4xbf16, #tpu.memory_space<vmem>>, vector<1x256x4xbf16>,
    %cst_16 = arith.constant dense<0.000000e+00> : vector<4xf32>
    %21 = vector.multi_reduction <add>, %16, %cst_16 [0] : vector<256x4xf32> to vector<4xf32>
    %22 = vector.shape_cast %21 : vector<4xf32> to vector<1x4xf32>
    %c0_17 = arith.constant 0 : index
    %c0_18 = arith.constant 0 : index
    %c0_19 = arith.constant 0 : index
    %23 = vector.load %arg5[%c0_17, %c0_18, %c0_19] : memref<1x2x4xf32, #tpu.memory_space<vmem>>, vector<1x1x4xf32>
    %24 = vector.shape_cast %23 : vector<1x1x4xf32> to vector<1x4xf32>
    %25 = vector.shape_cast %22 : vector<1x4xf32> to vector<1x1x4xf32>
    tpu.vector_store %arg5[%c0_17, %c0_18, %c0_19], %25 {strides = array<i32>} : memref<1x2x4xf32, #tpu.memory_space<vmem>>, vector<1x1x4xf32>,
    %26 = arith.mulf %16, %16 : vector<256x4xf32>
    %cst_20 = arith.constant dense<0.000000e+00> : vector<4xf32>
    %27 = vector.multi_reduction <add>, %26, %cst_20 [0] : vector<256x4xf32> to vector<4xf32>
    %28 = vector.shape_cast %27 : vector<4xf32> to vector<1x4xf32>
    %c0_21 = arith.constant 0 : index
    %c1_22 = arith.constant 1 : index
    %c0_23 = arith.constant 0 : index
    %29 = vector.load %arg5[%c0_21, %c1_22, %c0_23] : memref<1x2x4xf32, #tpu.memory_space<vmem>>, vector<1x1x4xf32>
    %30 = vector.shape_cast %29 : vector<1x1x4xf32> to vector<1x4xf32>
    %31 = vector.shape_cast %28 : vector<1x4xf32> to vector<1x1x4xf32>
    tpu.vector_store %arg5[%c0_21, %c1_22, %c0_23], %31 {strides = array<i32>} : memref<1x2x4xf32, #tpu.memory_space<vmem>>, vector<1x1x4xf32>,
    return
  }
  func.func @transform_0(%arg0: i32, %arg1: i32) -> (i32, i32, i32) {
    %c0_i32 = arith.constant 0 : i32
    %c0_i32_0 = arith.constant 0 : i32
    %c0_i32_1 = arith.constant 0 : i32
    return %arg0, %c0_i32, %c0_i32_0 : i32, i32, i32
  }
  func.func @transform_1(%arg0: i32, %arg1: i32) -> (i32, i32, i32) {
    %c0_i32 = arith.constant 0 : i32
    %c0_i32_0 = arith.constant 0 : i32
    %c0_i32_1 = arith.constant 0 : i32
    return %c0_i32, %c0_i32_0, %arg1 : i32, i32, i32
  }
  func.func @transform_2(%arg0: i32, %arg1: i32) -> (i32, i32, i32) {
    %c0_i32 = arith.constant 0 : i32
    %c0_i32_0 = arith.constant 0 : i32
    return %arg0, %c0_i32, %arg1 : i32, i32, i32
  }
  func.func @transform_3(%arg0: i32, %arg1: i32) -> (i32, i32, i32) {
    %c0_i32 = arith.constant 0 : i32
    %c0_i32_0 = arith.constant 0 : i32
    return %arg0, %c0_i32, %arg1 : i32, i32, i32
  }
}

module attributes {stable_mosaic.version = 11 : i64} {
  func.func @_bn_act_kernel(%arg0: i32, %arg1: i32, %arg2: memref<1x256x4xbf16, #tpu.memory_space<vmem>>, %arg3: memref<2x2x4xf32, #tpu.memory_space<vmem>>, %arg4: memref<1x4xf32, #tpu.memory_space<vmem>>, %arg5: memref<1x4xf32, #tpu.memory_space<vmem>>, %arg6: memref<1x256x4xbf16, #tpu.memory_space<vmem>>) attributes {dimension_semantics = [#tpu.dimension_semantics<parallel>, #tpu.dimension_semantics<parallel>], iteration_bounds = array<i64: 2, 1>, scalar_prefetch = 0 : i64, scratch_operands = 0 : i64, tpu.core_type = #tpu.core_type<tc>, window_params = [{transform_indices = @transform_0, window_bounds = array<i64: 1, 256, 4>}, {transform_indices = @transform_1, window_bounds = array<i64: 2, 2, 4>}, {transform_indices = @transform_2, window_bounds = array<i64: 1, 4>}, {transform_indices = @transform_3, window_bounds = array<i64: 1, 4>}, {transform_indices = @transform_4, window_bounds = array<i64: 1, 256, 4>}]} {
    %c0 = arith.constant 0 : index
    %c0_0 = arith.constant 0 : index
    %c0_1 = arith.constant 0 : index
    %0 = vector.load %arg3[%c0, %c0_0, %c0_1] : memref<2x2x4xf32, #tpu.memory_space<vmem>>, vector<2x2x4xf32>
    %cst = arith.constant dense<0.000000e+00> : vector<2x4xf32>
    %1 = vector.multi_reduction <add>, %0, %cst [0] : vector<2x2x4xf32> to vector<2x4xf32>
    %2 = vector.extract_strided_slice %1 {offsets = [0, 0], sizes = [1, 4], strides = [1, 1]} : vector<2x4xf32> to vector<1x4xf32>
    %cst_2 = arith.constant 0.001953125 : f32
    %3 = vector.broadcast %cst_2 : f32 to vector<1x4xf32>
    %4 = arith.mulf %2, %3 : vector<1x4xf32>
    %5 = vector.extract_strided_slice %1 {offsets = [1, 0], sizes = [1, 4], strides = [1, 1]} : vector<2x4xf32> to vector<1x4xf32>
    %cst_3 = arith.constant 0.001953125 : f32
    %6 = vector.broadcast %cst_3 : f32 to vector<1x4xf32>
    %7 = arith.mulf %5, %6 : vector<1x4xf32>
    %8 = arith.mulf %4, %4 : vector<1x4xf32>
    %9 = arith.subf %7, %8 : vector<1x4xf32>
    %cst_4 = arith.constant 0.000000e+00 : f32
    %10 = vector.broadcast %cst_4 : f32 to vector<1x4xf32>
    %11 = arith.maximumf %9, %10 : vector<1x4xf32>
    %c0_5 = arith.constant 0 : index
    %c0_6 = arith.constant 0 : index
    %12 = vector.load %arg4[%c0_5, %c0_6] : memref<1x4xf32, #tpu.memory_space<vmem>>, vector<1x4xf32>
    %cst_7 = arith.constant 9.99999974E-6 : f32
    %13 = vector.broadcast %cst_7 : f32 to vector<1x4xf32>
    %14 = arith.addf %11, %13 : vector<1x4xf32>
    %15 = math.rsqrt %14 : vector<1x4xf32>
    %16 = arith.mulf %12, %15 : vector<1x4xf32>
    %c0_8 = arith.constant 0 : index
    %c0_9 = arith.constant 0 : index
    %17 = vector.load %arg5[%c0_8, %c0_9] : memref<1x4xf32, #tpu.memory_space<vmem>>, vector<1x4xf32>
    %18 = arith.mulf %4, %16 : vector<1x4xf32>
    %19 = arith.subf %17, %18 : vector<1x4xf32>
    %c0_10 = arith.constant 0 : index
    %c0_11 = arith.constant 0 : index
    %c0_12 = arith.constant 0 : index
    %20 = vector.load %arg2[%c0_10, %c0_11, %c0_12] : memref<1x256x4xbf16, #tpu.memory_space<vmem>>, vector<1x256x4xbf16>
    %21 = vector.shape_cast %20 : vector<1x256x4xbf16> to vector<256x4xbf16>
    %22 = arith.extf %21 : vector<256x4xbf16> to vector<256x4xf32>
    %23 = vector.broadcast %16 : vector<1x4xf32> to vector<256x4xf32>
    %24 = arith.mulf %22, %23 : vector<256x4xf32>
    %25 = vector.broadcast %19 : vector<1x4xf32> to vector<256x4xf32>
    %26 = arith.addf %24, %25 : vector<256x4xf32>
    %cst_13 = arith.constant 0.000000e+00 : f32
    %27 = vector.broadcast %cst_13 : f32 to vector<256x4xf32>
    %28 = arith.cmpf ogt, %26, %27 : vector<256x4xf32>
    %cst_14 = arith.constant 1.000000e-01 : f32
    %29 = vector.broadcast %cst_14 : f32 to vector<256x4xf32>
    %30 = arith.mulf %29, %26 : vector<256x4xf32>
    %31 = arith.select %28, %26, %30 : vector<256x4xi1>, vector<256x4xf32>
    %32 = arith.truncf %31 : vector<256x4xf32> to vector<256x4xbf16>
    %c0_15 = arith.constant 0 : index
    %c0_16 = arith.constant 0 : index
    %c0_17 = arith.constant 0 : index
    %33 = vector.load %arg6[%c0_15, %c0_16, %c0_17] : memref<1x256x4xbf16, #tpu.memory_space<vmem>>, vector<1x256x4xbf16>
    %34 = vector.shape_cast %33 : vector<1x256x4xbf16> to vector<256x4xbf16>
    %35 = vector.shape_cast %32 : vector<256x4xbf16> to vector<1x256x4xbf16>
    tpu.vector_store %arg6[%c0_15, %c0_16, %c0_17], %35 {strides = array<i32>} : memref<1x256x4xbf16, #tpu.memory_space<vmem>>, vector<1x256x4xbf16>,
    return
  }
  func.func @transform_0(%arg0: i32, %arg1: i32) -> (i32, i32, i32) {
    %c0_i32 = arith.constant 0 : i32
    %c0_i32_0 = arith.constant 0 : i32
    return %arg0, %c0_i32, %arg1 : i32, i32, i32
  }
  func.func @transform_1(%arg0: i32, %arg1: i32) -> (i32, i32, i32) {
    %c0_i32 = arith.constant 0 : i32
    %c0_i32_0 = arith.constant 0 : i32
    %c0_i32_1 = arith.constant 0 : i32
    return %c0_i32, %c0_i32_0, %arg1 : i32, i32, i32
  }
  func.func @transform_2(%arg0: i32, %arg1: i32) -> (i32, i32) {
    %c0_i32 = arith.constant 0 : i32
    %c0_i32_0 = arith.constant 0 : i32
    return %c0_i32, %arg1 : i32, i32
  }
  func.func @transform_3(%arg0: i32, %arg1: i32) -> (i32, i32) {
    %c0_i32 = arith.constant 0 : i32
    %c0_i32_0 = arith.constant 0 : i32
    return %c0_i32, %arg1 : i32, i32
  }
  func.func @transform_4(%arg0: i32, %arg1: i32) -> (i32, i32, i32) {
    %c0_i32 = arith.constant 0 : i32
    %c0_i32_0 = arith.constant 0 : i32
    return %arg0, %c0_i32, %arg1 : i32, i32, i32
  }
}

module attributes {stable_mosaic.version = 11 : i64} {
  func.func @_bn_act_kernel(%arg0: i32, %arg1: i32, %arg2: memref<1x256x4xbf16, #tpu.memory_space<vmem>>, %arg3: memref<2x2x4xf32, #tpu.memory_space<vmem>>, %arg4: memref<1x4xf32, #tpu.memory_space<vmem>>, %arg5: memref<1x4xf32, #tpu.memory_space<vmem>>, %arg6: memref<1x256x4xbf16, #tpu.memory_space<vmem>>, %arg7: memref<1x256x4xf32, #tpu.memory_space<vmem>>) attributes {dimension_semantics = [#tpu.dimension_semantics<parallel>, #tpu.dimension_semantics<parallel>], iteration_bounds = array<i64: 2, 1>, scalar_prefetch = 0 : i64, scratch_operands = 0 : i64, tpu.core_type = #tpu.core_type<tc>, window_params = [{transform_indices = @transform_0, window_bounds = array<i64: 1, 256, 4>}, {transform_indices = @transform_1, window_bounds = array<i64: 2, 2, 4>}, {transform_indices = @transform_2, window_bounds = array<i64: 1, 4>}, {transform_indices = @transform_3, window_bounds = array<i64: 1, 4>}, {transform_indices = @transform_4, window_bounds = array<i64: 1, 256, 4>}, {transform_indices = @transform_5, window_bounds = array<i64: 1, 256, 4>}]} {
    %c0 = arith.constant 0 : index
    %c0_0 = arith.constant 0 : index
    %c0_1 = arith.constant 0 : index
    %0 = vector.load %arg3[%c0, %c0_0, %c0_1] : memref<2x2x4xf32, #tpu.memory_space<vmem>>, vector<2x2x4xf32>
    %cst = arith.constant dense<0.000000e+00> : vector<2x4xf32>
    %1 = vector.multi_reduction <add>, %0, %cst [0] : vector<2x2x4xf32> to vector<2x4xf32>
    %2 = vector.extract_strided_slice %1 {offsets = [0, 0], sizes = [1, 4], strides = [1, 1]} : vector<2x4xf32> to vector<1x4xf32>
    %cst_2 = arith.constant 0.001953125 : f32
    %3 = vector.broadcast %cst_2 : f32 to vector<1x4xf32>
    %4 = arith.mulf %2, %3 : vector<1x4xf32>
    %5 = vector.extract_strided_slice %1 {offsets = [1, 0], sizes = [1, 4], strides = [1, 1]} : vector<2x4xf32> to vector<1x4xf32>
    %cst_3 = arith.constant 0.001953125 : f32
    %6 = vector.broadcast %cst_3 : f32 to vector<1x4xf32>
    %7 = arith.mulf %5, %6 : vector<1x4xf32>
    %8 = arith.mulf %4, %4 : vector<1x4xf32>
    %9 = arith.subf %7, %8 : vector<1x4xf32>
    %cst_4 = arith.constant 0.000000e+00 : f32
    %10 = vector.broadcast %cst_4 : f32 to vector<1x4xf32>
    %11 = arith.maximumf %9, %10 : vector<1x4xf32>
    %c0_5 = arith.constant 0 : index
    %c0_6 = arith.constant 0 : index
    %12 = vector.load %arg4[%c0_5, %c0_6] : memref<1x4xf32, #tpu.memory_space<vmem>>, vector<1x4xf32>
    %cst_7 = arith.constant 9.99999974E-6 : f32
    %13 = vector.broadcast %cst_7 : f32 to vector<1x4xf32>
    %14 = arith.addf %11, %13 : vector<1x4xf32>
    %15 = math.rsqrt %14 : vector<1x4xf32>
    %16 = arith.mulf %12, %15 : vector<1x4xf32>
    %c0_8 = arith.constant 0 : index
    %c0_9 = arith.constant 0 : index
    %17 = vector.load %arg5[%c0_8, %c0_9] : memref<1x4xf32, #tpu.memory_space<vmem>>, vector<1x4xf32>
    %18 = arith.mulf %4, %16 : vector<1x4xf32>
    %19 = arith.subf %17, %18 : vector<1x4xf32>
    %c0_10 = arith.constant 0 : index
    %c0_11 = arith.constant 0 : index
    %c0_12 = arith.constant 0 : index
    %20 = vector.load %arg2[%c0_10, %c0_11, %c0_12] : memref<1x256x4xbf16, #tpu.memory_space<vmem>>, vector<1x256x4xbf16>
    %21 = vector.shape_cast %20 : vector<1x256x4xbf16> to vector<256x4xbf16>
    %22 = arith.extf %21 : vector<256x4xbf16> to vector<256x4xf32>
    %23 = vector.broadcast %16 : vector<1x4xf32> to vector<256x4xf32>
    %24 = arith.mulf %22, %23 : vector<256x4xf32>
    %25 = vector.broadcast %19 : vector<1x4xf32> to vector<256x4xf32>
    %26 = arith.addf %24, %25 : vector<256x4xf32>
    %c0_13 = arith.constant 0 : index
    %c0_14 = arith.constant 0 : index
    %c0_15 = arith.constant 0 : index
    %27 = vector.load %arg6[%c0_13, %c0_14, %c0_15] : memref<1x256x4xbf16, #tpu.memory_space<vmem>>, vector<1x256x4xbf16>
    %28 = vector.shape_cast %27 : vector<1x256x4xbf16> to vector<256x4xbf16>
    %29 = arith.extf %28 : vector<256x4xbf16> to vector<256x4xf32>
    %30 = arith.addf %26, %29 : vector<256x4xf32>
    %cst_16 = arith.constant 0.000000e+00 : f32
    %31 = vector.broadcast %cst_16 : f32 to vector<256x4xf32>
    %32 = arith.cmpf ogt, %30, %31 : vector<256x4xf32>
    %cst_17 = arith.constant 1.000000e-01 : f32
    %33 = vector.broadcast %cst_17 : f32 to vector<256x4xf32>
    %34 = arith.mulf %33, %30 : vector<256x4xf32>
    %35 = arith.select %32, %30, %34 : vector<256x4xi1>, vector<256x4xf32>
    %c0_18 = arith.constant 0 : index
    %c0_19 = arith.constant 0 : index
    %c0_20 = arith.constant 0 : index
    %36 = vector.load %arg7[%c0_18, %c0_19, %c0_20] : memref<1x256x4xf32, #tpu.memory_space<vmem>>, vector<1x256x4xf32>
    %37 = vector.shape_cast %36 : vector<1x256x4xf32> to vector<256x4xf32>
    %38 = vector.shape_cast %35 : vector<256x4xf32> to vector<1x256x4xf32>
    tpu.vector_store %arg7[%c0_18, %c0_19, %c0_20], %38 {strides = array<i32>} : memref<1x256x4xf32, #tpu.memory_space<vmem>>, vector<1x256x4xf32>,
    return
  }
  func.func @transform_0(%arg0: i32, %arg1: i32) -> (i32, i32, i32) {
    %c0_i32 = arith.constant 0 : i32
    %c0_i32_0 = arith.constant 0 : i32
    return %arg0, %c0_i32, %arg1 : i32, i32, i32
  }
  func.func @transform_1(%arg0: i32, %arg1: i32) -> (i32, i32, i32) {
    %c0_i32 = arith.constant 0 : i32
    %c0_i32_0 = arith.constant 0 : i32
    %c0_i32_1 = arith.constant 0 : i32
    return %c0_i32, %c0_i32_0, %arg1 : i32, i32, i32
  }
  func.func @transform_2(%arg0: i32, %arg1: i32) -> (i32, i32) {
    %c0_i32 = arith.constant 0 : i32
    %c0_i32_0 = arith.constant 0 : i32
    return %c0_i32, %arg1 : i32, i32
  }
  func.func @transform_3(%arg0: i32, %arg1: i32) -> (i32, i32) {
    %c0_i32 = arith.constant 0 : i32
    %c0_i32_0 = arith.constant 0 : i32
    return %c0_i32, %arg1 : i32, i32
  }
  func.func @transform_4(%arg0: i32, %arg1: i32) -> (i32, i32, i32) {
    %c0_i32 = arith.constant 0 : i32
    %c0_i32_0 = arith.constant 0 : i32
    return %arg0, %c0_i32, %arg1 : i32, i32, i32
  }
  func.func @transform_5(%arg0: i32, %arg1: i32) -> (i32, i32, i32) {
    %c0_i32 = arith.constant 0 : i32
    %c0_i32_0 = arith.constant 0 : i32
    return %arg0, %c0_i32, %arg1 : i32, i32, i32
  }
}

</mosaic_0001>

<llo_original>
// kernel: basic_block_forward.7
$region0: #{basic_block_forward.7}
  #allocation0 [shape = 'u32[]', space=smem, size = 0x4, offset = 0x4, fixed_abs, tag = 'smem constant byte address 0x4 - core index']
  #allocation1 [shape = 'u32[144,128]{1,0:T(1,128)}', space=vmem, size = 0x12000, scoped, tag = 'internal scratch']
  %s0 = inlined_call_operand.vmem [shape: bf16[2,256,4], index: 0, kind: input, shape index: {}]
  %s1 = inlined_call_operand.vmem [shape: f32[2,2,4], index: 1, kind: input, shape index: {}]
  %s2 = inlined_call_operand.vmem [shape: f32[1,4], index: 2, kind: input, shape index: {}]
  %s3 = inlined_call_operand.vmem [shape: f32[1,4], index: 3, kind: input, shape index: {}]
  %s4 = inlined_call_operand.vmem [shape: bf16[2,256,4], index: 4, kind: output, shape index: {}]
  %s5 = sld [smem:[#allocation0]]
  $region49: #{basic_block_forward.7} parent=0
    _
  %s7 = ssub.s32 1, %s5
  %s8 = scalar_select 0, %s7, %s5
  loop: start=0, step=1, limit=4
  $region2: #{basic_block_forward.7} parent=0 // loop_pre_header
    _
  $region3: #{basic_block_forward.7} parent=0 // loop_header
    %s10 = sphi 0, %s14
    %p11 = scmp.ge.s32.totalorder %s10, 4
    %s17 = sphi 0, %s29
    %s18 = sphi 0, %s25
    %s19 = sphi 0, %s17
    %s20 = sphi 0, %s18
    %s21 = sphi 0, %s19
    %s22 = sphi 0, %s20
    %s34 = sphi 0, %s36
    %s37 = sphi 0, %s34
    %s38 = sphi 0, %s37
    %s54 = sphi 0, %s38
    %s60 = sphi 0, %s62
    %s63 = sphi 0, %s60
    %s64 = sphi 0, %s63
    %s80 = sphi 0, %s64
    %s86 = sphi 0, %s88
    %s89 = sphi 0, %s86
    %s90 = sphi 0, %s89
    %s106 = sphi 0, %s90
    %s112 = sphi 0, %s114
    %s115 = sphi 0, %s112
    %s116 = sphi 0, %s115
    %s132 = sphi 0, %s116
    %s140 = sphi 0, %s142
    %s143 = sphi 0, %s140
    %s144 = sphi 0, %s143
    %s160 = sphi 0, %s144
  $region4: #{basic_block_forward.7} parent=0 // loop_header_branch
    %13 = sbr.rel (%p11) target = $region8
  $region5: #{basic_block_forward.7} parent=0 // loop_body
    %s15 = ssub.s32 %s10, 1
    %s16 = ssub.s32 %s10, 2
    %s23 = sadd.s32 1, %s18
    %p24 = scmp.ge.s32.totalorder %s23, 1
    %s25 = scalar_select %p24, 0, %s23
    %s26 = sadd.s32 1, %s17
    %s27 = scalar_select %p24, %s26, %s17
    %p28 = scmp.ge.s32.totalorder %s27, 2
    %s29 = scalar_select %p28, 0, %s27
    %s30 = ssub.s32 %s17, %s29
    %s31 = ssub.s32 %s18, %s25
    %s32 = sor.u32 %s30, %s31
    %p33 = scmp.eq.s32.totalorder %s32, 0
    %s35 = sadd.s32 %s34, 1
    %s36 = scalar_select %p33, %s34, %s35
    %p39 = pneg %p33
    %p40 = scmp.eq.s32.totalorder %s10, 1
    %p41 = por %p39, %p40
    %p42 = scmp.ne.s32.totalorder %s34, %s37
    %p43 = scmp.eq.s32.totalorder %s10, 0
    %p44 = por %p42, %p43
    %p45 = scmp.ne.s32.totalorder %s34, %s37
    %p46 = scmp.eq.s32.totalorder %s15, 1
    %p47 = por %p45, %p46
    %p48 = scmp.ne.s32.totalorder %s37, %s38
    %p49 = scmp.eq.s32.totalorder %s15, 0
    %p50 = por %p48, %p49
    %p51 = scmp.ne.s32.totalorder %s37, %s38
    %p52 = scmp.eq.s32.totalorder %s16, 1
    %p53 = por %p51, %p52
    %p55 = scmp.ne.s32.totalorder %s38, %s54
    %p56 = scmp.eq.s32.totalorder %s16, 0
    %p57 = por %p55, %p56
    %s58 = ssub.s32 %s18, %s25
    %p59 = scmp.eq.s32.totalorder %s58, 0
    %s61 = sadd.s32 %s60, 1
    %s62 = scalar_select %p59, %s60, %s61
    %p65 = pneg %p59
    %p66 = scmp.eq.s32.totalorder %s10, 1
    %p67 = por %p65, %p66
    %p68 = scmp.ne.s32.totalorder %s60, %s63
    %p69 = scmp.eq.s32.totalorder %s10, 0
    %p70 = por %p68, %p69
    %p71 = scmp.ne.s32.totalorder %s60, %s63
    %p72 = scmp.eq.s32.totalorder %s15, 1
    %p73 = por %p71, %p72
    %p74 = scmp.ne.s32.totalorder %s63, %s64
    %p75 = scmp.eq.s32.totalorder %s15, 0
    %p76 = por %p74, %p75
    %p77 = scmp.ne.s32.totalorder %s63, %s64
    %p78 = scmp.eq.s32.totalorder %s16, 1
    %p79 = por %p77, %p78
    %p81 = scmp.ne.s32.totalorder %s64, %s80
    %p82 = scmp.eq.s32.totalorder %s16, 0
    %p83 = por %p81, %p82
    %s84 = ssub.s32 %s18, %s25
    %p85 = scmp.eq.s32.totalorder %s84, 0
    %s87 = sadd.s32 %s86, 1
    %s88 = scalar_select %p85, %s86, %s87
    %p91 = pneg %p85
    %p92 = scmp.eq.s32.totalorder %s10, 1
    %p93 = por %p91, %p92
    %p94 = scmp.ne.s32.totalorder %s86, %s89
    %p95 = scmp.eq.s32.totalorder %s10, 0
    %p96 = por %p94, %p95
    %p97 = scmp.ne.s32.totalorder %s86, %s89
    %p98 = scmp.eq.s32.totalorder %s15, 1
    %p99 = por %p97, %p98
    %p100 = scmp.ne.s32.totalorder %s89, %s90
    %p101 = scmp.eq.s32.totalorder %s15, 0
    %p102 = por %p100, %p101
    %p103 = scmp.ne.s32.totalorder %s89, %s90
    %p104 = scmp.eq.s32.totalorder %s16, 1
    %p105 = por %p103, %p104
    %p107 = scmp.ne.s32.totalorder %s90, %s106
    %p108 = scmp.eq.s32.totalorder %s16, 0
    %p109 = por %p107, %p108
    %s110 = ssub.s32 %s18, %s25
    %p111 = scmp.eq.s32.totalorder %s110, 0
    %s113 = sadd.s32 %s112, 1
    %s114 = scalar_select %p111, %s112, %s113
    %p117 = pneg %p111
    %p118 = scmp.eq.s32.totalorder %s10, 1
    %p119 = por %p117, %p118
    %p120 = scmp.ne.s32.totalorder %s112, %s115
    %p121 = scmp.eq.s32.totalorder %s10, 0
    %p122 = por %p120, %p121
    %p123 = scmp.ne.s32.totalorder %s112, %s115
    %p124 = scmp.eq.s32.totalorder %s15, 1
    %p125 = por %p123, %p124
    %p126 = scmp.ne.s32.totalorder %s115, %s116
    %p127 = scmp.eq.s32.totalorder %s15, 0
    %p128 = por %p126, %p127
    %p129 = scmp.ne.s32.totalorder %s115, %s116
    %p130 = scmp.eq.s32.totalorder %s16, 1
    %p131 = por %p129, %p130
    %p133 = scmp.ne.s32.totalorder %s116, %s132
    %p134 = scmp.eq.s32.totalorder %s16, 0
    %p135 = por %p133, %p134
    %s136 = ssub.s32 %s17, %s29
    %s137 = ssub.s32 %s18, %s25
    %s138 = sor.u32 %s136, %s137
    %p139 = scmp.eq.s32.totalorder %s138, 0
    %s141 = sadd.s32 %s140, 1
    %s142 = scalar_select %p139, %s140, %s141
    %p145 = pneg %p139
    %p146 = scmp.eq.s32.totalorder %s10, 1
    %p147 = por %p145, %p146
    %p148 = scmp.ne.s32.totalorder %s140, %s143
    %p149 = scmp.eq.s32.totalorder %s10, 0
    %p150 = por %p148, %p149
    %p151 = scmp.ne.s32.totalorder %s140, %s143
    %p152 = scmp.eq.s32.totalorder %s15, 1
    %p153 = por %p151, %p152
    %p154 = scmp.ne.s32.totalorder %s143, %s144
    %p155 = scmp.eq.s32.totalorder %s15, 0
    %p156 = por %p154, %p155
    %p157 = scmp.ne.s32.totalorder %s143, %s144
    %p158 = scmp.eq.s32.totalorder %s16, 1
    %p159 = por %p157, %p158
    %p161 = scmp.ne.s32.totalorder %s144, %s160
    %p162 = scmp.eq.s32.totalorder %s16, 0
    %p163 = por %p161, %p162
    %p164 = scmp.le.s32.totalorder 1, %s10
    %p165 = scmp.lt.s32.totalorder %s10, 3
    %p166 = pnand %p164, %p165
    %p167 = pneg %p166
    // Predicated region
    $region9: #{basic_block_forward.7} parent=5 // pred_check
      _
    $region10: #{basic_block_forward.7} parent=5 // pred_check_branch
      %169 = sbr.rel (%p166) target = $region12
    $region11: #{basic_block_forward.7} parent=5 // pred_region
      %s170 = ssub.s32 %s10, 1
      // Predicated region
      $region13: #{basic_block_forward.7} parent=11 // pred_check
        %p171 = pneg %p76
      $region14: #{basic_block_forward.7} parent=11 // pred_check_branch
        %173 = sbr.rel (%p171) target = $region16
      $region15: #{basic_block_forward.7} parent=11 // pred_region
        %p174 = scmp.lt.s32.totalorder %s20, 0
        %s175 = scalar_select %p174, %s20, 0
        %s176 = smul.addr %s175, 2
        %s177 = scalar_lea.vmem %s1, %s176
      $region16: #{basic_block_forward.7} parent=11 // pred_fallthru
        _
      // Predicated region
      $region17: #{basic_block_forward.7} parent=11 // pred_check
        %p178 = pneg %p102
      $region18: #{basic_block_forward.7} parent=11 // pred_check_branch
        %180 = sbr.rel (%p178) target = $region20
      $region19: #{basic_block_forward.7} parent=11 // pred_region
        %p181 = scmp.lt.s32.totalorder %s20, 0
        %s182 = scalar_select %p181, %s20, 0
        %s183 = scalar_lea.vmem %s2, %s182
      $region20: #{basic_block_forward.7} parent=11 // pred_fallthru
        _
      // Predicated region
      $region21: #{basic_block_forward.7} parent=11 // pred_check
        %p184 = pneg %p128
      $region22: #{basic_block_forward.7} parent=11 // pred_check_branch
        %186 = sbr.rel (%p184) target = $region24
      $region23: #{basic_block_forward.7} parent=11 // pred_region
        %p187 = scmp.lt.s32.totalorder %s20, 0
        %s188 = scalar_select %p187, %s20, 0
        %s189 = scalar_lea.vmem %s3, %s188
      $region24: #{basic_block_forward.7} parent=11 // pred_fallthru
        _
    $region12: #{basic_block_forward.7} parent=5 // pred_fallthru
      _
    %p190 = scmp.lt.s32.totalorder %s10, 2
    // Predicated region
    $region25: #{basic_block_forward.7} parent=5 // pred_check
      %p191 = pneg %p190
    $region26: #{basic_block_forward.7} parent=5 // pred_check_branch
      %193 = sbr.rel (%p191) target = $region28
    $region27: #{basic_block_forward.7} parent=5 // pred_region
      // Predicated region
      $region29: #{basic_block_forward.7} parent=27 // pred_check
        %p194 = pneg %p44
      $region30: #{basic_block_forward.7} parent=27 // pred_check_branch
        %196 = sbr.rel (%p194) target = $region32
      $region31: #{basic_block_forward.7} parent=27 // pred_region
        %p197 = scmp.lt.s32.totalorder %s17, 1
        %s198 = scalar_select %p197, %s17, 1
        %p199 = scmp.lt.s32.totalorder %s18, 0
        %s200 = scalar_select %p199, %s18, 0
        %s201 = smul.addr %s198, 32
        %s202 = sadd.s32 %s200, %s201
        %s203 = smul.addr %s202, 4
        %s204 = scalar_lea.vmem %s0, %s203
      $region32: #{basic_block_forward.7} parent=27 // pred_fallthru
        _
    $region28: #{basic_block_forward.7} parent=5 // pred_fallthru
      _
    %p205 = scmp.le.s32.totalorder 1, %s10
    %p206 = scmp.lt.s32.totalorder %s10, 3
    %p207 = pnand %p205, %p206
    %p208 = pneg %p207
    // Predicated region
    $region33: #{basic_block_forward.7} parent=5 // pred_check
      _
    $region34: #{basic_block_forward.7} parent=5 // pred_check_branch
      %210 = sbr.rel (%p207) target = $region36
    $region35: #{basic_block_forward.7} parent=5 // pred_region
      %s211 = ssub.s32 %s10, 1
      %p212 = scmp.lt.s32.totalorder %s19, 1
      %s213 = scalar_select %p212, %s19, 1
      %p214 = scmp.lt.s32.totalorder %s20, 0
      %s215 = scalar_select %p214, %s20, 0
      %s216 = smul.addr %s213, 32
      %s217 = sadd.s32 %s215, %s216
      %s218 = smul.addr %s217, 4
      %s219 = scalar_lea.vmem %s0, %s218
      %p220 = pneg %p50
      %p221 = pneg %p47
      %p222 = scmp.lt.s32.totalorder %s20, 0
      %s223 = scalar_select %p222, %s20, 0
      %s224 = smul.addr %s223, 2
      %s225 = scalar_lea.vmem %s1, %s224
      %p226 = pneg %p76
      %p227 = pneg %p73
      %p228 = scmp.lt.s32.totalorder %s20, 0
      %s229 = scalar_select %p228, %s20, 0
      %s230 = scalar_lea.vmem %s2, %s229
      %p231 = pneg %p102
      %p232 = pneg %p99
      %p233 = scmp.lt.s32.totalorder %s20, 0
      %s234 = scalar_select %p233, %s20, 0
      %s235 = scalar_lea.vmem %s3, %s234
      %p236 = pneg %p128
      %p237 = pneg %p125
      %p238 = pneg %p156
      %p239 = pneg %p153
      %p240 = scmp.lt.s32.totalorder %s19, 1
      %s241 = scalar_select %p240, %s19, 1
      %p242 = scmp.lt.s32.totalorder %s20, 0
      %s243 = scalar_select %p242, %s20, 0
      %s244 = smul.addr %s241, 32
      %s245 = sadd.s32 %s243, %s244
      %s246 = smul.addr %s245, 4
      %s247 = scalar_lea.vmem %s4, %s246
      %p248 = scmp.lt.s32.totalorder %s19, 1
      %s249 = scalar_select %p248, %s19, 1
      %p250 = scmp.lt.s32.totalorder %s20, 0
      %s251 = scalar_select %p250, %s20, 0
      %s252 = smul.addr %s249, 32
      %s253 = sadd.s32 %s251, %s252
      %s254 = smul.addr %s253, 4
      %s255 = scalar_lea.vmem %s0, %s254
      %p256 = scmp.lt.s32.totalorder %s20, 0
      %s257 = scalar_select %p256, %s20, 0
      %s258 = smul.addr %s257, 2
      %s259 = scalar_lea.vmem %s1, %s258
      %p260 = scmp.lt.s32.totalorder %s20, 0
      %s261 = scalar_select %p260, %s20, 0
      %s262 = scalar_lea.vmem %s2, %s261
      %p263 = scmp.lt.s32.totalorder %s20, 0
      %s264 = scalar_select %p263, %s20, 0
      %s265 = scalar_lea.vmem %s3, %s264
      %p266 = scmp.lt.s32.totalorder %s19, 1
      %s267 = scalar_select %p266, %s19, 1
      %p268 = scmp.lt.s32.totalorder %s20, 0
      %s269 = scalar_select %p268, %s20, 0
      %s270 = smul.addr %s267, 32
      %s271 = sadd.s32 %s269, %s270
      %s272 = smul.addr %s271, 4
      %s273 = scalar_lea.vmem %s4, %s272
      %v274 = vld [vmem:[%s259] sm:$0x3]
      %v275 = vld [vmem:[%s259 + $0x2] sm:$0x3]
      %vm276 = vcmask 25600
      %v277 = vsel %vm276, %v274, 0.0
      %v278 = vsel %vm276, %v275, 0.0
      %v279 = vadd.f32 %v277, %v278
      %v280 = vmul.f32 %v279, 0.001953125
      %v281 = vmul.f32 %v280, %v280
      %v283 = vrot.slane %v281, 7
      %v285 = vsub.f32 %v280, %v283
      %v286 = vmax.f32 %v285, 0.0
      %v287 = vld [vmem:[%s262] sm:$0x1]
      %v288 = vadd.f32 %v286, 1e-05
      %v289 = vrsqrt.pop %v288
      %v292 = vunpack.c.l.s4 1966171168
      %v293 = vunpack.c.0.s8 %v292
      %v294 = vlaneseq
      %v295 = vshrl.u32 %v294, 7
      %v296 = vsub.s32 %v293, %v295
      %v297 = vrot.slane %v289, %v296
      %v298 = vcombine.high %v297, %v297
      %v300 = vunpack.c.l.s4 1966171168
      %v301 = vunpack.c.0.s8 %v300
      %v302 = vlaneseq
      %v303 = vshrl.u32 %v302, 7
      %v304 = vsub.s32 %v301, %v303
      %v305 = vrot.slane %v298, %v304
      %v307 = vmul.f32 %v287, %v305
      %v308 = vld [vmem:[%s265] sm:$0x1]
      %v309 = vmul.f32 %v280, %v307
      %v310 = vsub.f32 %v308, %v309
      %v311 = vld [vmem:[%s255] sm:$0xf]
      %v312 = vld [vmem:[%s255 + $0x4] sm:$0xf]
      %v313 = vld [vmem:[%s255 + $0x8] sm:$0xf]
      %v314 = vld [vmem:[%s255 + $0xc] sm:$0xf]
      %v315 = vld [vmem:[%s255 + $0x10] sm:$0xf]
      %v316 = vld [vmem:[%s255 + $0x14] sm:$0xf]
      %v317 = vld [vmem:[%s255 + $0x18] sm:$0xf]
      %v318 = vld [vmem:[%s255 + $0x1c] sm:$0xf]
      %v319 = vld [vmem:[%s255 + $0x20] sm:$0xf]
      %v320 = vld [vmem:[%s255 + $0x24] sm:$0xf]
      %v321 = vld [vmem:[%s255 + $0x28] sm:$0xf]
      %v322 = vld [vmem:[%s255 + $0x2c] sm:$0xf]
      %v323 = vld [vmem:[%s255 + $0x30] sm:$0xf]
      %v324 = vld [vmem:[%s255 + $0x34] sm:$0xf]
      %v325 = vld [vmem:[%s255 + $0x38] sm:$0xf]
      %v326 = vld [vmem:[%s255 + $0x3c] sm:$0xf]
      %v327 = vld [vmem:[%s255 + $0x40] sm:$0xf]
      %v328 = vld [vmem:[%s255 + $0x44] sm:$0xf]
      %v329 = vld [vmem:[%s255 + $0x48] sm:$0xf]
      %v330 = vld [vmem:[%s255 + $0x4c] sm:$0xf]
      %v331 = vld [vmem:[%s255 + $0x50] sm:$0xf]
      %v332 = vld [vmem:[%s255 + $0x54] sm:$0xf]
      %v333 = vld [vmem:[%s255 + $0x58] sm:$0xf]
      %v334 = vld [vmem:[%s255 + $0x5c] sm:$0xf]
      %v335 = vld [vmem:[%s255 + $0x60] sm:$0xf]
      %v336 = vld [vmem:[%s255 + $0x64] sm:$0xf]
      %v337 = vld [vmem:[%s255 + $0x68] sm:$0xf]
      %v338 = vld [vmem:[%s255 + $0x6c] sm:$0xf]
      %v339 = vld [vmem:[%s255 + $0x70] sm:$0xf]
      %v340 = vld [vmem:[%s255 + $0x74] sm:$0xf]
      %v341 = vld [vmem:[%s255 + $0x78] sm:$0xf]
      %v342 = vld [vmem:[%s255 + $0x7c] sm:$0xf]
      %v343 = vunpack.c.l.bf16 %v311
      %v344 = vunpack.c.l.bf16 %v312
      %v345 = vunpack.c.l.bf16 %v313
      %v346 = vunpack.c.l.bf16 %v314
      %v347 = vunpack.c.l.bf16 %v315
      %v348 = vunpack.c.l.bf16 %v316
      %v349 = vunpack.c.l.bf16 %v317
      %v350 = vunpack.c.l.bf16 %v318
      %v351 = vunpack.c.l.bf16 %v319
      %v352 = vunpack.c.l.bf16 %v320
      %v353 = vunpack.c.l.bf16 %v321
      %v354 = vunpack.c.l.bf16 %v322
      %v355 = vunpack.c.l.bf16 %v323
      %v356 = vunpack.c.l.bf16 %v324
      %v357 = vunpack.c.l.bf16 %v325
      %v358 = vunpack.c.l.bf16 %v326
      %v359 = vunpack.c.l.bf16 %v327
      %v360 = vunpack.c.l.bf16 %v328
      %v361 = vunpack.c.l.bf16 %v329
      %v362 = vunpack.c.l.bf16 %v330
      %v363 = vunpack.c.l.bf16 %v331
      %v364 = vunpack.c.l.bf16 %v332
      %v365 = vunpack.c.l.bf16 %v333
      %v366 = vunpack.c.l.bf16 %v334
      %v367 = vunpack.c.l.bf16 %v335
      %v368 = vunpack.c.l.bf16 %v336
      %v369 = vunpack.c.l.bf16 %v337
      %v370 = vunpack.c.l.bf16 %v338
      %v371 = vunpack.c.l.bf16 %v339
      %v372 = vunpack.c.l.bf16 %v340
      %v373 = vunpack.c.l.bf16 %v341
      %v374 = vunpack.c.l.bf16 %v342
      %v376 = vlaneseq
      %v377 = vshrl.u32 %v376, 7
      %v378 = vsub.s32 0, %v377
      %v379 = vrot.slane %v307, %v378
      %v381 = vmul.f32 %v343, %v379
      %v382 = vmul.f32 %v344, %v379
      %v383 = vmul.f32 %v345, %v379
      %v384 = vmul.f32 %v346, %v379
      %v385 = vmul.f32 %v347, %v379
      %v386 = vmul.f32 %v348, %v379
      %v387 = vmul.f32 %v349, %v379
      %v388 = vmul.f32 %v350, %v379
      %v389 = vmul.f32 %v351, %v379
      %v390 = vmul.f32 %v352, %v379
      %v391 = vmul.f32 %v353, %v379
      %v392 = vmul.f32 %v354, %v379
      %v393 = vmul.f32 %v355, %v379
      %v394 = vmul.f32 %v356, %v379
      %v395 = vmul.f32 %v357, %v379
      %v396 = vmul.f32 %v358, %v379
      %v397 = vmul.f32 %v359, %v379
      %v398 = vmul.f32 %v360, %v379
      %v399 = vmul.f32 %v361, %v379
      %v400 = vmul.f32 %v362, %v379
      %v401 = vmul.f32 %v363, %v379
      %v402 = vmul.f32 %v364, %v379
      %v403 = vmul.f32 %v365, %v379
      %v404 = vmul.f32 %v366, %v379
      %v405 = vmul.f32 %v367, %v379
      %v406 = vmul.f32 %v368, %v379
      %v407 = vmul.f32 %v369, %v379
      %v408 = vmul.f32 %v370, %v379
      %v409 = vmul.f32 %v371, %v379
      %v410 = vmul.f32 %v372, %v379
      %v411 = vmul.f32 %v373, %v379
      %v412 = vmul.f32 %v374, %v379
      %v414 = vlaneseq
      %v415 = vshrl.u32 %v414, 7
      %v416 = vsub.s32 0, %v415
      %v417 = vrot.slane %v310, %v416
      %v419 = vadd.f32 %v381, %v417
      %v420 = vadd.f32 %v382, %v417
      %v421 = vadd.f32 %v383, %v417
      %v422 = vadd.f32 %v384, %v417
      %v423 = vadd.f32 %v385, %v417
      %v424 = vadd.f32 %v386, %v417
      %v425 = vadd.f32 %v387, %v417
      %v426 = vadd.f32 %v388, %v417
      %v427 = vadd.f32 %v389, %v417
      %v428 = vadd.f32 %v390, %v417
      %v429 = vadd.f32 %v391, %v417
      %v430 = vadd.f32 %v392, %v417
      %v431 = vadd.f32 %v393, %v417
      %v432 = vadd.f32 %v394, %v417
      %v433 = vadd.f32 %v395, %v417
      %v434 = vadd.f32 %v396, %v417
      %v435 = vadd.f32 %v397, %v417
      %v436 = vadd.f32 %v398, %v417
      %v437 = vadd.f32 %v399, %v417
      %v438 = vadd.f32 %v400, %v417
      %v439 = vadd.f32 %v401, %v417
      %v440 = vadd.f32 %v402, %v417
      %v441 = vadd.f32 %v403, %v417
      %v442 = vadd.f32 %v404, %v417
      %v443 = vadd.f32 %v405, %v417
      %v444 = vadd.f32 %v406, %v417
      %v445 = vadd.f32 %v407, %v417
      %v446 = vadd.f32 %v408, %v417
      %v447 = vadd.f32 %v409, %v417
      %v448 = vadd.f32 %v410, %v417
      %v449 = vadd.f32 %v411, %v417
      %v450 = vadd.f32 %v412, %v417
      %vm451 = vcmp.gt.f32.partialorder %v419, 0.0
      %vm452 = vcmp.gt.f32.partialorder %v420, 0.0
      %vm453 = vcmp.gt.f32.partialorder %v421, 0.0
      %vm454 = vcmp.gt.f32.partialorder %v422, 0.0
      %vm455 = vcmp.gt.f32.partialorder %v423, 0.0
      %vm456 = vcmp.gt.f32.partialorder %v424, 0.0
      %vm457 = vcmp.gt.f32.partialorder %v425, 0.0
      %vm458 = vcmp.gt.f32.partialorder %v426, 0.0
      %vm459 = vcmp.gt.f32.partialorder %v427, 0.0
      %vm460 = vcmp.gt.f32.partialorder %v428, 0.0
      %vm461 = vcmp.gt.f32.partialorder %v429, 0.0
      %vm462 = vcmp.gt.f32.partialorder %v430, 0.0
      %vm463 = vcmp.gt.f32.partialorder %v431, 0.0
      %vm464 = vcmp.gt.f32.partialorder %v432, 0.0
      %vm465 = vcmp.gt.f32.partialorder %v433, 0.0
      %vm466 = vcmp.gt.f32.partialorder %v434, 0.0
      %vm467 = vcmp.gt.f32.partialorder %v435, 0.0
      %vm468 = vcmp.gt.f32.partialorder %v436, 0.0
      %vm469 = vcmp.gt.f32.partialorder %v437, 0.0
      %vm470 = vcmp.gt.f32.partialorder %v438, 0.0
      %vm471 = vcmp.gt.f32.partialorder %v439, 0.0
      %vm472 = vcmp.gt.f32.partialorder %v440, 0.0
      %vm473 = vcmp.gt.f32.partialorder %v441, 0.0
      %vm474 = vcmp.gt.f32.partialorder %v442, 0.0
      %vm475 = vcmp.gt.f32.partialorder %v443, 0.0
      %vm476 = vcmp.gt.f32.partialorder %v444, 0.0
      %vm477 = vcmp.gt.f32.partialorder %v445, 0.0
      %vm478 = vcmp.gt.f32.partialorder %v446, 0.0
      %vm479 = vcmp.gt.f32.partialorder %v447, 0.0
      %vm480 = vcmp.gt.f32.partialorder %v448, 0.0
      %vm481 = vcmp.gt.f32.partialorder %v449, 0.0
      %vm482 = vcmp.gt.f32.partialorder %v450, 0.0
      %v483 = vmul.f32 %v419, 0.1
      %v484 = vmul.f32 %v420, 0.1
      %v485 = vmul.f32 %v421, 0.1
      %v486 = vmul.f32 %v422, 0.1
      %v487 = vmul.f32 %v423, 0.1
      %v488 = vmul.f32 %v424, 0.1
      %v489 = vmul.f32 %v425, 0.1
      %v490 = vmul.f32 %v426, 0.1
      %v491 = vmul.f32 %v427, 0.1
      %v492 = vmul.f32 %v428, 0.1
      %v493 = vmul.f32 %v429, 0.1
      %v494 = vmul.f32 %v430, 0.1
      %v495 = vmul.f32 %v431, 0.1
      %v496 = vmul.f32 %v432, 0.1
      %v497 = vmul.f32 %v433, 0.1
      %v498 = vmul.f32 %v434, 0.1
      %v499 = vmul.f32 %v435, 0.1
      %v500 = vmul.f32 %v436, 0.1
      %v501 = vmul.f32 %v437, 0.1
      %v502 = vmul.f32 %v438, 0.1
      %v503 = vmul.f32 %v439, 0.1
      %v504 = vmul.f32 %v440, 0.1
      %v505 = vmul.f32 %v441, 0.1
      %v506 = vmul.f32 %v442, 0.1
      %v507 = vmul.f32 %v443, 0.1
      %v508 = vmul.f32 %v444, 0.1
      %v509 = vmul.f32 %v445, 0.1
      %v510 = vmul.f32 %v446, 0.1
      %v511 = vmul.f32 %v447, 0.1
      %v512 = vmul.f32 %v448, 0.1
      %v513 = vmul.f32 %v449, 0.1
      %v514 = vmul.f32 %v450, 0.1
      %v515 = vsel %vm451, %v419, %v483
      %v516 = vsel %vm452, %v420, %v484
      %v517 = vsel %vm453, %v421, %v485
      %v518 = vsel %vm454, %v422, %v486
      %v519 = vsel %vm455, %v423, %v487
      %v520 = vsel %vm456, %v424, %v488
      %v521 = vsel %vm457, %v425, %v489
      %v522 = vsel %vm458, %v426, %v490
      %v523 = vsel %vm459, %v427, %v491
      %v524 = vsel %vm460, %v428, %v492
      %v525 = vsel %vm461, %v429, %v493
      %v526 = vsel %vm462, %v430, %v494
      %v527 = vsel %vm463, %v431, %v495
      %v528 = vsel %vm464, %v432, %v496
      %v529 = vsel %vm465, %v433, %v497
      %v530 = vsel %vm466, %v434, %v498
      %v531 = vsel %vm467, %v435, %v499
      %v532 = vsel %vm468, %v436, %v500
      %v533 = vsel %vm469, %v437, %v501
      %v534 = vsel %vm470, %v438, %v502
      %v535 = vsel %vm471, %v439, %v503
      %v536 = vsel %vm472, %v440, %v504
      %v537 = vsel %vm473, %v441, %v505
      %v538 = vsel %vm474, %v442, %v506
      %v539 = vsel %vm475, %v443, %v507
      %v540 = vsel %vm476, %v444, %v508
      %v541 = vsel %vm477, %v445, %v509
      %v542 = vsel %vm478, %v446, %v510
      %v543 = vsel %vm479, %v447, %v511
      %v544 = vsel %vm480, %v448, %v512
      %v545 = vsel %vm481, %v449, %v513
      %v546 = vsel %vm482, %v450, %v514
      %v547 = vpack.c.bf16 %v516, %v515
      %v548 = vpack.c.bf16 %v518, %v517
      %v549 = vpack.c.bf16 %v520, %v519
      %v550 = vpack.c.bf16 %v522, %v521
      %v551 = vpack.c.bf16 %v524, %v523
      %v552 = vpack.c.bf16 %v526, %v525
      %v553 = vpack.c.bf16 %v528, %v527
      %v554 = vpack.c.bf16 %v530, %v529
      %v555 = vpack.c.bf16 %v532, %v531
      %v556 = vpack.c.bf16 %v534, %v533
      %v557 = vpack.c.bf16 %v536, %v535
      %v558 = vpack.c.bf16 %v538, %v537
      %v559 = vpack.c.bf16 %v540, %v539
      %v560 = vpack.c.bf16 %v542, %v541
      %v561 = vpack.c.bf16 %v544, %v543
      %v562 = vpack.c.bf16 %v546, %v545
      %v579 = vunpack.c.l.b16 %v547
      %v580 = vunpack.c.h.b16 %v547
      %v581 = vunpack.c.l.b16 %v548
      %v582 = vunpack.c.h.b16 %v548
      %v583 = vunpack.c.l.b16 %v549
      %v584 = vunpack.c.h.b16 %v549
      %v585 = vunpack.c.l.b16 %v550
      %v586 = vunpack.c.h.b16 %v550
      %v587 = vunpack.c.l.b16 %v551
      %v588 = vunpack.c.h.b16 %v551
      %v589 = vunpack.c.l.b16 %v552
      %v590 = vunpack.c.h.b16 %v552
      %v591 = vunpack.c.l.b16 %v553
      %v592 = vunpack.c.h.b16 %v553
      %v593 = vunpack.c.l.b16 %v554
      %v594 = vunpack.c.h.b16 %v554
      %v595 = vunpack.c.l.b16 %v555
      %v596 = vunpack.c.h.b16 %v555
      %v597 = vunpack.c.l.b16 %v556
      %v598 = vunpack.c.h.b16 %v556
      %v599 = vunpack.c.l.b16 %v557
      %v600 = vunpack.c.h.b16 %v557
      %v601 = vunpack.c.l.b16 %v558
      %v602 = vunpack.c.h.b16 %v558
      %v603 = vunpack.c.l.b16 %v559
      %v604 = vunpack.c.h.b16 %v559
      %v605 = vunpack.c.l.b16 %v560
      %v606 = vunpack.c.h.b16 %v560
      %v607 = vunpack.c.l.b16 %v561
      %v608 = vunpack.c.h.b16 %v561
      %v609 = vunpack.c.l.b16 %v562
      %v610 = vunpack.c.h.b16 %v562
      %v611 = vpack.c.b16 %v579, %v579
      %v612 = vpack.c.b16 %v580, %v580
      %v613 = vpack.c.b16 %v581, %v581
      %v614 = vpack.c.b16 %v582, %v582
      %v615 = vpack.c.b16 %v583, %v583
      %v616 = vpack.c.b16 %v584, %v584
      %v617 = vpack.c.b16 %v585, %v585
      %v618 = vpack.c.b16 %v586, %v586
      %v619 = vpack.c.b16 %v587, %v587
      %v620 = vpack.c.b16 %v588, %v588
      %v621 = vpack.c.b16 %v589, %v589
      %v622 = vpack.c.b16 %v590, %v590
      %v623 = vpack.c.b16 %v591, %v591
      %v624 = vpack.c.b16 %v592, %v592
      %v625 = vpack.c.b16 %v593, %v593
      %v626 = vpack.c.b16 %v594, %v594
      %v627 = vpack.c.b16 %v595, %v595
      %v628 = vpack.c.b16 %v596, %v596
      %v629 = vpack.c.b16 %v597, %v597
      %v630 = vpack.c.b16 %v598, %v598
      %v631 = vpack.c.b16 %v599, %v599
      %v632 = vpack.c.b16 %v600, %v600
      %v633 = vpack.c.b16 %v601, %v601
      %v634 = vpack.c.b16 %v602, %v602
      %v635 = vpack.c.b16 %v603, %v603
      %v636 = vpack.c.b16 %v604, %v604
      %v637 = vpack.c.b16 %v605, %v605
      %v638 = vpack.c.b16 %v606, %v606
      %v639 = vpack.c.b16 %v607, %v607
      %v640 = vpack.c.b16 %v608, %v608
      %v641 = vpack.c.b16 %v609, %v609
      %v642 = vpack.c.b16 %v610, %v610
      %vm675 = vcmask 27648
      %676 = vst.msk [vmem:[%s273] sm:$0xf] %vm675, %v611
      %677 = vst.msk [vmem:[%s273 + $0x4] sm:$0xf] %vm675, %v612
      %678 = vst.msk [vmem:[%s273 + $0x8] sm:$0xf] %vm675, %v613
      %679 = vst.msk [vmem:[%s273 + $0xc] sm:$0xf] %vm675, %v614
      %680 = vst.msk [vmem:[%s273 + $0x10] sm:$0xf] %vm675, %v615
      %681 = vst.msk [vmem:[%s273 + $0x14] sm:$0xf] %vm675, %v616
      %682 = vst.msk [vmem:[%s273 + $0x18] sm:$0xf] %vm675, %v617
      %683 = vst.msk [vmem:[%s273 + $0x1c] sm:$0xf] %vm675, %v618
      %684 = vst.msk [vmem:[%s273 + $0x20] sm:$0xf] %vm675, %v619
      %685 = vst.msk [vmem:[%s273 + $0x24] sm:$0xf] %vm675, %v620
      %686 = vst.msk [vmem:[%s273 + $0x28] sm:$0xf] %vm675, %v621
      %687 = vst.msk [vmem:[%s273 + $0x2c] sm:$0xf] %vm675, %v622
      %688 = vst.msk [vmem:[%s273 + $0x30] sm:$0xf] %vm675, %v623
      %689 = vst.msk [vmem:[%s273 + $0x34] sm:$0xf] %vm675, %v624
      %690 = vst.msk [vmem:[%s273 + $0x38] sm:$0xf] %vm675, %v625
      %691 = vst.msk [vmem:[%s273 + $0x3c] sm:$0xf] %vm675, %v626
      %692 = vst.msk [vmem:[%s273 + $0x40] sm:$0xf] %vm675, %v627
      %693 = vst.msk [vmem:[%s273 + $0x44] sm:$0xf] %vm675, %v628
      %694 = vst.msk [vmem:[%s273 + $0x48] sm:$0xf] %vm675, %v629
      %695 = vst.msk [vmem:[%s273 + $0x4c] sm:$0xf] %vm675, %v630
      %696 = vst.msk [vmem:[%s273 + $0x50] sm:$0xf] %vm675, %v631
      %697 = vst.msk [vmem:[%s273 + $0x54] sm:$0xf] %vm675, %v632
      %698 = vst.msk [vmem:[%s273 + $0x58] sm:$0xf] %vm675, %v633
      %699 = vst.msk [vmem:[%s273 + $0x5c] sm:$0xf] %vm675, %v634
      %700 = vst.msk [vmem:[%s273 + $0x60] sm:$0xf] %vm675, %v635
      %701 = vst.msk [vmem:[%s273 + $0x64] sm:$0xf] %vm675, %v636
      %702 = vst.msk [vmem:[%s273 + $0x68] sm:$0xf] %vm675, %v637
      %703 = vst.msk [vmem:[%s273 + $0x6c] sm:$0xf] %vm675, %v638
      %704 = vst.msk [vmem:[%s273 + $0x70] sm:$0xf] %vm675, %v639
      %705 = vst.msk [vmem:[%s273 + $0x74] sm:$0xf] %vm675, %v640
      %706 = vst.msk [vmem:[%s273 + $0x78] sm:$0xf] %vm675, %v641
      %707 = vst.msk [vmem:[%s273 + $0x7c] sm:$0xf] %vm675, %v642
      %p708 = scmp.lt.s32.totalorder %s19, 1
      %s709 = scalar_select %p708, %s19, 1
      %p710 = scmp.lt.s32.totalorder %s20, 0
      %s711 = scalar_select %p710, %s20, 0
      %s712 = smul.addr %s709, 32
      %s713 = sadd.s32 %s711, %s712
      %s714 = smul.addr %s713, 4
      %s715 = scalar_lea.vmem %s4, %s714
      // Predicated region
      $region37: #{basic_block_forward.7} parent=35 // pred_check
        %p716 = pneg %p153
      $region38: #{basic_block_forward.7} parent=35 // pred_check_branch
        %718 = sbr.rel (%p716) target = $region40
      $region39: #{basic_block_forward.7} parent=35 // pred_region
        _
      $region40: #{basic_block_forward.7} parent=35 // pred_fallthru
        _
    $region36: #{basic_block_forward.7} parent=5 // pred_fallthru
      _
    %p719 = scmp.le.s32.totalorder 2, %s10
    // Predicated region
    $region41: #{basic_block_forward.7} parent=5 // pred_check
      %p720 = pneg %p719
    $region42: #{basic_block_forward.7} parent=5 // pred_check_branch
      %722 = sbr.rel (%p720) target = $region44
    $region43: #{basic_block_forward.7} parent=5 // pred_region
      %s723 = ssub.s32 %s10, 2
      // Predicated region
      $region45: #{basic_block_forward.7} parent=43 // pred_check
        %p724 = pneg %p159
      $region46: #{basic_block_forward.7} parent=43 // pred_check_branch
        %726 = sbr.rel (%p724) target = $region48
      $region47: #{basic_block_forward.7} parent=43 // pred_region
        %p727 = scmp.lt.s32.totalorder %s21, 1
        %s728 = scalar_select %p727, %s21, 1
        %p729 = scmp.lt.s32.totalorder %s22, 0
        %s730 = scalar_select %p729, %s22, 0
        %s731 = smul.addr %s728, 32
        %s732 = sadd.s32 %s730, %s731
        %s733 = smul.addr %s732, 4
        %s734 = scalar_lea.vmem %s4, %s733
      $region48: #{basic_block_forward.7} parent=43 // pred_fallthru
        _
    $region44: #{basic_block_forward.7} parent=5 // pred_fallthru
      _
  $region6: #{basic_block_forward.7} parent=0 // loop_footer
    %s14 = sadd.s32 1, %s10
  $region7: #{basic_block_forward.7} parent=0 // loop_footer_branch
    %9 = sbr.rel target = $region3
  $region8: #{basic_block_forward.7} parent=0 // loop_exit
    _

// kernel: basic_block_forward.11
$region0: #{basic_block_forward.11}
  #allocation0 [shape = 'u32[]', space=smem, size = 0x4, offset = 0x4, fixed_abs, tag = 'smem constant byte address 0x4 - core index']
  #allocation1 [shape = 'u32[144,128]{1,0:T(1,128)}', space=vmem, size = 0x12000, scoped, tag = 'internal scratch']
  %s0 = inlined_call_operand.vmem [shape: bf16[2,256,4], index: 0, kind: input, shape index: {}]
  %s1 = inlined_call_operand.vmem [shape: f32[2,2,4], index: 1, kind: input, shape index: {}]
  %s2 = inlined_call_operand.vmem [shape: f32[1,4], index: 2, kind: input, shape index: {}]
  %s3 = inlined_call_operand.vmem [shape: f32[1,4], index: 3, kind: input, shape index: {}]
  %s4 = inlined_call_operand.vmem [shape: bf16[2,256,4], index: 4, kind: input, shape index: {}]
  %s5 = inlined_call_operand.vmem [shape: f32[2,256,4], index: 5, kind: output, shape index: {}]
  %s6 = sld [smem:[#allocation0]]
  $region53: #{basic_block_forward.11} parent=0
    _
  %s8 = ssub.s32 1, %s6
  %s9 = scalar_select 0, %s8, %s6
  loop: start=0, step=1, limit=4
  $region2: #{basic_block_forward.11} parent=0 // loop_pre_header
    _
  $region3: #{basic_block_forward.11} parent=0 // loop_header
    %s11 = sphi 0, %s15
    %p12 = scmp.ge.s32.totalorder %s11, 4
    %s18 = sphi 0, %s30
    %s19 = sphi 0, %s26
    %s20 = sphi 0, %s18
    %s21 = sphi 0, %s19
    %s22 = sphi 0, %s20
    %s23 = sphi 0, %s21
    %s35 = sphi 0, %s37
    %s38 = sphi 0, %s35
    %s39 = sphi 0, %s38
    %s55 = sphi 0, %s39
    %s61 = sphi 0, %s63
    %s64 = sphi 0, %s61
    %s65 = sphi 0, %s64
    %s81 = sphi 0, %s65
    %s87 = sphi 0, %s89
    %s90 = sphi 0, %s87
    %s91 = sphi 0, %s90
    %s107 = sphi 0, %s91
    %s113 = sphi 0, %s115
    %s116 = sphi 0, %s113
    %s117 = sphi 0, %s116
    %s133 = sphi 0, %s117
    %s141 = sphi 0, %s143
    %s144 = sphi 0, %s141
    %s145 = sphi 0, %s144
    %s161 = sphi 0, %s145
    %s169 = sphi 0, %s171
    %s172 = sphi 0, %s169
    %s173 = sphi 0, %s172
    %s189 = sphi 0, %s173
  $region4: #{basic_block_forward.11} parent=0 // loop_header_branch
    %14 = sbr.rel (%p12) target = $region8
  $region5: #{basic_block_forward.11} parent=0 // loop_body
    %s16 = ssub.s32 %s11, 1
    %s17 = ssub.s32 %s11, 2
    %s24 = sadd.s32 1, %s19
    %p25 = scmp.ge.s32.totalorder %s24, 1
    %s26 = scalar_select %p25, 0, %s24
    %s27 = sadd.s32 1, %s18
    %s28 = scalar_select %p25, %s27, %s18
    %p29 = scmp.ge.s32.totalorder %s28, 2
    %s30 = scalar_select %p29, 0, %s28
    %s31 = ssub.s32 %s18, %s30
    %s32 = ssub.s32 %s19, %s26
    %s33 = sor.u32 %s31, %s32
    %p34 = scmp.eq.s32.totalorder %s33, 0
    %s36 = sadd.s32 %s35, 1
    %s37 = scalar_select %p34, %s35, %s36
    %p40 = pneg %p34
    %p41 = scmp.eq.s32.totalorder %s11, 1
    %p42 = por %p40, %p41
    %p43 = scmp.ne.s32.totalorder %s35, %s38
    %p44 = scmp.eq.s32.totalorder %s11, 0
    %p45 = por %p43, %p44
    %p46 = scmp.ne.s32.totalorder %s35, %s38
    %p47 = scmp.eq.s32.totalorder %s16, 1
    %p48 = por %p46, %p47
    %p49 = scmp.ne.s32.totalorder %s38, %s39
    %p50 = scmp.eq.s32.totalorder %s16, 0
    %p51 = por %p49, %p50
    %p52 = scmp.ne.s32.totalorder %s38, %s39
    %p53 = scmp.eq.s32.totalorder %s17, 1
    %p54 = por %p52, %p53
    %p56 = scmp.ne.s32.totalorder %s39, %s55
    %p57 = scmp.eq.s32.totalorder %s17, 0
    %p58 = por %p56, %p57
    %s59 = ssub.s32 %s19, %s26
    %p60 = scmp.eq.s32.totalorder %s59, 0
    %s62 = sadd.s32 %s61, 1
    %s63 = scalar_select %p60, %s61, %s62
    %p66 = pneg %p60
    %p67 = scmp.eq.s32.totalorder %s11, 1
    %p68 = por %p66, %p67
    %p69 = scmp.ne.s32.totalorder %s61, %s64
    %p70 = scmp.eq.s32.totalorder %s11, 0
    %p71 = por %p69, %p70
    %p72 = scmp.ne.s32.totalorder %s61, %s64
    %p73 = scmp.eq.s32.totalorder %s16, 1
    %p74 = por %p72, %p73
    %p75 = scmp.ne.s32.totalorder %s64, %s65
    %p76 = scmp.eq.s32.totalorder %s16, 0
    %p77 = por %p75, %p76
    %p78 = scmp.ne.s32.totalorder %s64, %s65
    %p79 = scmp.eq.s32.totalorder %s17, 1
    %p80 = por %p78, %p79
    %p82 = scmp.ne.s32.totalorder %s65, %s81
    %p83 = scmp.eq.s32.totalorder %s17, 0
    %p84 = por %p82, %p83
    %s85 = ssub.s32 %s19, %s26
    %p86 = scmp.eq.s32.totalorder %s85, 0
    %s88 = sadd.s32 %s87, 1
    %s89 = scalar_select %p86, %s87, %s88
    %p92 = pneg %p86
    %p93 = scmp.eq.s32.totalorder %s11, 1
    %p94 = por %p92, %p93
    %p95 = scmp.ne.s32.totalorder %s87, %s90
    %p96 = scmp.eq.s32.totalorder %s11, 0
    %p97 = por %p95, %p96
    %p98 = scmp.ne.s32.totalorder %s87, %s90
    %p99 = scmp.eq.s32.totalorder %s16, 1
    %p100 = por %p98, %p99
    %p101 = scmp.ne.s32.totalorder %s90, %s91
    %p102 = scmp.eq.s32.totalorder %s16, 0
    %p103 = por %p101, %p102
    %p104 = scmp.ne.s32.totalorder %s90, %s91
    %p105 = scmp.eq.s32.totalorder %s17, 1
    %p106 = por %p104, %p105
    %p108 = scmp.ne.s32.totalorder %s91, %s107
    %p109 = scmp.eq.s32.totalorder %s17, 0
    %p110 = por %p108, %p109
    %s111 = ssub.s32 %s19, %s26
    %p112 = scmp.eq.s32.totalorder %s111, 0
    %s114 = sadd.s32 %s113, 1
    %s115 = scalar_select %p112, %s113, %s114
    %p118 = pneg %p112
    %p119 = scmp.eq.s32.totalorder %s11, 1
    %p120 = por %p118, %p119
    %p121 = scmp.ne.s32.totalorder %s113, %s116
    %p122 = scmp.eq.s32.totalorder %s11, 0
    %p123 = por %p121, %p122
    %p124 = scmp.ne.s32.totalorder %s113, %s116
    %p125 = scmp.eq.s32.totalorder %s16, 1
    %p126 = por %p124, %p125
    %p127 = scmp.ne.s32.totalorder %s116, %s117
    %p128 = scmp.eq.s32.totalorder %s16, 0
    %p129 = por %p127, %p128
    %p130 = scmp.ne.s32.totalorder %s116, %s117
    %p131 = scmp.eq.s32.totalorder %s17, 1
    %p132 = por %p130, %p131
    %p134 = scmp.ne.s32.totalorder %s117, %s133
    %p135 = scmp.eq.s32.totalorder %s17, 0
    %p136 = por %p134, %p135
    %s137 = ssub.s32 %s18, %s30
    %s138 = ssub.s32 %s19, %s26
    %s139 = sor.u32 %s137, %s138
    %p140 = scmp.eq.s32.totalorder %s139, 0
    %s142 = sadd.s32 %s141, 1
    %s143 = scalar_select %p140, %s141, %s142
    %p146 = pneg %p140
    %p147 = scmp.eq.s32.totalorder %s11, 1
    %p148 = por %p146, %p147
    %p149 = scmp.ne.s32.totalorder %s141, %s144
    %p150 = scmp.eq.s32.totalorder %s11, 0
    %p151 = por %p149, %p150
    %p152 = scmp.ne.s32.totalorder %s141, %s144
    %p153 = scmp.eq.s32.totalorder %s16, 1
    %p154 = por %p152, %p153
    %p155 = scmp.ne.s32.totalorder %s144, %s145
    %p156 = scmp.eq.s32.totalorder %s16, 0
    %p157 = por %p155, %p156
    %p158 = scmp.ne.s32.totalorder %s144, %s145
    %p159 = scmp.eq.s32.totalorder %s17, 1
    %p160 = por %p158, %p159
    %p162 = scmp.ne.s32.totalorder %s145, %s161
    %p163 = scmp.eq.s32.totalorder %s17, 0
    %p164 = por %p162, %p163
    %s165 = ssub.s32 %s18, %s30
    %s166 = ssub.s32 %s19, %s26
    %s167 = sor.u32 %s165, %s166
    %p168 = scmp.eq.s32.totalorder %s167, 0
    %s170 = sadd.s32 %s169, 1
    %s171 = scalar_select %p168, %s169, %s170
    %p174 = pneg %p168
    %p175 = scmp.eq.s32.totalorder %s11, 1
    %p176 = por %p174, %p175
    %p177 = scmp.ne.s32.totalorder %s169, %s172
    %p178 = scmp.eq.s32.totalorder %s11, 0
    %p179 = por %p177, %p178
    %p180 = scmp.ne.s32.totalorder %s169, %s172
    %p181 = scmp.eq.s32.totalorder %s16, 1
    %p182 = por %p180, %p181
    %p183 = scmp.ne.s32.totalorder %s172, %s173
    %p184 = scmp.eq.s32.totalorder %s16, 0
    %p185 = por %p183, %p184
    %p186 = scmp.ne.s32.totalorder %s172, %s173
    %p187 = scmp.eq.s32.totalorder %s17, 1
    %p188 = por %p186, %p187
    %p190 = scmp.ne.s32.totalorder %s173, %s189
    %p191 = scmp.eq.s32.totalorder %s17, 0
    %p192 = por %p190, %p191
    %p193 = scmp.le.s32.totalorder 1, %s11
    %p194 = scmp.lt.s32.totalorder %s11, 3
    %p195 = pnand %p193, %p194
    %p196 = pneg %p195
    // Predicated region
    $region9: #{basic_block_forward.11} parent=5 // pred_check
      _
    $region10: #{basic_block_forward.11} parent=5 // pred_check_branch
      %198 = sbr.rel (%p195) target = $region12
    $region11: #{basic_block_forward.11} parent=5 // pred_region
      %s199 = ssub.s32 %s11, 1
      // Predicated region
      $region13: #{basic_block_forward.11} parent=11 // pred_check
        %p200 = pneg %p77
      $region14: #{basic_block_forward.11} parent=11 // pred_check_branch
        %202 = sbr.rel (%p200) target = $region16
      $region15: #{basic_block_forward.11} parent=11 // pred_region
        %p203 = scmp.lt.s32.totalorder %s21, 0
        %s204 = scalar_select %p203, %s21, 0
        %s205 = smul.addr %s204, 2
        %s206 = scalar_lea.vmem %s1, %s205
      $region16: #{basic_block_forward.11} parent=11 // pred_fallthru
        _
      // Predicated region
      $region17: #{basic_block_forward.11} parent=11 // pred_check
        %p207 = pneg %p103
      $region18: #{basic_block_forward.11} parent=11 // pred_check_branch
        %209 = sbr.rel (%p207) target = $region20
      $region19: #{basic_block_forward.11} parent=11 // pred_region
        %p210 = scmp.lt.s32.totalorder %s21, 0
        %s211 = scalar_select %p210, %s21, 0
        %s212 = scalar_lea.vmem %s2, %s211
      $region20: #{basic_block_forward.11} parent=11 // pred_fallthru
        _
      // Predicated region
      $region21: #{basic_block_forward.11} parent=11 // pred_check
        %p213 = pneg %p129
      $region22: #{basic_block_forward.11} parent=11 // pred_check_branch
        %215 = sbr.rel (%p213) target = $region24
      $region23: #{basic_block_forward.11} parent=11 // pred_region
        %p216 = scmp.lt.s32.totalorder %s21, 0
        %s217 = scalar_select %p216, %s21, 0
        %s218 = scalar_lea.vmem %s3, %s217
      $region24: #{basic_block_forward.11} parent=11 // pred_fallthru
        _
    $region12: #{basic_block_forward.11} parent=5 // pred_fallthru
      _
    %p219 = scmp.lt.s32.totalorder %s11, 2
    // Predicated region
    $region25: #{basic_block_forward.11} parent=5 // pred_check
      %p220 = pneg %p219
    $region26: #{basic_block_forward.11} parent=5 // pred_check_branch
      %222 = sbr.rel (%p220) target = $region28
    $region27: #{basic_block_forward.11} parent=5 // pred_region
      // Predicated region
      $region29: #{basic_block_forward.11} parent=27 // pred_check
        %p223 = pneg %p45
      $region30: #{basic_block_forward.11} parent=27 // pred_check_branch
        %225 = sbr.rel (%p223) target = $region32
      $region31: #{basic_block_forward.11} parent=27 // pred_region
        %p226 = scmp.lt.s32.totalorder %s18, 1
        %s227 = scalar_select %p226, %s18, 1
        %p228 = scmp.lt.s32.totalorder %s19, 0
        %s229 = scalar_select %p228, %s19, 0
        %s230 = smul.addr %s227, 32
        %s231 = sadd.s32 %s229, %s230
        %s232 = smul.addr %s231, 4
        %s233 = scalar_lea.vmem %s0, %s232
      $region32: #{basic_block_forward.11} parent=27 // pred_fallthru
        _
      // Predicated region
      $region33: #{basic_block_forward.11} parent=27 // pred_check
        %p234 = pneg %p151
      $region34: #{basic_block_forward.11} parent=27 // pred_check_branch
        %236 = sbr.rel (%p234) target = $region36
      $region35: #{basic_block_forward.11} parent=27 // pred_region
        %p237 = scmp.lt.s32.totalorder %s18, 1
        %s238 = scalar_select %p237, %s18, 1
        %p239 = scmp.lt.s32.totalorder %s19, 0
        %s240 = scalar_select %p239, %s19, 0
        %s241 = smul.addr %s238, 32
        %s242 = sadd.s32 %s240, %s241
        %s243 = smul.addr %s242, 4
        %s244 = scalar_lea.vmem %s4, %s243
      $region36: #{basic_block_forward.11} parent=27 // pred_fallthru
        _
    $region28: #{basic_block_forward.11} parent=5 // pred_fallthru
      _
    %p245 = scmp.le.s32.totalorder 1, %s11
    %p246 = scmp.lt.s32.totalorder %s11, 3
    %p247 = pnand %p245, %p246
    %p248 = pneg %p247
    // Predicated region
    $region37: #{basic_block_forward.11} parent=5 // pred_check
      _
    $region38: #{basic_block_forward.11} parent=5 // pred_check_branch
      %250 = sbr.rel (%p247) target = $region40
    $region39: #{basic_block_forward.11} parent=5 // pred_region
      %s251 = ssub.s32 %s11, 1
      %p252 = scmp.lt.s32.totalorder %s20, 1
      %s253 = scalar_select %p252, %s20, 1
      %p254 = scmp.lt.s32.totalorder %s21, 0
      %s255 = scalar_select %p254, %s21, 0
      %s256 = smul.addr %s253, 32
      %s257 = sadd.s32 %s255, %s256
      %s258 = smul.addr %s257, 4
      %s259 = scalar_lea.vmem %s0, %s258
      %p260 = pneg %p51
      %p261 = pneg %p48
      %p262 = scmp.lt.s32.totalorder %s21, 0
      %s263 = scalar_select %p262, %s21, 0
      %s264 = smul.addr %s263, 2
      %s265 = scalar_lea.vmem %s1, %s264
      %p266 = pneg %p77
      %p267 = pneg %p74
      %p268 = scmp.lt.s32.totalorder %s21, 0
      %s269 = scalar_select %p268, %s21, 0
      %s270 = scalar_lea.vmem %s2, %s269
      %p271 = pneg %p103
      %p272 = pneg %p100
      %p273 = scmp.lt.s32.totalorder %s21, 0
      %s274 = scalar_select %p273, %s21, 0
      %s275 = scalar_lea.vmem %s3, %s274
      %p276 = pneg %p129
      %p277 = pneg %p126
      %p278 = scmp.lt.s32.totalorder %s20, 1
      %s279 = scalar_select %p278, %s20, 1
      %p280 = scmp.lt.s32.totalorder %s21, 0
      %s281 = scalar_select %p280, %s21, 0
      %s282 = smul.addr %s279, 32
      %s283 = sadd.s32 %s281, %s282
      %s284 = smul.addr %s283, 4
      %s285 = scalar_lea.vmem %s4, %s284
      %p286 = pneg %p157
      %p287 = pneg %p154
      %p288 = pneg %p185
      %p289 = pneg %p182
      %p290 = scmp.lt.s32.totalorder %s20, 1
      %s291 = scalar_select %p290, %s20, 1
      %p292 = scmp.lt.s32.totalorder %s21, 0
      %s293 = scalar_select %p292, %s21, 0
      %s294 = smul.addr %s291, 32
      %s295 = sadd.s32 %s293, %s294
      %s296 = smul.addr %s295, 8
      %s297 = scalar_lea.vmem %s5, %s296
      %p298 = scmp.lt.s32.totalorder %s20, 1
      %s299 = scalar_select %p298, %s20, 1
      %p300 = scmp.lt.s32.totalorder %s21, 0
      %s301 = scalar_select %p300, %s21, 0
      %s302 = smul.addr %s299, 32
      %s303 = sadd.s32 %s301, %s302
      %s304 = smul.addr %s303, 4
      %s305 = scalar_lea.vmem %s0, %s304
      %p306 = scmp.lt.s32.totalorder %s21, 0
      %s307 = scalar_select %p306, %s21, 0
      %s308 = smul.addr %s307, 2
      %s309 = scalar_lea.vmem %s1, %s308
      %p310 = scmp.lt.s32.totalorder %s21, 0
      %s311 = scalar_select %p310, %s21, 0
      %s312 = scalar_lea.vmem %s2, %s311
      %p313 = scmp.lt.s32.totalorder %s21, 0
      %s314 = scalar_select %p313, %s21, 0
      %s315 = scalar_lea.vmem %s3, %s314
      %p316 = scmp.lt.s32.totalorder %s20, 1
      %s317 = scalar_select %p316, %s20, 1
      %p318 = scmp.lt.s32.totalorder %s21, 0
      %s319 = scalar_select %p318, %s21, 0
      %s320 = smul.addr %s317, 32
      %s321 = sadd.s32 %s319, %s320
      %s322 = smul.addr %s321, 4
      %s323 = scalar_lea.vmem %s4, %s322
      %p324 = scmp.lt.s32.totalorder %s20, 1
      %s325 = scalar_select %p324, %s20, 1
      %p326 = scmp.lt.s32.totalorder %s21, 0
      %s327 = scalar_select %p326, %s21, 0
      %s328 = smul.addr %s325, 32
      %s329 = sadd.s32 %s327, %s328
      %s330 = smul.addr %s329, 8
      %s331 = scalar_lea.vmem %s5, %s330
      %v332 = vld [vmem:[%s309] sm:$0x3]
      %v333 = vld [vmem:[%s309 + $0x2] sm:$0x3]
      %vm334 = vcmask 25600
      %v335 = vsel %vm334, %v332, 0.0
      %v336 = vsel %vm334, %v333, 0.0
      %v337 = vadd.f32 %v335, %v336
      %v338 = vmul.f32 %v337, 0.001953125
      %v339 = vmul.f32 %v338, %v338
      %v341 = vrot.slane %v339, 7
      %v343 = vsub.f32 %v338, %v341
      %v344 = vmax.f32 %v343, 0.0
      %v345 = vld [vmem:[%s312] sm:$0x1]
      %v346 = vadd.f32 %v344, 1e-05
      %v347 = vrsqrt.pop %v346
      %v350 = vunpack.c.l.s4 1966171168
      %v351 = vunpack.c.0.s8 %v350
      %v352 = vlaneseq
      %v353 = vshrl.u32 %v352, 7
      %v354 = vsub.s32 %v351, %v353
      %v355 = vrot.slane %v347, %v354
      %v356 = vcombine.high %v355, %v355
      %v358 = vunpack.c.l.s4 1966171168
      %v359 = vunpack.c.0.s8 %v358
      %v360 = vlaneseq
      %v361 = vshrl.u32 %v360, 7
      %v362 = vsub.s32 %v359, %v361
      %v363 = vrot.slane %v356, %v362
      %v365 = vmul.f32 %v345, %v363
      %v366 = vld [vmem:[%s315] sm:$0x1]
      %v367 = vmul.f32 %v338, %v365
      %v368 = vsub.f32 %v366, %v367
      %v369 = vld [vmem:[%s305] sm:$0xf]
      %v370 = vld [vmem:[%s305 + $0x4] sm:$0xf]
      %v371 = vld [vmem:[%s305 + $0x8] sm:$0xf]
      %v372 = vld [vmem:[%s305 + $0xc] sm:$0xf]
      %v373 = vld [vmem:[%s305 + $0x10] sm:$0xf]
      %v374 = vld [vmem:[%s305 + $0x14] sm:$0xf]
      %v375 = vld [vmem:[%s305 + $0x18] sm:$0xf]
      %v376 = vld [vmem:[%s305 + $0x1c] sm:$0xf]
      %v377 = vld [vmem:[%s305 + $0x20] sm:$0xf]
      %v378 = vld [vmem:[%s305 + $0x24] sm:$0xf]
      %v379 = vld [vmem:[%s305 + $0x28] sm:$0xf]
      %v380 = vld [vmem:[%s305 + $0x2c] sm:$0xf]
      %v381 = vld [vmem:[%s305 + $0x30] sm:$0xf]
      %v382 = vld [vmem:[%s305 + $0x34] sm:$0xf]
      %v383 = vld [vmem:[%s305 + $0x38] sm:$0xf]
      %v384 = vld [vmem:[%s305 + $0x3c] sm:$0xf]
      %v385 = vld [vmem:[%s305 + $0x40] sm:$0xf]
      %v386 = vld [vmem:[%s305 + $0x44] sm:$0xf]
      %v387 = vld [vmem:[%s305 + $0x48] sm:$0xf]
      %v388 = vld [vmem:[%s305 + $0x4c] sm:$0xf]
      %v389 = vld [vmem:[%s305 + $0x50] sm:$0xf]
      %v390 = vld [vmem:[%s305 + $0x54] sm:$0xf]
      %v391 = vld [vmem:[%s305 + $0x58] sm:$0xf]
      %v392 = vld [vmem:[%s305 + $0x5c] sm:$0xf]
      %v393 = vld [vmem:[%s305 + $0x60] sm:$0xf]
      %v394 = vld [vmem:[%s305 + $0x64] sm:$0xf]
      %v395 = vld [vmem:[%s305 + $0x68] sm:$0xf]
      %v396 = vld [vmem:[%s305 + $0x6c] sm:$0xf]
      %v397 = vld [vmem:[%s305 + $0x70] sm:$0xf]
      %v398 = vld [vmem:[%s305 + $0x74] sm:$0xf]
      %v399 = vld [vmem:[%s305 + $0x78] sm:$0xf]
      %v400 = vld [vmem:[%s305 + $0x7c] sm:$0xf]
      %v401 = vunpack.c.l.bf16 %v369
      %v402 = vunpack.c.l.bf16 %v370
      %v403 = vunpack.c.l.bf16 %v371
      %v404 = vunpack.c.l.bf16 %v372
      %v405 = vunpack.c.l.bf16 %v373
      %v406 = vunpack.c.l.bf16 %v374
      %v407 = vunpack.c.l.bf16 %v375
      %v408 = vunpack.c.l.bf16 %v376
      %v409 = vunpack.c.l.bf16 %v377
      %v410 = vunpack.c.l.bf16 %v378
      %v411 = vunpack.c.l.bf16 %v379
      %v412 = vunpack.c.l.bf16 %v380
      %v413 = vunpack.c.l.bf16 %v381
      %v414 = vunpack.c.l.bf16 %v382
      %v415 = vunpack.c.l.bf16 %v383
      %v416 = vunpack.c.l.bf16 %v384
      %v417 = vunpack.c.l.bf16 %v385
      %v418 = vunpack.c.l.bf16 %v386
      %v419 = vunpack.c.l.bf16 %v387
      %v420 = vunpack.c.l.bf16 %v388
      %v421 = vunpack.c.l.bf16 %v389
      %v422 = vunpack.c.l.bf16 %v390
      %v423 = vunpack.c.l.bf16 %v391
      %v424 = vunpack.c.l.bf16 %v392
      %v425 = vunpack.c.l.bf16 %v393
      %v426 = vunpack.c.l.bf16 %v394
      %v427 = vunpack.c.l.bf16 %v395
      %v428 = vunpack.c.l.bf16 %v396
      %v429 = vunpack.c.l.bf16 %v397
      %v430 = vunpack.c.l.bf16 %v398
      %v431 = vunpack.c.l.bf16 %v399
      %v432 = vunpack.c.l.bf16 %v400
      %v434 = vlaneseq
      %v435 = vshrl.u32 %v434, 7
      %v436 = vsub.s32 0, %v435
      %v437 = vrot.slane %v365, %v436
      %v439 = vmul.f32 %v401, %v437
      %v440 = vmul.f32 %v402, %v437
      %v441 = vmul.f32 %v403, %v437
      %v442 = vmul.f32 %v404, %v437
      %v443 = vmul.f32 %v405, %v437
      %v444 = vmul.f32 %v406, %v437
      %v445 = vmul.f32 %v407, %v437
      %v446 = vmul.f32 %v408, %v437
      %v447 = vmul.f32 %v409, %v437
      %v448 = vmul.f32 %v410, %v437
      %v449 = vmul.f32 %v411, %v437
      %v450 = vmul.f32 %v412, %v437
      %v451 = vmul.f32 %v413, %v437
      %v452 = vmul.f32 %v414, %v437
      %v453 = vmul.f32 %v415, %v437
      %v454 = vmul.f32 %v416, %v437
      %v455 = vmul.f32 %v417, %v437
      %v456 = vmul.f32 %v418, %v437
      %v457 = vmul.f32 %v419, %v437
      %v458 = vmul.f32 %v420, %v437
      %v459 = vmul.f32 %v421, %v437
      %v460 = vmul.f32 %v422, %v437
      %v461 = vmul.f32 %v423, %v437
      %v462 = vmul.f32 %v424, %v437
      %v463 = vmul.f32 %v425, %v437
      %v464 = vmul.f32 %v426, %v437
      %v465 = vmul.f32 %v427, %v437
      %v466 = vmul.f32 %v428, %v437
      %v467 = vmul.f32 %v429, %v437
      %v468 = vmul.f32 %v430, %v437
      %v469 = vmul.f32 %v431, %v437
      %v470 = vmul.f32 %v432, %v437
      %v472 = vlaneseq
      %v473 = vshrl.u32 %v472, 7
      %v474 = vsub.s32 0, %v473
      %v475 = vrot.slane %v368, %v474
      %v477 = vadd.f32 %v439, %v475
      %v478 = vadd.f32 %v440, %v475
      %v479 = vadd.f32 %v441, %v475
      %v480 = vadd.f32 %v442, %v475
      %v481 = vadd.f32 %v443, %v475
      %v482 = vadd.f32 %v444, %v475
      %v483 = vadd.f32 %v445, %v475
      %v484 = vadd.f32 %v446, %v475
      %v485 = vadd.f32 %v447, %v475
      %v486 = vadd.f32 %v448, %v475
      %v487 = vadd.f32 %v449, %v475
      %v488 = vadd.f32 %v450, %v475
      %v489 = vadd.f32 %v451, %v475
      %v490 = vadd.f32 %v452, %v475
      %v491 = vadd.f32 %v453, %v475
      %v492 = vadd.f32 %v454, %v475
      %v493 = vadd.f32 %v455, %v475
      %v494 = vadd.f32 %v456, %v475
      %v495 = vadd.f32 %v457, %v475
      %v496 = vadd.f32 %v458, %v475
      %v497 = vadd.f32 %v459, %v475
      %v498 = vadd.f32 %v460, %v475
      %v499 = vadd.f32 %v461, %v475
      %v500 = vadd.f32 %v462, %v475
      %v501 = vadd.f32 %v463, %v475
      %v502 = vadd.f32 %v464, %v475
      %v503 = vadd.f32 %v465, %v475
      %v504 = vadd.f32 %v466, %v475
      %v505 = vadd.f32 %v467, %v475
      %v506 = vadd.f32 %v468, %v475
      %v507 = vadd.f32 %v469, %v475
      %v508 = vadd.f32 %v470, %v475
      %v509 = vld [vmem:[%s323] sm:$0xf]
      %v510 = vld [vmem:[%s323 + $0x4] sm:$0xf]
      %v511 = vld [vmem:[%s323 + $0x8] sm:$0xf]
      %v512 = vld [vmem:[%s323 + $0xc] sm:$0xf]
      %v513 = vld [vmem:[%s323 + $0x10] sm:$0xf]
      %v514 = vld [vmem:[%s323 + $0x14] sm:$0xf]
      %v515 = vld [vmem:[%s323 + $0x18] sm:$0xf]
      %v516 = vld [vmem:[%s323 + $0x1c] sm:$0xf]
      %v517 = vld [vmem:[%s323 + $0x20] sm:$0xf]
      %v518 = vld [vmem:[%s323 + $0x24] sm:$0xf]
      %v519 = vld [vmem:[%s323 + $0x28] sm:$0xf]
      %v520 = vld [vmem:[%s323 + $0x2c] sm:$0xf]
      %v521 = vld [vmem:[%s323 + $0x30] sm:$0xf]
      %v522 = vld [vmem:[%s323 + $0x34] sm:$0xf]
      %v523 = vld [vmem:[%s323 + $0x38] sm:$0xf]
      %v524 = vld [vmem:[%s323 + $0x3c] sm:$0xf]
      %v525 = vld [vmem:[%s323 + $0x40] sm:$0xf]
      %v526 = vld [vmem:[%s323 + $0x44] sm:$0xf]
      %v527 = vld [vmem:[%s323 + $0x48] sm:$0xf]
      %v528 = vld [vmem:[%s323 + $0x4c] sm:$0xf]
      %v529 = vld [vmem:[%s323 + $0x50] sm:$0xf]
      %v530 = vld [vmem:[%s323 + $0x54] sm:$0xf]
      %v531 = vld [vmem:[%s323 + $0x58] sm:$0xf]
      %v532 = vld [vmem:[%s323 + $0x5c] sm:$0xf]
      %v533 = vld [vmem:[%s323 + $0x60] sm:$0xf]
      %v534 = vld [vmem:[%s323 + $0x64] sm:$0xf]
      %v535 = vld [vmem:[%s323 + $0x68] sm:$0xf]
      %v536 = vld [vmem:[%s323 + $0x6c] sm:$0xf]
      %v537 = vld [vmem:[%s323 + $0x70] sm:$0xf]
      %v538 = vld [vmem:[%s323 + $0x74] sm:$0xf]
      %v539 = vld [vmem:[%s323 + $0x78] sm:$0xf]
      %v540 = vld [vmem:[%s323 + $0x7c] sm:$0xf]
      %v541 = vunpack.c.l.bf16 %v509
      %v542 = vunpack.c.l.bf16 %v510
      %v543 = vunpack.c.l.bf16 %v511
      %v544 = vunpack.c.l.bf16 %v512
      %v545 = vunpack.c.l.bf16 %v513
      %v546 = vunpack.c.l.bf16 %v514
      %v547 = vunpack.c.l.bf16 %v515
      %v548 = vunpack.c.l.bf16 %v516
      %v549 = vunpack.c.l.bf16 %v517
      %v550 = vunpack.c.l.bf16 %v518
      %v551 = vunpack.c.l.bf16 %v519
      %v552 = vunpack.c.l.bf16 %v520
      %v553 = vunpack.c.l.bf16 %v521
      %v554 = vunpack.c.l.bf16 %v522
      %v555 = vunpack.c.l.bf16 %v523
      %v556 = vunpack.c.l.bf16 %v524
      %v557 = vunpack.c.l.bf16 %v525
      %v558 = vunpack.c.l.bf16 %v526
      %v559 = vunpack.c.l.bf16 %v527
      %v560 = vunpack.c.l.bf16 %v528
      %v561 = vunpack.c.l.bf16 %v529
      %v562 = vunpack.c.l.bf16 %v530
      %v563 = vunpack.c.l.bf16 %v531
      %v564 = vunpack.c.l.bf16 %v532
      %v565 = vunpack.c.l.bf16 %v533
      %v566 = vunpack.c.l.bf16 %v534
      %v567 = vunpack.c.l.bf16 %v535
      %v568 = vunpack.c.l.bf16 %v536
      %v569 = vunpack.c.l.bf16 %v537
      %v570 = vunpack.c.l.bf16 %v538
      %v571 = vunpack.c.l.bf16 %v539
      %v572 = vunpack.c.l.bf16 %v540
      %v573 = vadd.f32 %v477, %v541
      %v574 = vadd.f32 %v478, %v542
      %v575 = vadd.f32 %v479, %v543
      %v576 = vadd.f32 %v480, %v544
      %v577 = vadd.f32 %v481, %v545
      %v578 = vadd.f32 %v482, %v546
      %v579 = vadd.f32 %v483, %v547
      %v580 = vadd.f32 %v484, %v548
      %v581 = vadd.f32 %v485, %v549
      %v582 = vadd.f32 %v486, %v550
      %v583 = vadd.f32 %v487, %v551
      %v584 = vadd.f32 %v488, %v552
      %v585 = vadd.f32 %v489, %v553
      %v586 = vadd.f32 %v490, %v554
      %v587 = vadd.f32 %v491, %v555
      %v588 = vadd.f32 %v492, %v556
      %v589 = vadd.f32 %v493, %v557
      %v590 = vadd.f32 %v494, %v558
      %v591 = vadd.f32 %v495, %v559
      %v592 = vadd.f32 %v496, %v560
      %v593 = vadd.f32 %v497, %v561
      %v594 = vadd.f32 %v498, %v562
      %v595 = vadd.f32 %v499, %v563
      %v596 = vadd.f32 %v500, %v564
      %v597 = vadd.f32 %v501, %v565
      %v598 = vadd.f32 %v502, %v566
      %v599 = vadd.f32 %v503, %v567
      %v600 = vadd.f32 %v504, %v568
      %v601 = vadd.f32 %v505, %v569
      %v602 = vadd.f32 %v506, %v570
      %v603 = vadd.f32 %v507, %v571
      %v604 = vadd.f32 %v508, %v572
      %vm605 = vcmp.gt.f32.partialorder %v573, 0.0
      %vm606 = vcmp.gt.f32.partialorder %v574, 0.0
      %vm607 = vcmp.gt.f32.partialorder %v575, 0.0
      %vm608 = vcmp.gt.f32.partialorder %v576, 0.0
      %vm609 = vcmp.gt.f32.partialorder %v577, 0.0
      %vm610 = vcmp.gt.f32.partialorder %v578, 0.0
      %vm611 = vcmp.gt.f32.partialorder %v579, 0.0
      %vm612 = vcmp.gt.f32.partialorder %v580, 0.0
      %vm613 = vcmp.gt.f32.partialorder %v581, 0.0
      %vm614 = vcmp.gt.f32.partialorder %v582, 0.0
      %vm615 = vcmp.gt.f32.partialorder %v583, 0.0
      %vm616 = vcmp.gt.f32.partialorder %v584, 0.0
      %vm617 = vcmp.gt.f32.partialorder %v585, 0.0
      %vm618 = vcmp.gt.f32.partialorder %v586, 0.0
      %vm619 = vcmp.gt.f32.partialorder %v587, 0.0
      %vm620 = vcmp.gt.f32.partialorder %v588, 0.0
      %vm621 = vcmp.gt.f32.partialorder %v589, 0.0
      %vm622 = vcmp.gt.f32.partialorder %v590, 0.0
      %vm623 = vcmp.gt.f32.partialorder %v591, 0.0
      %vm624 = vcmp.gt.f32.partialorder %v592, 0.0
      %vm625 = vcmp.gt.f32.partialorder %v593, 0.0
      %vm626 = vcmp.gt.f32.partialorder %v594, 0.0
      %vm627 = vcmp.gt.f32.partialorder %v595, 0.0
      %vm628 = vcmp.gt.f32.partialorder %v596, 0.0
      %vm629 = vcmp.gt.f32.partialorder %v597, 0.0
      %vm630 = vcmp.gt.f32.partialorder %v598, 0.0
      %vm631 = vcmp.gt.f32.partialorder %v599, 0.0
      %vm632 = vcmp.gt.f32.partialorder %v600, 0.0
      %vm633 = vcmp.gt.f32.partialorder %v601, 0.0
      %vm634 = vcmp.gt.f32.partialorder %v602, 0.0
      %vm635 = vcmp.gt.f32.partialorder %v603, 0.0
      %vm636 = vcmp.gt.f32.partialorder %v604, 0.0
      %v637 = vmul.f32 %v573, 0.1
      %v638 = vmul.f32 %v574, 0.1
      %v639 = vmul.f32 %v575, 0.1
      %v640 = vmul.f32 %v576, 0.1
      %v641 = vmul.f32 %v577, 0.1
      %v642 = vmul.f32 %v578, 0.1
      %v643 = vmul.f32 %v579, 0.1
      %v644 = vmul.f32 %v580, 0.1
      %v645 = vmul.f32 %v581, 0.1
      %v646 = vmul.f32 %v582, 0.1
      %v647 = vmul.f32 %v583, 0.1
      %v648 = vmul.f32 %v584, 0.1
      %v649 = vmul.f32 %v585, 0.1
      %v650 = vmul.f32 %v586, 0.1
      %v651 = vmul.f32 %v587, 0.1
      %v652 = vmul.f32 %v588, 0.1
      %v653 = vmul.f32 %v589, 0.1
      %v654 = vmul.f32 %v590, 0.1
      %v655 = vmul.f32 %v591, 0.1
      %v656 = vmul.f32 %v592, 0.1
      %v657 = vmul.f32 %v593, 0.1
      %v658 = vmul.f32 %v594, 0.1
      %v659 = vmul.f32 %v595, 0.1
      %v660 = vmul.f32 %v596, 0.1
      %v661 = vmul.f32 %v597, 0.1
      %v662 = vmul.f32 %v598, 0.1
      %v663 = vmul.f32 %v599, 0.1
      %v664 = vmul.f32 %v600, 0.1
      %v665 = vmul.f32 %v601, 0.1
      %v666 = vmul.f32 %v602, 0.1
      %v667 = vmul.f32 %v603, 0.1
      %v668 = vmul.f32 %v604, 0.1
      %v669 = vsel %vm605, %v573, %v637
      %v670 = vsel %vm606, %v574, %v638
      %v671 = vsel %vm607, %v575, %v639
      %v672 = vsel %vm608, %v576, %v640
      %v673 = vsel %vm609, %v577, %v641
      %v674 = vsel %vm610, %v578, %v642
      %v675 = vsel %vm611, %v579, %v643
      %v676 = vsel %vm612, %v580, %v644
      %v677 = vsel %vm613, %v581, %v645
      %v678 = vsel %vm614, %v582, %v646
      %v679 = vsel %vm615, %v583, %v647
      %v680 = vsel %vm616, %v584, %v648
      %v681 = vsel %vm617, %v585, %v649
      %v682 = vsel %vm618, %v586, %v650
      %v683 = vsel %vm619, %v587, %v651
      %v684 = vsel %vm620, %v588, %v652
      %v685 = vsel %vm621, %v589, %v653
      %v686 = vsel %vm622, %v590, %v654
      %v687 = vsel %vm623, %v591, %v655
      %v688 = vsel %vm624, %v592, %v656
      %v689 = vsel %vm625, %v593, %v657
      %v690 = vsel %vm626, %v594, %v658
      %v691 = vsel %vm627, %v595, %v659
      %v692 = vsel %vm628, %v596, %v660
      %v693 = vsel %vm629, %v597, %v661
      %v694 = vsel %vm630, %v598, %v662
      %v695 = vsel %vm631, %v599, %v663
      %v696 = vsel %vm632, %v600, %v664
      %v697 = vsel %vm633, %v601, %v665
      %v698 = vsel %vm634, %v602, %v666
      %v699 = vsel %vm635, %v603, %v667
      %v700 = vsel %vm636, %v604, %v668
      %vm701 = vcmask 31744
      %702 = vst.msk [vmem:[%s331] sm:$0xff] %vm701, %v669
      %703 = vst.msk [vmem:[%s331 + $0x8] sm:$0xff] %vm701, %v670
      %704 = vst.msk [vmem:[%s331 + $0x10] sm:$0xff] %vm701, %v671
      %705 = vst.msk [vmem:[%s331 + $0x18] sm:$0xff] %vm701, %v672
      %706 = vst.msk [vmem:[%s331 + $0x20] sm:$0xff] %vm701, %v673
      %707 = vst.msk [vmem:[%s331 + $0x28] sm:$0xff] %vm701, %v674
      %708 = vst.msk [vmem:[%s331 + $0x30] sm:$0xff] %vm701, %v675
      %709 = vst.msk [vmem:[%s331 + $0x38] sm:$0xff] %vm701, %v676
      %710 = vst.msk [vmem:[%s331 + $0x40] sm:$0xff] %vm701, %v677
      %711 = vst.msk [vmem:[%s331 + $0x48] sm:$0xff] %vm701, %v678
      %712 = vst.msk [vmem:[%s331 + $0x50] sm:$0xff] %vm701, %v679
      %713 = vst.msk [vmem:[%s331 + $0x58] sm:$0xff] %vm701, %v680
      %714 = vst.msk [vmem:[%s331 + $0x60] sm:$0xff] %vm701, %v681
      %715 = vst.msk [vmem:[%s331 + $0x68] sm:$0xff] %vm701, %v682
      %716 = vst.msk [vmem:[%s331 + $0x70] sm:$0xff] %vm701, %v683
      %717 = vst.msk [vmem:[%s331 + $0x78] sm:$0xff] %vm701, %v684
      %718 = vst.msk [vmem:[%s331 + $0x80] sm:$0xff] %vm701, %v685
      %719 = vst.msk [vmem:[%s331 + $0x88] sm:$0xff] %vm701, %v686
      %720 = vst.msk [vmem:[%s331 + $0x90] sm:$0xff] %vm701, %v687
      %721 = vst.msk [vmem:[%s331 + $0x98] sm:$0xff] %vm701, %v688
      %722 = vst.msk [vmem:[%s331 + $0xa0] sm:$0xff] %vm701, %v689
      %723 = vst.msk [vmem:[%s331 + $0xa8] sm:$0xff] %vm701, %v690
      %724 = vst.msk [vmem:[%s331 + $0xb0] sm:$0xff] %vm701, %v691
      %725 = vst.msk [vmem:[%s331 + $0xb8] sm:$0xff] %vm701, %v692
      %726 = vst.msk [vmem:[%s331 + $0xc0] sm:$0xff] %vm701, %v693
      %727 = vst.msk [vmem:[%s331 + $0xc8] sm:$0xff] %vm701, %v694
      %728 = vst.msk [vmem:[%s331 + $0xd0] sm:$0xff] %vm701, %v695
      %729 = vst.msk [vmem:[%s331 + $0xd8] sm:$0xff] %vm701, %v696
      %730 = vst.msk [vmem:[%s331 + $0xe0] sm:$0xff] %vm701, %v697
      %731 = vst.msk [vmem:[%s331 + $0xe8] sm:$0xff] %vm701, %v698
      %732 = vst.msk [vmem:[%s331 + $0xf0] sm:$0xff] %vm701, %v699
      %733 = vst.msk [vmem:[%s331 + $0xf8] sm:$0xff] %vm701, %v700
      %p734 = scmp.lt.s32.totalorder %s20, 1
      %s735 = scalar_select %p734, %s20, 1
      %p736 = scmp.lt.s32.totalorder %s21, 0
      %s737 = scalar_select %p736, %s21, 0
      %s738 = smul.addr %s735, 32
      %s739 = sadd.s32 %s737, %s738
      %s740 = smul.addr %s739, 8
      %s741 = scalar_lea.vmem %s5, %s740
      // Predicated region
      $region41: #{basic_block_forward.11} parent=39 // pred_check
        %p742 = pneg %p182
      $region42: #{basic_block_forward.11} parent=39 // pred_check_branch
        %744 = sbr.rel (%p742) target = $region44
      $region43: #{basic_block_forward.11} parent=39 // pred_region
        _
      $region44: #{basic_block_forward.11} parent=39 // pred_fallthru
        _
    $region40: #{basic_block_forward.11} parent=5 // pred_fallthru
      _
    %p745 = scmp.le.s32.totalorder 2, %s11
    // Predicated region
    $region45: #{basic_block_forward.11} parent=5 // pred_check
      %p746 = pneg %p745
    $region46: #{basic_block_forward.11} parent=5 // pred_check_branch
      %748 = sbr.rel (%p746) target = $region48
    $region47: #{basic_block_forward.11} parent=5 // pred_region
      %s749 = ssub.s32 %s11, 2
      // Predicated region
      $region49: #{basic_block_forward.11} parent=47 // pred_check
        %p750 = pneg %p188
      $region50: #{basic_block_forward.11} parent=47 // pred_check_branch
        %752 = sbr.rel (%p750) target = $region52
      $region51: #{basic_block_forward.11} parent=47 // pred_region
        %p753 = scmp.lt.s32.totalorder %s22, 1
        %s754 = scalar_select %p753, %s22, 1
        %p755 = scmp.lt.s32.totalorder %s23, 0
        %s756 = scalar_select %p755, %s23, 0
        %s757 = smul.addr %s754, 32
        %s758 = sadd.s32 %s756, %s757
        %s759 = smul.addr %s758, 8
        %s760 = scalar_lea.vmem %s5, %s759
      $region52: #{basic_block_forward.11} parent=47 // pred_fallthru
        _
    $region48: #{basic_block_forward.11} parent=5 // pred_fallthru
      _
  $region6: #{basic_block_forward.11} parent=0 // loop_footer
    %s15 = sadd.s32 1, %s11
  $region7: #{basic_block_forward.11} parent=0 // loop_footer_branch
    %10 = sbr.rel target = $region3
  $region8: #{basic_block_forward.11} parent=0 // loop_exit
    _

// kernel: basic_block_forward.6
$region0: #{basic_block_forward.6}
  #allocation0 [shape = 'u32[]', space=smem, size = 0x4, offset = 0x4, fixed_abs, tag = 'smem constant byte address 0x4 - core index']
  #allocation1 [shape = 'u32[144,128]{1,0:T(1,128)}', space=vmem, size = 0x12000, scoped, tag = 'internal scratch']
  #allocation2 [shape = 'bf16[288,12]{1,0:T(16,128)(2,1)}', space=vmem, size = 0x12000, scoped, tag = 'scratch operand']
  %s0 = inlined_call_operand.vmem [shape: bf16[2,256,4], index: 0, kind: input, shape index: {}]
  %s1 = inlined_call_operand.vmem [shape: bf16[3,12,4], index: 1, kind: input, shape index: {}]
  %s2 = inlined_call_operand.vmem [shape: bf16[2,256,4], index: 2, kind: output, shape index: {0}]
  %s3 = inlined_call_operand.vmem [shape: f32[2,2,4], index: 3, kind: output, shape index: {1}]
  %4 = xla_tuple %s2, %s3
  %s5 = sld [smem:[#allocation0]]
  $region53: #{basic_block_forward.6} parent=0
    _
  %s7 = ssub.s32 1, %s5
  %s8 = scalar_select 0, %s7, %s5
  loop: start=0, step=1, limit=4
  $region2: #{basic_block_forward.6} parent=0 // loop_pre_header
    _
  $region3: #{basic_block_forward.6} parent=0 // loop_header
    %s10 = sphi 0, %s14
    %p11 = scmp.ge.s32.totalorder %s10, 4
    %s17 = sphi 0, %s29
    %s18 = sphi 0, %s25
    %s19 = sphi 0, %s17
    %s20 = sphi 0, %s18
    %s21 = sphi 0, %s19
    %s22 = sphi 0, %s20
    %s32 = sphi 0, %s34
    %s35 = sphi 0, %s32
    %s36 = sphi 0, %s35
    %s52 = sphi 0, %s36
    %s58 = sphi 0, %s60
    %s61 = sphi 0, %s58
    %s62 = sphi 0, %s61
    %s78 = sphi 0, %s62
    %s86 = sphi 0, %s88
    %s89 = sphi 0, %s86
    %s90 = sphi 0, %s89
    %s106 = sphi 0, %s90
    %s114 = sphi 0, %s116
    %s117 = sphi 0, %s114
    %s118 = sphi 0, %s117
    %s134 = sphi 0, %s118
  $region4: #{basic_block_forward.6} parent=0 // loop_header_branch
    %13 = sbr.rel (%p11) target = $region8
  $region5: #{basic_block_forward.6} parent=0 // loop_body
    %s15 = ssub.s32 %s10, 1
    %s16 = ssub.s32 %s10, 2
    %s23 = sadd.s32 1, %s18
    %p24 = scmp.ge.s32.totalorder %s23, 1
    %s25 = scalar_select %p24, 0, %s23
    %s26 = sadd.s32 1, %s17
    %s27 = scalar_select %p24, %s26, %s17
    %p28 = scmp.ge.s32.totalorder %s27, 2
    %s29 = scalar_select %p28, 0, %s27
    %s30 = ssub.s32 %s17, %s29
    %p31 = scmp.eq.s32.totalorder %s30, 0
    %s33 = sadd.s32 %s32, 1
    %s34 = scalar_select %p31, %s32, %s33
    %p37 = pneg %p31
    %p38 = scmp.eq.s32.totalorder %s10, 1
    %p39 = por %p37, %p38
    %p40 = scmp.ne.s32.totalorder %s32, %s35
    %p41 = scmp.eq.s32.totalorder %s10, 0
    %p42 = por %p40, %p41
    %p43 = scmp.ne.s32.totalorder %s32, %s35
    %p44 = scmp.eq.s32.totalorder %s15, 1
    %p45 = por %p43, %p44
    %p46 = scmp.ne.s32.totalorder %s35, %s36
    %p47 = scmp.eq.s32.totalorder %s15, 0
    %p48 = por %p46, %p47
    %p49 = scmp.ne.s32.totalorder %s35, %s36
    %p50 = scmp.eq.s32.totalorder %s16, 1
    %p51 = por %p49, %p50
    %p53 = scmp.ne.s32.totalorder %s36, %s52
    %p54 = scmp.eq.s32.totalorder %s16, 0
    %p55 = por %p53, %p54
    %s56 = ssub.s32 %s18, %s25
    %p57 = scmp.eq.s32.totalorder %s56, 0
    %s59 = sadd.s32 %s58, 1
    %s60 = scalar_select %p57, %s58, %s59
    %p63 = pneg %p57
    %p64 = scmp.eq.s32.totalorder %s10, 1
    %p65 = por %p63, %p64
    %p66 = scmp.ne.s32.totalorder %s58, %s61
    %p67 = scmp.eq.s32.totalorder %s10, 0
    %p68 = por %p66, %p67
    %p69 = scmp.ne.s32.totalorder %s58, %s61
    %p70 = scmp.eq.s32.totalorder %s15, 1
    %p71 = por %p69, %p70
    %p72 = scmp.ne.s32.totalorder %s61, %s62
    %p73 = scmp.eq.s32.totalorder %s15, 0
    %p74 = por %p72, %p73
    %p75 = scmp.ne.s32.totalorder %s61, %s62
    %p76 = scmp.eq.s32.totalorder %s16, 1
    %p77 = por %p75, %p76
    %p79 = scmp.ne.s32.totalorder %s62, %s78
    %p80 = scmp.eq.s32.totalorder %s16, 0
    %p81 = por %p79, %p80
    %s82 = ssub.s32 %s17, %s29
    %s83 = ssub.s32 %s18, %s25
    %s84 = sor.u32 %s82, %s83
    %p85 = scmp.eq.s32.totalorder %s84, 0
    %s87 = sadd.s32 %s86, 1
    %s88 = scalar_select %p85, %s86, %s87
    %p91 = pneg %p85
    %p92 = scmp.eq.s32.totalorder %s10, 1
    %p93 = por %p91, %p92
    %p94 = scmp.ne.s32.totalorder %s86, %s89
    %p95 = scmp.eq.s32.totalorder %s10, 0
    %p96 = por %p94, %p95
    %p97 = scmp.ne.s32.totalorder %s86, %s89
    %p98 = scmp.eq.s32.totalorder %s15, 1
    %p99 = por %p97, %p98
    %p100 = scmp.ne.s32.totalorder %s89, %s90
    %p101 = scmp.eq.s32.totalorder %s15, 0
    %p102 = por %p100, %p101
    %p103 = scmp.ne.s32.totalorder %s89, %s90
    %p104 = scmp.eq.s32.totalorder %s16, 1
    %p105 = por %p103, %p104
    %p107 = scmp.ne.s32.totalorder %s90, %s106
    %p108 = scmp.eq.s32.totalorder %s16, 0
    %p109 = por %p107, %p108
    %s110 = ssub.s32 %s17, %s29
    %s111 = ssub.s32 %s18, %s25
    %s112 = sor.u32 %s110, %s111
    %p113 = scmp.eq.s32.totalorder %s112, 0
    %s115 = sadd.s32 %s114, 1
    %s116 = scalar_select %p113, %s114, %s115
    %p119 = pneg %p113
    %p120 = scmp.eq.s32.totalorder %s10, 1
    %p121 = por %p119, %p120
    %p122 = scmp.ne.s32.totalorder %s114, %s117
    %p123 = scmp.eq.s32.totalorder %s10, 0
    %p124 = por %p122, %p123
    %p125 = scmp.ne.s32.totalorder %s114, %s117
    %p126 = scmp.eq.s32.totalorder %s15, 1
    %p127 = por %p125, %p126
    %p128 = scmp.ne.s32.totalorder %s117, %s118
    %p129 = scmp.eq.s32.totalorder %s15, 0
    %p130 = por %p128, %p129
    %p131 = scmp.ne.s32.totalorder %s117, %s118
    %p132 = scmp.eq.s32.totalorder %s16, 1
    %p133 = por %p131, %p132
    %p135 = scmp.ne.s32.totalorder %s118, %s134
    %p136 = scmp.eq.s32.totalorder %s16, 0
    %p137 = por %p135, %p136
    %p138 = scmp.le.s32.totalorder 1, %s10
    %p139 = scmp.lt.s32.totalorder %s10, 3
    %p140 = pnand %p138, %p139
    %p141 = pneg %p140
    // Predicated region
    $region9: #{basic_block_forward.6} parent=5 // pred_check
      _
    $region10: #{basic_block_forward.6} parent=5 // pred_check_branch
      %143 = sbr.rel (%p140) target = $region12
    $region11: #{basic_block_forward.6} parent=5 // pred_region
      %s144 = ssub.s32 %s10, 1
      // Predicated region
      $region13: #{basic_block_forward.6} parent=11 // pred_check
        %p145 = pneg %p74
      $region14: #{basic_block_forward.6} parent=11 // pred_check_branch
        %147 = sbr.rel (%p145) target = $region16
      $region15: #{basic_block_forward.6} parent=11 // pred_region
        %p148 = scmp.lt.s32.totalorder %s20, 0
        %s149 = scalar_select %p148, %s20, 0
        %s150 = smul.addr %s149, 4
        %s151 = scalar_lea.vmem %s1, %s150
      $region16: #{basic_block_forward.6} parent=11 // pred_fallthru
        _
    $region12: #{basic_block_forward.6} parent=5 // pred_fallthru
      _
    %p152 = scmp.lt.s32.totalorder %s10, 2
    // Predicated region
    $region17: #{basic_block_forward.6} parent=5 // pred_check
      %p153 = pneg %p152
    $region18: #{basic_block_forward.6} parent=5 // pred_check_branch
      %155 = sbr.rel (%p153) target = $region20
    $region19: #{basic_block_forward.6} parent=5 // pred_region
      // Predicated region
      $region21: #{basic_block_forward.6} parent=19 // pred_check
        %p156 = pneg %p42
      $region22: #{basic_block_forward.6} parent=19 // pred_check_branch
        %158 = sbr.rel (%p156) target = $region24
      $region23: #{basic_block_forward.6} parent=19 // pred_region
        %p159 = scmp.lt.s32.totalorder %s17, 1
        %s160 = scalar_select %p159, %s17, 1
        %s161 = smul.addr %s160, 32
        %s162 = smul.addr %s161, 4
        %s163 = scalar_lea.vmem %s0, %s162
      $region24: #{basic_block_forward.6} parent=19 // pred_fallthru
        _
    $region20: #{basic_block_forward.6} parent=5 // pred_fallthru
      _
    %p164 = scmp.le.s32.totalorder 1, %s10
    %p165 = scmp.lt.s32.totalorder %s10, 3
    %p166 = pnand %p164, %p165
    %p167 = pneg %p166
    // Predicated region
    $region25: #{basic_block_forward.6} parent=5 // pred_check
      _
    $region26: #{basic_block_forward.6} parent=5 // pred_check_branch
      %169 = sbr.rel (%p166) target = $region28
    $region27: #{basic_block_forward.6} parent=5 // pred_region
      %s170 = ssub.s32 %s10, 1
      %p171 = scmp.lt.s32.totalorder %s19, 1
      %s172 = scalar_select %p171, %s19, 1
      %s173 = smul.addr %s172, 32
      %s174 = smul.addr %s173, 4
      %s175 = scalar_lea.vmem %s0, %s174
      %p176 = pneg %p48
      %p177 = pneg %p45
      %p178 = scmp.lt.s32.totalorder %s20, 0
      %s179 = scalar_select %p178, %s20, 0
      %s180 = smul.addr %s179, 4
      %s181 = scalar_lea.vmem %s1, %s180
      %p182 = pneg %p74
      %p183 = pneg %p71
      %p184 = pneg %p102
      %p185 = pneg %p99
      %p186 = scmp.lt.s32.totalorder %s19, 1
      %s187 = scalar_select %p186, %s19, 1
      %p188 = scmp.lt.s32.totalorder %s20, 0
      %s189 = scalar_select %p188, %s20, 0
      %s190 = smul.addr %s187, 32
      %s191 = sadd.s32 %s189, %s190
      %s192 = smul.addr %s191, 4
      %s193 = scalar_lea.vmem %s2, %s192
      %p194 = pneg %p130
      %p195 = pneg %p127
      %p196 = scmp.lt.s32.totalorder %s19, 1
      %s197 = scalar_select %p196, %s19, 1
      %p198 = scmp.lt.s32.totalorder %s20, 0
      %s199 = scalar_select %p198, %s20, 0
      %s200 = sadd.s32 %s199, %s197
      %s201 = smul.addr %s200, 2
      %s202 = scalar_lea.vmem %s3, %s201
      %p203 = scmp.lt.s32.totalorder %s19, 1
      %s204 = scalar_select %p203, %s19, 1
      %s205 = smul.addr %s204, 32
      %s206 = smul.addr %s205, 4
      %s207 = scalar_lea.vmem %s0, %s206
      %p208 = scmp.lt.s32.totalorder %s20, 0
      %s209 = scalar_select %p208, %s20, 0
      %s210 = smul.addr %s209, 4
      %s211 = scalar_lea.vmem %s1, %s210
      %p212 = scmp.lt.s32.totalorder %s19, 1
      %s213 = scalar_select %p212, %s19, 1
      %p214 = scmp.lt.s32.totalorder %s20, 0
      %s215 = scalar_select %p214, %s20, 0
      %s216 = smul.addr %s213, 32
      %s217 = sadd.s32 %s215, %s216
      %s218 = smul.addr %s217, 4
      %s219 = scalar_lea.vmem %s2, %s218
      %p220 = scmp.lt.s32.totalorder %s19, 1
      %s221 = scalar_select %p220, %s19, 1
      %p222 = scmp.lt.s32.totalorder %s20, 0
      %s223 = scalar_select %p222, %s20, 0
      %s224 = sadd.s32 %s223, %s221
      %s225 = smul.addr %s224, 2
      %s226 = scalar_lea.vmem %s3, %s225
      %p230 = scmp.eq.s32.totalorder %s20, 0
      // Predicated region
      $region29: #{basic_block_forward.6} parent=27 // pred_check
        %p231 = pneg %p230
      $region30: #{basic_block_forward.6} parent=27 // pred_check_branch
        %233 = sbr.rel (%p231) target = $region32
      $region31: #{basic_block_forward.6} parent=27 // pred_region
        %v234 = vld [vmem:[%s207] sm:$0xf]
        %v235 = vld [vmem:[%s207 + $0x4] sm:$0xf]
        %v236 = vld [vmem:[%s207 + $0x8] sm:$0xf]
        %v237 = vld [vmem:[%s207 + $0xc] sm:$0xf]
        %v238 = vld [vmem:[%s207 + $0x10] sm:$0xf]
        %v239 = vld [vmem:[%s207 + $0x14] sm:$0xf]
        %v240 = vld [vmem:[%s207 + $0x18] sm:$0xf]
        %v241 = vld [vmem:[%s207 + $0x1c] sm:$0xf]
        %v242 = vld [vmem:[%s207 + $0x20] sm:$0xf]
        %v243 = vld [vmem:[%s207 + $0x24] sm:$0xf]
        %v244 = vld [vmem:[%s207 + $0x28] sm:$0xf]
        %v245 = vld [vmem:[%s207 + $0x2c] sm:$0xf]
        %v246 = vld [vmem:[%s207 + $0x30] sm:$0xf]
        %v247 = vld [vmem:[%s207 + $0x34] sm:$0xf]
        %v248 = vld [vmem:[%s207 + $0x38] sm:$0xf]
        %v249 = vld [vmem:[%s207 + $0x3c] sm:$0xf]
        %v250 = vld [vmem:[%s207 + $0x40] sm:$0xf]
        %v251 = vld [vmem:[%s207 + $0x44] sm:$0xf]
        %v252 = vld [vmem:[%s207 + $0x48] sm:$0xf]
        %v253 = vld [vmem:[%s207 + $0x4c] sm:$0xf]
        %v254 = vld [vmem:[%s207 + $0x50] sm:$0xf]
        %v255 = vld [vmem:[%s207 + $0x54] sm:$0xf]
        %v256 = vld [vmem:[%s207 + $0x58] sm:$0xf]
        %v257 = vld [vmem:[%s207 + $0x5c] sm:$0xf]
        %v258 = vld [vmem:[%s207 + $0x60] sm:$0xf]
        %v259 = vld [vmem:[%s207 + $0x64] sm:$0xf]
        %v260 = vld [vmem:[%s207 + $0x68] sm:$0xf]
        %v261 = vld [vmem:[%s207 + $0x6c] sm:$0xf]
        %v262 = vld [vmem:[%s207 + $0x70] sm:$0xf]
        %v263 = vld [vmem:[%s207 + $0x74] sm:$0xf]
        %v264 = vld [vmem:[%s207 + $0x78] sm:$0xf]
        %v265 = vld [vmem:[%s207 + $0x7c] sm:$0xf]
        %v266 = vlaneseq
        %v267 = vshrl.u32 %v266, 7
        %v268 = vadd.s32 %v267, 8
        %v269 = vadd.s32 %v267, 16
        %v270 = vadd.s32 %v267, 24
        %v271 = vadd.s32 %v267, 32
        %v272 = vadd.s32 %v267, 40
        %v273 = vadd.s32 %v267, 48
        %v274 = vadd.s32 %v267, 56
        %v275 = vadd.s32 %v267, 64
        %v276 = vadd.s32 %v267, 72
        %v277 = vadd.s32 %v267, 80
        %v278 = vadd.s32 %v267, 88
        %v279 = vadd.s32 %v267, 96
        %v280 = vadd.s32 %v267, 104
        %v281 = vadd.s32 %v267, 112
        %v282 = vadd.s32 %v267, 120
        %v283 = vadd.s32 %v267, 128
        %v284 = vadd.s32 %v267, 136
        %v285 = vadd.s32 %v267, 144
        %v286 = vadd.s32 %v267, 152
        %v287 = vadd.s32 %v267, 160
        %v288 = vadd.s32 %v267, 168
        %v289 = vadd.s32 %v267, 176
        %v290 = vadd.s32 %v267, 184
        %v291 = vadd.s32 %v267, 192
        %v292 = vadd.s32 %v267, 200
        %v293 = vadd.s32 %v267, 208
        %v294 = vadd.s32 %v267, 216
        %v295 = vadd.s32 %v267, 224
        %v296 = vadd.s32 %v267, 232
        %v297 = vadd.s32 %v267, 240
        %v298 = vadd.s32 %v267, 248
        %vm299 = vcmp.lt.s32.totalorder %v267, 0
        %v300 = vsub.s32 0, %v267
        %v301 = vsel %vm299, %v300, %v267
        %v302 = vshrl.u32 %v301, 4
        %v303 = vand.u32 %v301, 15
        %v304 = vsub.s32 0, %v303
        %v305 = vsel %vm299, %v304, %v303
        %vm306 = vcmp.lt.s32.totalorder %v268, 0
        %v307 = vsub.s32 0, %v268
        %v308 = vsel %vm306, %v307, %v268
        %v309 = vshrl.u32 %v308, 4
        %v310 = vand.u32 %v308, 15
        %v311 = vsub.s32 0, %v310
        %v312 = vsel %vm306, %v311, %v310
        %vm313 = vcmp.lt.s32.totalorder %v269, 0
        %v314 = vsub.s32 0, %v269
        %v315 = vsel %vm313, %v314, %v269
        %v316 = vshrl.u32 %v315, 4
        %v317 = vand.u32 %v315, 15
        %v318 = vsub.s32 0, %v317
        %v319 = vsel %vm313, %v318, %v317
        %vm320 = vcmp.lt.s32.totalorder %v270, 0
        %v321 = vsub.s32 0, %v270
        %v322 = vsel %vm320, %v321, %v270
        %v323 = vshrl.u32 %v322, 4
        %v324 = vand.u32 %v322, 15
        %v325 = vsub.s32 0, %v324
        %v326 = vsel %vm320, %v325, %v324
        %vm327 = vcmp.lt.s32.totalorder %v271, 0
        %v328 = vsub.s32 0, %v271
        %v329 = vsel %vm327, %v328, %v271
        %v330 = vshrl.u32 %v329, 4
        %v331 = vand.u32 %v329, 15
        %v332 = vsub.s32 0, %v331
        %v333 = vsel %vm327, %v332, %v331
        %vm334 = vcmp.lt.s32.totalorder %v272, 0
        %v335 = vsub.s32 0, %v272
        %v336 = vsel %vm334, %v335, %v272
        %v337 = vshrl.u32 %v336, 4
        %v338 = vand.u32 %v336, 15
        %v339 = vsub.s32 0, %v338
        %v340 = vsel %vm334, %v339, %v338
        %vm341 = vcmp.lt.s32.totalorder %v273, 0
        %v342 = vsub.s32 0, %v273
        %v343 = vsel %vm341, %v342, %v273
        %v344 = vshrl.u32 %v343, 4
        %v345 = vand.u32 %v343, 15
        %v346 = vsub.s32 0, %v345
        %v347 = vsel %vm341, %v346, %v345
        %vm348 = vcmp.lt.s32.totalorder %v274, 0
        %v349 = vsub.s32 0, %v274
        %v350 = vsel %vm348, %v349, %v274
        %v351 = vshrl.u32 %v350, 4
        %v352 = vand.u32 %v350, 15
        %v353 = vsub.s32 0, %v352
        %v354 = vsel %vm348, %v353, %v352
        %vm355 = vcmp.lt.s32.totalorder %v275, 0
        %v356 = vsub.s32 0, %v275
        %v357 = vsel %vm355, %v356, %v275
        %v358 = vshrl.u32 %v357, 4
        %v359 = vand.u32 %v357, 15
        %v360 = vsub.s32 0, %v359
        %v361 = vsel %vm355, %v360, %v359
        %vm362 = vcmp.lt.s32.totalorder %v276, 0
        %v363 = vsub.s32 0, %v276
        %v364 = vsel %vm362, %v363, %v276
        %v365 = vshrl.u32 %v364, 4
        %v366 = vand.u32 %v364, 15
        %v367 = vsub.s32 0, %v366
        %v368 = vsel %vm362, %v367, %v366
        %vm369 = vcmp.lt.s32.totalorder %v277, 0
        %v370 = vsub.s32 0, %v277
        %v371 = vsel %vm369, %v370, %v277
        %v372 = vshrl.u32 %v371, 4
        %v373 = vand.u32 %v371, 15
        %v374 = vsub.s32 0, %v373
        %v375 = vsel %vm369, %v374, %v373
        %vm376 = vcmp.lt.s32.totalorder %v278, 0
        %v377 = vsub.s32 0, %v278
        %v378 = vsel %vm376, %v377, %v278
        %v379 = vshrl.u32 %v378, 4
        %v380 = vand.u32 %v378, 15
        %v381 = vsub.s32 0, %v380
        %v382 = vsel %vm376, %v381, %v380
        %vm383 = vcmp.lt.s32.totalorder %v279, 0
        %v384 = vsub.s32 0, %v279
        %v385 = vsel %vm383, %v384, %v279
        %v386 = vshrl.u32 %v385, 4
        %v387 = vand.u32 %v385, 15
        %v388 = vsub.s32 0, %v387
        %v389 = vsel %vm383, %v388, %v387
        %vm390 = vcmp.lt.s32.totalorder %v280, 0
        %v391 = vsub.s32 0, %v280
        %v392 = vsel %vm390, %v391, %v280
        %v393 = vshrl.u32 %v392, 4
        %v394 = vand.u32 %v392, 15
        %v395 = vsub.s32 0, %v394
        %v396 = vsel %vm390, %v395, %v394
        %vm397 = vcmp.lt.s32.totalorder %v281, 0
        %v398 = vsub.s32 0, %v281
        %v399 = vsel %vm397, %v398, %v281
        %v400 = vshrl.u32 %v399, 4
        %v401 = vand.u32 %v399, 15
        %v402 = vsub.s32 0, %v401
        %v403 = vsel %vm397, %v402, %v401
        %vm404 = vcmp.lt.s32.totalorder %v282, 0
        %v405 = vsub.s32 0, %v282
        %v406 = vsel %vm404, %v405, %v282
        %v407 = vshrl.u32 %v406, 4
        %v408 = vand.u32 %v406, 15
        %v409 = vsub.s32 0, %v408
        %v410 = vsel %vm404, %v409, %v408
        %vm411 = vcmp.lt.s32.totalorder %v283, 0
        %v412 = vsub.s32 0, %v283
        %v413 = vsel %vm411, %v412, %v283
        %v414 = vshrl.u32 %v413, 4
        %v415 = vand.u32 %v413, 15
        %v416 = vsub.s32 0, %v415
        %v417 = vsel %vm411, %v416, %v415
        %vm418 = vcmp.lt.s32.totalorder %v284, 0
        %v419 = vsub.s32 0, %v284
        %v420 = vsel %vm418, %v419, %v284
        %v421 = vshrl.u32 %v420, 4
        %v422 = vand.u32 %v420, 15
        %v423 = vsub.s32 0, %v422
        %v424 = vsel %vm418, %v423, %v422
        %vm425 = vcmp.lt.s32.totalorder %v285, 0
        %v426 = vsub.s32 0, %v285
        %v427 = vsel %vm425, %v426, %v285
        %v428 = vshrl.u32 %v427, 4
        %v429 = vand.u32 %v427, 15
        %v430 = vsub.s32 0, %v429
        %v431 = vsel %vm425, %v430, %v429
        %vm432 = vcmp.lt.s32.totalorder %v286, 0
        %v433 = vsub.s32 0, %v286
        %v434 = vsel %vm432, %v433, %v286
        %v435 = vshrl.u32 %v434, 4
        %v436 = vand.u32 %v434, 15
        %v437 = vsub.s32 0, %v436
        %v438 = vsel %vm432, %v437, %v436
        %vm439 = vcmp.lt.s32.totalorder %v287, 0
        %v440 = vsub.s32 0, %v287
        %v441 = vsel %vm439, %v440, %v287
        %v442 = vshrl.u32 %v441, 4
        %v443 = vand.u32 %v441, 15
        %v444 = vsub.s32 0, %v443
        %v445 = vsel %vm439, %v444, %v443
        %vm446 = vcmp.lt.s32.totalorder %v288, 0
        %v447 = vsub.s32 0, %v288
        %v448 = vsel %vm446, %v447, %v288
        %v449 = vshrl.u32 %v448, 4
        %v450 = vand.u32 %v448, 15
        %v451 = vsub.s32 0, %v450
        %v452 = vsel %vm446, %v451, %v450
        %vm453 = vcmp.lt.s32.totalorder %v289, 0
        %v454 = vsub.s32 0, %v289
        %v455 = vsel %vm453, %v454, %v289
        %v456 = vshrl.u32 %v455, 4
        %v457 = vand.u32 %v455, 15
        %v458 = vsub.s32 0, %v457
        %v459 = vsel %vm453, %v458, %v457
        %vm460 = vcmp.lt.s32.totalorder %v290, 0
        %v461 = vsub.s32 0, %v290
        %v462 = vsel %vm460, %v461, %v290
        %v463 = vshrl.u32 %v462, 4
        %v464 = vand.u32 %v462, 15
        %v465 = vsub.s32 0, %v464
        %v466 = vsel %vm460, %v465, %v464
        %vm467 = vcmp.lt.s32.totalorder %v291, 0
        %v468 = vsub.s32 0, %v291
        %v469 = vsel %vm467, %v468, %v291
        %v470 = vshrl.u32 %v469, 4
        %v471 = vand.u32 %v469, 15
        %v472 = vsub.s32 0, %v471
        %v473 = vsel %vm467, %v472, %v471
        %vm474 = vcmp.lt.s32.totalorder %v292, 0
        %v475 = vsub.s32 0, %v292
        %v476 = vsel %vm474, %v475, %v292
        %v477 = vshrl.u32 %v476, 4
        %v478 = vand.u32 %v476, 15
        %v479 = vsub.s32 0, %v478
        %v480 = vsel %vm474, %v479, %v478
        %vm481 = vcmp.lt.s32.totalorder %v293, 0
        %v482 = vsub.s32 0, %v293
        %v483 = vsel %vm481, %v482, %v293
        %v484 = vshrl.u32 %v483, 4
        %v485 = vand.u32 %v483, 15
        %v486 = vsub.s32 0, %v485
        %v487 = vsel %vm481, %v486, %v485
        %vm488 = vcmp.lt.s32.totalorder %v294, 0
        %v489 = vsub.s32 0, %v294
        %v490 = vsel %vm488, %v489, %v294
        %v491 = vshrl.u32 %v490, 4
        %v492 = vand.u32 %v490, 15
        %v493 = vsub.s32 0, %v492
        %v494 = vsel %vm488, %v493, %v492
        %vm495 = vcmp.lt.s32.totalorder %v295, 0
        %v496 = vsub.s32 0, %v295
        %v497 = vsel %vm495, %v496, %v295
        %v498 = vshrl.u32 %v497, 4
        %v499 = vand.u32 %v497, 15
        %v500 = vsub.s32 0, %v499
        %v501 = vsel %vm495, %v500, %v499
        %vm502 = vcmp.lt.s32.totalorder %v296, 0
        %v503 = vsub.s32 0, %v296
        %v504 = vsel %vm502, %v503, %v296
        %v505 = vshrl.u32 %v504, 4
        %v506 = vand.u32 %v504, 15
        %v507 = vsub.s32 0, %v506
        %v508 = vsel %vm502, %v507, %v506
        %vm509 = vcmp.lt.s32.totalorder %v297, 0
        %v510 = vsub.s32 0, %v297
        %v511 = vsel %vm509, %v510, %v297
        %v512 = vshrl.u32 %v511, 4
        %v513 = vand.u32 %v511, 15
        %v514 = vsub.s32 0, %v513
        %v515 = vsel %vm509, %v514, %v513
        %vm516 = vcmp.lt.s32.totalorder %v298, 0
        %v517 = vsub.s32 0, %v298
        %v518 = vsel %vm516, %v517, %v298
        %v519 = vshrl.u32 %v518, 4
        %v520 = vand.u32 %v518, 15
        %v521 = vsub.s32 0, %v520
        %v522 = vsel %vm516, %v521, %v520
        %vm523 = vcmp.ne.s32.totalorder %v305, 0
        %vm524 = vcmp.ne.s32.totalorder %v312, 0
        %vm525 = vcmp.ne.s32.totalorder %v319, 0
        %vm526 = vcmp.ne.s32.totalorder %v326, 0
        %vm527 = vcmp.ne.s32.totalorder %v333, 0
        %vm528 = vcmp.ne.s32.totalorder %v340, 0
        %vm529 = vcmp.ne.s32.totalorder %v347, 0
        %vm530 = vcmp.ne.s32.totalorder %v354, 0
        %vm531 = vcmp.ne.s32.totalorder %v361, 0
        %vm532 = vcmp.ne.s32.totalorder %v368, 0
        %vm533 = vcmp.ne.s32.totalorder %v375, 0
        %vm534 = vcmp.ne.s32.totalorder %v382, 0
        %vm535 = vcmp.ne.s32.totalorder %v389, 0
        %vm536 = vcmp.ne.s32.totalorder %v396, 0
        %vm537 = vcmp.ne.s32.totalorder %v403, 0
        %vm538 = vcmp.ne.s32.totalorder %v410, 0
        %vm539 = vcmp.ne.s32.totalorder %v417, 0
        %vm540 = vcmp.ne.s32.totalorder %v424, 0
        %vm541 = vcmp.ne.s32.totalorder %v431, 0
        %vm542 = vcmp.ne.s32.totalorder %v438, 0
        %vm543 = vcmp.ne.s32.totalorder %v445, 0
        %vm544 = vcmp.ne.s32.totalorder %v452, 0
        %vm545 = vcmp.ne.s32.totalorder %v459, 0
        %vm546 = vcmp.ne.s32.totalorder %v466, 0
        %vm547 = vcmp.ne.s32.totalorder %v473, 0
        %vm548 = vcmp.ne.s32.totalorder %v480, 0
        %vm549 = vcmp.ne.s32.totalorder %v487, 0
        %vm550 = vcmp.ne.s32.totalorder %v494, 0
        %vm551 = vcmp.ne.s32.totalorder %v501, 0
        %vm552 = vcmp.ne.s32.totalorder %v508, 0
        %vm553 = vcmp.ne.s32.totalorder %v515, 0
        %vm554 = vcmp.ne.s32.totalorder %v522, 0
        %vm555 = vcmp.lt.s32.totalorder %v305, 0
        %vm556 = vcmp.lt.s32.totalorder %v312, 0
        %vm557 = vcmp.lt.s32.totalorder %v319, 0
        %vm558 = vcmp.lt.s32.totalorder %v326, 0
        %vm559 = vcmp.lt.s32.totalorder %v333, 0
        %vm560 = vcmp.lt.s32.totalorder %v340, 0
        %vm561 = vcmp.lt.s32.totalorder %v347, 0
        %vm562 = vcmp.lt.s32.totalorder %v354, 0
        %vm563 = vcmp.lt.s32.totalorder %v361, 0
        %vm564 = vcmp.lt.s32.totalorder %v368, 0
        %vm565 = vcmp.lt.s32.totalorder %v375, 0
        %vm566 = vcmp.lt.s32.totalorder %v382, 0
        %vm567 = vcmp.lt.s32.totalorder %v389, 0
        %vm568 = vcmp.lt.s32.totalorder %v396, 0
        %vm569 = vcmp.lt.s32.totalorder %v403, 0
        %vm570 = vcmp.lt.s32.totalorder %v410, 0
        %vm571 = vcmp.lt.s32.totalorder %v417, 0
        %vm572 = vcmp.lt.s32.totalorder %v424, 0
        %vm573 = vcmp.lt.s32.totalorder %v431, 0
        %vm574 = vcmp.lt.s32.totalorder %v438, 0
        %vm575 = vcmp.lt.s32.totalorder %v445, 0
        %vm576 = vcmp.lt.s32.totalorder %v452, 0
        %vm577 = vcmp.lt.s32.totalorder %v459, 0
        %vm578 = vcmp.lt.s32.totalorder %v466, 0
        %vm579 = vcmp.lt.s32.totalorder %v473, 0
        %vm580 = vcmp.lt.s32.totalorder %v480, 0
        %vm581 = vcmp.lt.s32.totalorder %v487, 0
        %vm582 = vcmp.lt.s32.totalorder %v494, 0
        %vm583 = vcmp.lt.s32.totalorder %v501, 0
        %vm584 = vcmp.lt.s32.totalorder %v508, 0
        %vm585 = vcmp.lt.s32.totalorder %v515, 0
        %vm586 = vcmp.lt.s32.totalorder %v522, 0
        %vm587 = vmand %vm555, %vm523
        %vm588 = vmand %vm556, %vm524
        %vm589 = vmand %vm557, %vm525
        %vm590 = vmand %vm558, %vm526
        %vm591 = vmand %vm559, %vm527
        %vm592 = vmand %vm560, %vm528
        %vm593 = vmand %vm561, %vm529
        %vm594 = vmand %vm562, %vm530
        %vm595 = vmand %vm563, %vm531
        %vm596 = vmand %vm564, %vm532
        %vm597 = vmand %vm565, %vm533
        %vm598 = vmand %vm566, %vm534
        %vm599 = vmand %vm567, %vm535
        %vm600 = vmand %vm568, %vm536
        %vm601 = vmand %vm569, %vm537
        %vm602 = vmand %vm570, %vm538
        %vm603 = vmand %vm571, %vm539
        %vm604 = vmand %vm572, %vm540
        %vm605 = vmand %vm573, %vm541
        %vm606 = vmand %vm574, %vm542
        %vm607 = vmand %vm575, %vm543
        %vm608 = vmand %vm576, %vm544
        %vm609 = vmand %vm577, %vm545
        %vm610 = vmand %vm578, %vm546
        %vm611 = vmand %vm579, %vm547
        %vm612 = vmand %vm580, %vm548
        %vm613 = vmand %vm581, %vm549
        %vm614 = vmand %vm582, %vm550
        %vm615 = vmand %vm583, %vm551
        %vm616 = vmand %vm584, %vm552
        %vm617 = vmand %vm585, %vm553
        %vm618 = vmand %vm586, %vm554
        %v619 = vadd.s32 %v305, 16
        %v620 = vadd.s32 %v312, 16
        %v621 = vadd.s32 %v319, 16
        %v622 = vadd.s32 %v326, 16
        %v623 = vadd.s32 %v333, 16
        %v624 = vadd.s32 %v340, 16
        %v625 = vadd.s32 %v347, 16
        %v626 = vadd.s32 %v354, 16
        %v627 = vadd.s32 %v361, 16
        %v628 = vadd.s32 %v368, 16
        %v629 = vadd.s32 %v375, 16
        %v630 = vadd.s32 %v382, 16
        %v631 = vadd.s32 %v389, 16
        %v632 = vadd.s32 %v396, 16
        %v633 = vadd.s32 %v403, 16
        %v634 = vadd.s32 %v410, 16
        %v635 = vadd.s32 %v417, 16
        %v636 = vadd.s32 %v424, 16
        %v637 = vadd.s32 %v431, 16
        %v638 = vadd.s32 %v438, 16
        %v639 = vadd.s32 %v445, 16
        %v640 = vadd.s32 %v452, 16
        %v641 = vadd.s32 %v459, 16
        %v642 = vadd.s32 %v466, 16
        %v643 = vadd.s32 %v473, 16
        %v644 = vadd.s32 %v480, 16
        %v645 = vadd.s32 %v487, 16
        %v646 = vadd.s32 %v494, 16
        %v647 = vadd.s32 %v501, 16
        %v648 = vadd.s32 %v508, 16
        %v649 = vadd.s32 %v515, 16
        %v650 = vadd.s32 %v522, 16
        %v651 = vsel %vm587, %v619, %v305
        %v652 = vsel %vm588, %v620, %v312
        %v653 = vsel %vm589, %v621, %v319
        %v654 = vsel %vm590, %v622, %v326
        %v655 = vsel %vm591, %v623, %v333
        %v656 = vsel %vm592, %v624, %v340
        %v657 = vsel %vm593, %v625, %v347
        %v658 = vsel %vm594, %v626, %v354
        %v659 = vsel %vm595, %v627, %v361
        %v660 = vsel %vm596, %v628, %v368
        %v661 = vsel %vm597, %v629, %v375
        %v662 = vsel %vm598, %v630, %v382
        %v663 = vsel %vm599, %v631, %v389
        %v664 = vsel %vm600, %v632, %v396
        %v665 = vsel %vm601, %v633, %v403
        %v666 = vsel %vm602, %v634, %v410
        %v667 = vsel %vm603, %v635, %v417
        %v668 = vsel %vm604, %v636, %v424
        %v669 = vsel %vm605, %v637, %v431
        %v670 = vsel %vm606, %v638, %v438
        %v671 = vsel %vm607, %v639, %v445
        %v672 = vsel %vm608, %v640, %v452
        %v673 = vsel %vm609, %v641, %v459
        %v674 = vsel %vm610, %v642, %v466
        %v675 = vsel %vm611, %v643, %v473
        %v676 = vsel %vm612, %v644, %v480
        %v677 = vsel %vm613, %v645, %v487
        %v678 = vsel %vm614, %v646, %v494
        %v679 = vsel %vm615, %v647, %v501
        %v680 = vsel %vm616, %v648, %v508
        %v681 = vsel %vm617, %v649, %v515
        %v682 = vsel %vm618, %v650, %v522
        %v715 = vunpack.c.l.b16 %v234
        %v716 = vunpack.c.l.b16 %v235
        %v717 = vunpack.c.l.b16 %v236
        %v718 = vunpack.c.l.b16 %v237
        %v719 = vunpack.c.l.b16 %v238
        %v720 = vunpack.c.l.b16 %v239
        %v721 = vunpack.c.l.b16 %v240
        %v722 = vunpack.c.l.b16 %v241
        %v723 = vunpack.c.l.b16 %v242
        %v724 = vunpack.c.l.b16 %v243
        %v725 = vunpack.c.l.b16 %v244
        %v726 = vunpack.c.l.b16 %v245
        %v727 = vunpack.c.l.b16 %v246
        %v728 = vunpack.c.l.b16 %v247
        %v729 = vunpack.c.l.b16 %v248
        %v730 = vunpack.c.l.b16 %v249
        %v731 = vunpack.c.l.b16 %v250
        %v732 = vunpack.c.l.b16 %v251
        %v733 = vunpack.c.l.b16 %v252
        %v734 = vunpack.c.l.b16 %v253
        %v735 = vunpack.c.l.b16 %v254
        %v736 = vunpack.c.l.b16 %v255
        %v737 = vunpack.c.l.b16 %v256
        %v738 = vunpack.c.l.b16 %v257
        %v739 = vunpack.c.l.b16 %v258
        %v740 = vunpack.c.l.b16 %v259
        %v741 = vunpack.c.l.b16 %v260
        %v742 = vunpack.c.l.b16 %v261
        %v743 = vunpack.c.l.b16 %v262
        %v744 = vunpack.c.l.b16 %v263
        %v745 = vunpack.c.l.b16 %v264
        %v746 = vunpack.c.l.b16 %v265
        %v747 = vpack.c.b16 %v716, %v715
        %v748 = vpack.c.b16 %v718, %v717
        %v749 = vpack.c.b16 %v720, %v719
        %v750 = vpack.c.b16 %v722, %v721
        %v751 = vpack.c.b16 %v724, %v723
        %v752 = vpack.c.b16 %v726, %v725
        %v753 = vpack.c.b16 %v728, %v727
        %v754 = vpack.c.b16 %v730, %v729
        %v755 = vpack.c.b16 %v732, %v731
        %v756 = vpack.c.b16 %v734, %v733
        %v757 = vpack.c.b16 %v736, %v735
        %v758 = vpack.c.b16 %v738, %v737
        %v759 = vpack.c.b16 %v740, %v739
        %v760 = vpack.c.b16 %v742, %v741
        %v761 = vpack.c.b16 %v744, %v743
        %v762 = vpack.c.b16 %v746, %v745
        %vm763 = vsmask.f32 256
        %v765 = vshrl.u32 %v747, 16
        %v767 = vrot.slane %v765, 7
        %v768 = vshll.u32 %v747, 16
        %v770 = vor.u32 %v767, %v768
        %v772 = vshrl.u32 %v748, 16
        %v774 = vrot.slane %v772, 7
        %v775 = vshll.u32 %v748, 16
        %v777 = vor.u32 %v774, %v775
        %v778 = vsel %vm763, %v767, %v777
        %v780 = vshrl.u32 %v749, 16
        %v782 = vrot.slane %v780, 7
        %v783 = vshll.u32 %v749, 16
        %v785 = vor.u32 %v782, %v783
        %v786 = vsel %vm763, %v774, %v785
        %v788 = vshrl.u32 %v750, 16
        %v790 = vrot.slane %v788, 7
        %v791 = vshll.u32 %v750, 16
        %v793 = vor.u32 %v790, %v791
        %v794 = vsel %vm763, %v782, %v793
        %v796 = vshrl.u32 %v751, 16
        %v798 = vrot.slane %v796, 7
        %v799 = vshll.u32 %v751, 16
        %v801 = vor.u32 %v798, %v799
        %v802 = vsel %vm763, %v790, %v801
        %v804 = vshrl.u32 %v752, 16
        %v806 = vrot.slane %v804, 7
        %v807 = vshll.u32 %v752, 16
        %v809 = vor.u32 %v806, %v807
        %v810 = vsel %vm763, %v798, %v809
        %v812 = vshrl.u32 %v753, 16
        %v814 = vrot.slane %v812, 7
        %v815 = vshll.u32 %v753, 16
        %v817 = vor.u32 %v814, %v815
        %v818 = vsel %vm763, %v806, %v817
        %v820 = vshrl.u32 %v754, 16
        %v822 = vrot.slane %v820, 7
        %v823 = vshll.u32 %v754, 16
        %v825 = vor.u32 %v822, %v823
        %v826 = vsel %vm763, %v814, %v825
        %v828 = vshrl.u32 %v755, 16
        %v830 = vrot.slane %v828, 7
        %v831 = vshll.u32 %v755, 16
        %v833 = vor.u32 %v830, %v831
        %v834 = vsel %vm763, %v822, %v833
        %v836 = vshrl.u32 %v756, 16
        %v838 = vrot.slane %v836, 7
        %v839 = vshll.u32 %v756, 16
        %v841 = vor.u32 %v838, %v839
        %v842 = vsel %vm763, %v830, %v841
        %v844 = vshrl.u32 %v757, 16
        %v846 = vrot.slane %v844, 7
        %v847 = vshll.u32 %v757, 16
        %v849 = vor.u32 %v846, %v847
        %v850 = vsel %vm763, %v838, %v849
        %v852 = vshrl.u32 %v758, 16
        %v854 = vrot.slane %v852, 7
        %v855 = vshll.u32 %v758, 16
        %v857 = vor.u32 %v854, %v855
        %v858 = vsel %vm763, %v846, %v857
        %v860 = vshrl.u32 %v759, 16
        %v862 = vrot.slane %v860, 7
        %v863 = vshll.u32 %v759, 16
        %v865 = vor.u32 %v862, %v863
        %v866 = vsel %vm763, %v854, %v865
        %v868 = vshrl.u32 %v760, 16
        %v870 = vrot.slane %v868, 7
        %v871 = vshll.u32 %v760, 16
        %v873 = vor.u32 %v870, %v871
        %v874 = vsel %vm763, %v862, %v873
        %v876 = vshrl.u32 %v761, 16
        %v878 = vrot.slane %v876, 7
        %v879 = vshll.u32 %v761, 16
        %v881 = vor.u32 %v878, %v879
        %v882 = vsel %vm763, %v870, %v881
        %v884 = vshrl.u32 %v762, 16
        %v886 = vrot.slane %v884, 7
        %v887 = vshll.u32 %v762, 16
        %v889 = vor.u32 %v886, %v887
        %v890 = vsel %vm763, %v878, %v889
        %vm907 = vcmask 1040384
        %vm908 = vmand %vm907, %vm763
        %v909 = vsel %vm908, 0, %v770
        %vm910 = vsmask.f32 7424
        %v911 = vrot.slane %v768, 1
        %v912 = vor.u32 %v765, %v911
        %v913 = vrot.slane %v775, 1
        %v914 = vsel %vm910, %v912, %v913
        %v915 = vor.u32 %v772, %v913
        %v916 = vrot.slane %v783, 1
        %v917 = vsel %vm910, %v915, %v916
        %v918 = vor.u32 %v780, %v916
        %v919 = vrot.slane %v791, 1
        %v920 = vsel %vm910, %v918, %v919
        %v921 = vor.u32 %v788, %v919
        %v922 = vrot.slane %v799, 1
        %v923 = vsel %vm910, %v921, %v922
        %v924 = vor.u32 %v796, %v922
        %v925 = vrot.slane %v807, 1
        %v926 = vsel %vm910, %v924, %v925
        %v927 = vor.u32 %v804, %v925
        %v928 = vrot.slane %v815, 1
        %v929 = vsel %vm910, %v927, %v928
        %v930 = vor.u32 %v812, %v928
        %v931 = vrot.slane %v823, 1
        %v932 = vsel %vm910, %v930, %v931
        %v933 = vor.u32 %v820, %v931
        %v934 = vrot.slane %v831, 1
        %v935 = vsel %vm910, %v933, %v934
        %v936 = vor.u32 %v828, %v934
        %v937 = vrot.slane %v839, 1
        %v938 = vsel %vm910, %v936, %v937
        %v939 = vor.u32 %v836, %v937
        %v940 = vrot.slane %v847, 1
        %v941 = vsel %vm910, %v939, %v940
        %v942 = vor.u32 %v844, %v940
        %v943 = vrot.slane %v855, 1
        %v944 = vsel %vm910, %v942, %v943
        %v945 = vor.u32 %v852, %v943
        %v946 = vrot.slane %v863, 1
        %v947 = vsel %vm910, %v945, %v946
        %v948 = vor.u32 %v860, %v946
        %v949 = vrot.slane %v871, 1
        %v950 = vsel %vm910, %v948, %v949
        %v951 = vor.u32 %v868, %v949
        %v952 = vrot.slane %v879, 1
        %v953 = vsel %vm910, %v951, %v952
        %v954 = vor.u32 %v876, %v952
        %v955 = vrot.slane %v887, 1
        %v956 = vsel %vm910, %v954, %v955
        %v957 = vor.u32 %v884, %v955
        %vm974 = vcmask 1047552
        %vm975 = vmand %vm974, %vm910
        %v976 = vsel %vm975, %v957, 0
        %vm977 = vcmp.ne.s32.totalorder %v651, 0
        %vm978 = vcmp.ne.s32.totalorder %v652, 0
        %vm979 = vcmp.ne.s32.totalorder %v653, 0
        %vm980 = vcmp.ne.s32.totalorder %v654, 0
        %vm981 = vcmp.ne.s32.totalorder %v655, 0
        %vm982 = vcmp.ne.s32.totalorder %v656, 0
        %vm983 = vcmp.ne.s32.totalorder %v657, 0
        %vm984 = vcmp.ne.s32.totalorder %v658, 0
        %vm985 = vcmp.ne.s32.totalorder %v659, 0
        %vm986 = vcmp.ne.s32.totalorder %v660, 0
        %vm987 = vcmp.ne.s32.totalorder %v661, 0
        %vm988 = vcmp.ne.s32.totalorder %v662, 0
        %vm989 = vcmp.ne.s32.totalorder %v663, 0
        %vm990 = vcmp.ne.s32.totalorder %v664, 0
        %vm991 = vcmp.ne.s32.totalorder %v665, 0
        %vm992 = vcmp.ne.s32.totalorder %v666, 0
        %vm993 = vcmp.ne.s32.totalorder %v667, 0
        %vm994 = vcmp.ne.s32.totalorder %v668, 0
        %vm995 = vcmp.ne.s32.totalorder %v669, 0
        %vm996 = vcmp.ne.s32.totalorder %v670, 0
        %vm997 = vcmp.ne.s32.totalorder %v671, 0
        %vm998 = vcmp.ne.s32.totalorder %v672, 0
        %vm999 = vcmp.ne.s32.totalorder %v673, 0
        %vm1000 = vcmp.ne.s32.totalorder %v674, 0
        %vm1001 = vcmp.ne.s32.totalorder %v675, 0
        %vm1002 = vcmp.ne.s32.totalorder %v676, 0
        %vm1003 = vcmp.ne.s32.totalorder %v677, 0
        %vm1004 = vcmp.ne.s32.totalorder %v678, 0
        %vm1005 = vcmp.ne.s32.totalorder %v679, 0
        %vm1006 = vcmp.ne.s32.totalorder %v680, 0
        %vm1007 = vcmp.ne.s32.totalorder %v681, 0
        %vm1008 = vcmp.ne.s32.totalorder %v682, 0
        %v1009 = vsel %vm977, 1, 0
        %v1010 = vsel %vm978, 1, 0
        %v1011 = vsel %vm979, 1, 0
        %v1012 = vsel %vm980, 1, 0
        %v1013 = vsel %vm981, 1, 0
        %v1014 = vsel %vm982, 1, 0
        %v1015 = vsel %vm983, 1, 0
        %v1016 = vsel %vm984, 1, 0
        %v1017 = vsel %vm985, 1, 0
        %v1018 = vsel %vm986, 1, 0
        %v1019 = vsel %vm987, 1, 0
        %v1020 = vsel %vm988, 1, 0
        %v1021 = vsel %vm989, 1, 0
        %v1022 = vsel %vm990, 1, 0
        %v1023 = vsel %vm991, 1, 0
        %v1024 = vsel %vm992, 1, 0
        %v1025 = vsel %vm993, 1, 0
        %v1026 = vsel %vm994, 1, 0
        %v1027 = vsel %vm995, 1, 0
        %v1028 = vsel %vm996, 1, 0
        %v1029 = vsel %vm997, 1, 0
        %v1030 = vsel %vm998, 1, 0
        %v1031 = vsel %vm999, 1, 0
        %v1032 = vsel %vm1000, 1, 0
        %v1033 = vsel %vm1001, 1, 0
        %v1034 = vsel %vm1002, 1, 0
        %v1035 = vsel %vm1003, 1, 0
        %v1036 = vsel %vm1004, 1, 0
        %v1037 = vsel %vm1005, 1, 0
        %v1038 = vsel %vm1006, 1, 0
        %v1039 = vsel %vm1007, 1, 0
        %v1040 = vsel %vm1008, 1, 0
        %vm1041 = vcmp.eq.s32.totalorder %v1009, 1
        %vm1042 = vcmp.eq.s32.totalorder %v1010, 1
        %vm1043 = vcmp.eq.s32.totalorder %v1011, 1
        %vm1044 = vcmp.eq.s32.totalorder %v1012, 1
        %vm1045 = vcmp.eq.s32.totalorder %v1013, 1
        %vm1046 = vcmp.eq.s32.totalorder %v1014, 1
        %vm1047 = vcmp.eq.s32.totalorder %v1015, 1
        %vm1048 = vcmp.eq.s32.totalorder %v1016, 1
        %vm1049 = vcmp.eq.s32.totalorder %v1017, 1
        %vm1050 = vcmp.eq.s32.totalorder %v1018, 1
        %vm1051 = vcmp.eq.s32.totalorder %v1019, 1
        %vm1052 = vcmp.eq.s32.totalorder %v1020, 1
        %vm1053 = vcmp.eq.s32.totalorder %v1021, 1
        %vm1054 = vcmp.eq.s32.totalorder %v1022, 1
        %vm1055 = vcmp.eq.s32.totalorder %v1023, 1
        %vm1056 = vcmp.eq.s32.totalorder %v1024, 1
        %vm1057 = vcmp.eq.s32.totalorder %v1025, 1
        %vm1058 = vcmp.eq.s32.totalorder %v1026, 1
        %vm1059 = vcmp.eq.s32.totalorder %v1027, 1
        %vm1060 = vcmp.eq.s32.totalorder %v1028, 1
        %vm1061 = vcmp.eq.s32.totalorder %v1029, 1
        %vm1062 = vcmp.eq.s32.totalorder %v1030, 1
        %vm1063 = vcmp.eq.s32.totalorder %v1031, 1
        %vm1064 = vcmp.eq.s32.totalorder %v1032, 1
        %vm1065 = vcmp.eq.s32.totalorder %v1033, 1
        %vm1066 = vcmp.eq.s32.totalorder %v1034, 1
        %vm1067 = vcmp.eq.s32.totalorder %v1035, 1
        %vm1068 = vcmp.eq.s32.totalorder %v1036, 1
        %vm1069 = vcmp.eq.s32.totalorder %v1037, 1
        %vm1070 = vcmp.eq.s32.totalorder %v1038, 1
        %vm1071 = vcmp.eq.s32.totalorder %v1039, 1
        %vm1072 = vcmp.eq.s32.totalorder %v1040, 1
        %vm1073 = vmpackc.low %vm1041, %vm1041
        %vm1074 = vmpackc.low %vm1042, %vm1042
        %vm1075 = vmpackc.low %vm1043, %vm1043
        %vm1076 = vmpackc.low %vm1044, %vm1044
        %vm1077 = vmpackc.low %vm1045, %vm1045
        %vm1078 = vmpackc.low %vm1046, %vm1046
        %vm1079 = vmpackc.low %vm1047, %vm1047
        %vm1080 = vmpackc.low %vm1048, %vm1048
        %vm1081 = vmpackc.low %vm1049, %vm1049
        %vm1082 = vmpackc.low %vm1050, %vm1050
        %vm1083 = vmpackc.low %vm1051, %vm1051
        %vm1084 = vmpackc.low %vm1052, %vm1052
        %vm1085 = vmpackc.low %vm1053, %vm1053
        %vm1086 = vmpackc.low %vm1054, %vm1054
        %vm1087 = vmpackc.low %vm1055, %vm1055
        %vm1088 = vmpackc.low %vm1056, %vm1056
        %vm1089 = vmpackc.low %vm1057, %vm1057
        %vm1090 = vmpackc.low %vm1058, %vm1058
        %vm1091 = vmpackc.low %vm1059, %vm1059
        %vm1092 = vmpackc.low %vm1060, %vm1060
        %vm1093 = vmpackc.low %vm1061, %vm1061
        %vm1094 = vmpackc.low %vm1062, %vm1062
        %vm1095 = vmpackc.low %vm1063, %vm1063
        %vm1096 = vmpackc.low %vm1064, %vm1064
        %vm1097 = vmpackc.low %vm1065, %vm1065
        %vm1098 = vmpackc.low %vm1066, %vm1066
        %vm1099 = vmpackc.low %vm1067, %vm1067
        %vm1100 = vmpackc.low %vm1068, %vm1068
        %vm1101 = vmpackc.low %vm1069, %vm1069
        %vm1102 = vmpackc.low %vm1070, %vm1070
        %vm1103 = vmpackc.low %vm1071, %vm1071
        %vm1104 = vmpackc.low %vm1072, %vm1072
        %v1105 = vsel %vm1073, 65537, 0
        %v1106 = vsel %vm1074, 65537, 0
        %v1107 = vsel %vm1075, 65537, 0
        %v1108 = vsel %vm1076, 65537, 0
        %v1109 = vsel %vm1077, 65537, 0
        %v1110 = vsel %vm1078, 65537, 0
        %v1111 = vsel %vm1079, 65537, 0
        %v1112 = vsel %vm1080, 65537, 0
        %v1113 = vsel %vm1081, 65537, 0
        %v1114 = vsel %vm1082, 65537, 0
        %v1115 = vsel %vm1083, 65537, 0
        %v1116 = vsel %vm1084, 65537, 0
        %v1117 = vsel %vm1085, 65537, 0
        %v1118 = vsel %vm1086, 65537, 0
        %v1119 = vsel %vm1087, 65537, 0
        %v1120 = vsel %vm1088, 65537, 0
        %v1121 = vsel %vm1089, 65537, 0
        %v1122 = vsel %vm1090, 65537, 0
        %v1123 = vsel %vm1091, 65537, 0
        %v1124 = vsel %vm1092, 65537, 0
        %v1125 = vsel %vm1093, 65537, 0
        %v1126 = vsel %vm1094, 65537, 0
        %v1127 = vsel %vm1095, 65537, 0
        %v1128 = vsel %vm1096, 65537, 0
        %v1129 = vsel %vm1097, 65537, 0
        %v1130 = vsel %vm1098, 65537, 0
        %v1131 = vsel %vm1099, 65537, 0
        %v1132 = vsel %vm1100, 65537, 0
        %v1133 = vsel %vm1101, 65537, 0
        %v1134 = vsel %vm1102, 65537, 0
        %v1135 = vsel %vm1103, 65537, 0
        %v1136 = vsel %vm1104, 65537, 0
        %v1137 = vunpack.c.l.b16 %v1105
        %v1138 = vunpack.c.l.b16 %v1106
        %v1139 = vunpack.c.l.b16 %v1107
        %v1140 = vunpack.c.l.b16 %v1108
        %v1141 = vunpack.c.l.b16 %v1109
        %v1142 = vunpack.c.l.b16 %v1110
        %v1143 = vunpack.c.l.b16 %v1111
        %v1144 = vunpack.c.l.b16 %v1112
        %v1145 = vunpack.c.l.b16 %v1113
        %v1146 = vunpack.c.l.b16 %v1114
        %v1147 = vunpack.c.l.b16 %v1115
        %v1148 = vunpack.c.l.b16 %v1116
        %v1149 = vunpack.c.l.b16 %v1117
        %v1150 = vunpack.c.l.b16 %v1118
        %v1151 = vunpack.c.l.b16 %v1119
        %v1152 = vunpack.c.l.b16 %v1120
        %v1153 = vunpack.c.l.b16 %v1121
        %v1154 = vunpack.c.l.b16 %v1122
        %v1155 = vunpack.c.l.b16 %v1123
        %v1156 = vunpack.c.l.b16 %v1124
        %v1157 = vunpack.c.l.b16 %v1125
        %v1158 = vunpack.c.l.b16 %v1126
        %v1159 = vunpack.c.l.b16 %v1127
        %v1160 = vunpack.c.l.b16 %v1128
        %v1161 = vunpack.c.l.b16 %v1129
        %v1162 = vunpack.c.l.b16 %v1130
        %v1163 = vunpack.c.l.b16 %v1131
        %v1164 = vunpack.c.l.b16 %v1132
        %v1165 = vunpack.c.l.b16 %v1133
        %v1166 = vunpack.c.l.b16 %v1134
        %v1167 = vunpack.c.l.b16 %v1135
        %v1168 = vunpack.c.l.b16 %v1136
        %v1169 = vpack.c.b16 %v1138, %v1137
        %v1170 = vpack.c.b16 %v1140, %v1139
        %v1171 = vpack.c.b16 %v1142, %v1141
        %v1172 = vpack.c.b16 %v1144, %v1143
        %v1173 = vpack.c.b16 %v1146, %v1145
        %v1174 = vpack.c.b16 %v1148, %v1147
        %v1175 = vpack.c.b16 %v1150, %v1149
        %v1176 = vpack.c.b16 %v1152, %v1151
        %v1177 = vpack.c.b16 %v1154, %v1153
        %v1178 = vpack.c.b16 %v1156, %v1155
        %v1179 = vpack.c.b16 %v1158, %v1157
        %v1180 = vpack.c.b16 %v1160, %v1159
        %v1181 = vpack.c.b16 %v1162, %v1161
        %v1182 = vpack.c.b16 %v1164, %v1163
        %v1183 = vpack.c.b16 %v1166, %v1165
        %v1184 = vpack.c.b16 %v1168, %v1167
        %vm1185 = vcmp.ne.s16.totalorder %v1169, 0
        %vm1186 = vcmp.ne.s16.totalorder %v1170, 0
        %vm1187 = vcmp.ne.s16.totalorder %v1171, 0
        %vm1188 = vcmp.ne.s16.totalorder %v1172, 0
        %vm1189 = vcmp.ne.s16.totalorder %v1173, 0
        %vm1190 = vcmp.ne.s16.totalorder %v1174, 0
        %vm1191 = vcmp.ne.s16.totalorder %v1175, 0
        %vm1192 = vcmp.ne.s16.totalorder %v1176, 0
        %vm1193 = vcmp.ne.s16.totalorder %v1177, 0
        %vm1194 = vcmp.ne.s16.totalorder %v1178, 0
        %vm1195 = vcmp.ne.s16.totalorder %v1179, 0
        %vm1196 = vcmp.ne.s16.totalorder %v1180, 0
        %vm1197 = vcmp.ne.s16.totalorder %v1181, 0
        %vm1198 = vcmp.ne.s16.totalorder %v1182, 0
        %vm1199 = vcmp.ne.s16.totalorder %v1183, 0
        %vm1200 = vcmp.ne.s16.totalorder %v1184, 0
        %v1201 = vsel %vm1185, %v909, 0
        %v1202 = vsel %vm1186, %v778, 0
        %v1203 = vsel %vm1187, %v786, 0
        %v1204 = vsel %vm1188, %v794, 0
        %v1205 = vsel %vm1189, %v802, 0
        %v1206 = vsel %vm1190, %v810, 0
        %v1207 = vsel %vm1191, %v818, 0
        %v1208 = vsel %vm1192, %v826, 0
        %v1209 = vsel %vm1193, %v834, 0
        %v1210 = vsel %vm1194, %v842, 0
        %v1211 = vsel %vm1195, %v850, 0
        %v1212 = vsel %vm1196, %v858, 0
        %v1213 = vsel %vm1197, %v866, 0
        %v1214 = vsel %vm1198, %v874, 0
        %v1215 = vsel %vm1199, %v882, 0
        %v1216 = vsel %vm1200, %v890, 0
        %vm1217 = vcmp.ne.s32.totalorder %v651, 15
        %vm1218 = vcmp.ne.s32.totalorder %v652, 15
        %vm1219 = vcmp.ne.s32.totalorder %v653, 15
        %vm1220 = vcmp.ne.s32.totalorder %v654, 15
        %vm1221 = vcmp.ne.s32.totalorder %v655, 15
        %vm1222 = vcmp.ne.s32.totalorder %v656, 15
        %vm1223 = vcmp.ne.s32.totalorder %v657, 15
        %vm1224 = vcmp.ne.s32.totalorder %v658, 15
        %vm1225 = vcmp.ne.s32.totalorder %v659, 15
        %vm1226 = vcmp.ne.s32.totalorder %v660, 15
        %vm1227 = vcmp.ne.s32.totalorder %v661, 15
        %vm1228 = vcmp.ne.s32.totalorder %v662, 15
        %vm1229 = vcmp.ne.s32.totalorder %v663, 15
        %vm1230 = vcmp.ne.s32.totalorder %v664, 15
        %vm1231 = vcmp.ne.s32.totalorder %v665, 15
        %vm1232 = vcmp.ne.s32.totalorder %v666, 15
        %vm1233 = vcmp.ne.s32.totalorder %v667, 15
        %vm1234 = vcmp.ne.s32.totalorder %v668, 15
        %vm1235 = vcmp.ne.s32.totalorder %v669, 15
        %vm1236 = vcmp.ne.s32.totalorder %v670, 15
        %vm1237 = vcmp.ne.s32.totalorder %v671, 15
        %vm1238 = vcmp.ne.s32.totalorder %v672, 15
        %vm1239 = vcmp.ne.s32.totalorder %v673, 15
        %vm1240 = vcmp.ne.s32.totalorder %v674, 15
        %vm1241 = vcmp.ne.s32.totalorder %v675, 15
        %vm1242 = vcmp.ne.s32.totalorder %v676, 15
        %vm1243 = vcmp.ne.s32.totalorder %v677, 15
        %vm1244 = vcmp.ne.s32.totalorder %v678, 15
        %vm1245 = vcmp.ne.s32.totalorder %v679, 15
        %vm1246 = vcmp.ne.s32.totalorder %v680, 15
        %vm1247 = vcmp.ne.s32.totalorder %v681, 15
        %vm1248 = vcmp.ne.s32.totalorder %v682, 15
        %v1249 = vsel %vm1217, 1, 0
        %v1250 = vsel %vm1218, 1, 0
        %v1251 = vsel %vm1219, 1, 0
        %v1252 = vsel %vm1220, 1, 0
        %v1253 = vsel %vm1221, 1, 0
        %v1254 = vsel %vm1222, 1, 0
        %v1255 = vsel %vm1223, 1, 0
        %v1256 = vsel %vm1224, 1, 0
        %v1257 = vsel %vm1225, 1, 0
        %v1258 = vsel %vm1226, 1, 0
        %v1259 = vsel %vm1227, 1, 0
        %v1260 = vsel %vm1228, 1, 0
        %v1261 = vsel %vm1229, 1, 0
        %v1262 = vsel %vm1230, 1, 0
        %v1263 = vsel %vm1231, 1, 0
        %v1264 = vsel %vm1232, 1, 0
        %v1265 = vsel %vm1233, 1, 0
        %v1266 = vsel %vm1234, 1, 0
        %v1267 = vsel %vm1235, 1, 0
        %v1268 = vsel %vm1236, 1, 0
        %v1269 = vsel %vm1237, 1, 0
        %v1270 = vsel %vm1238, 1, 0
        %v1271 = vsel %vm1239, 1, 0
        %v1272 = vsel %vm1240, 1, 0
        %v1273 = vsel %vm1241, 1, 0
        %v1274 = vsel %vm1242, 1, 0
        %v1275 = vsel %vm1243, 1, 0
        %v1276 = vsel %vm1244, 1, 0
        %v1277 = vsel %vm1245, 1, 0
        %v1278 = vsel %vm1246, 1, 0
        %v1279 = vsel %vm1247, 1, 0
        %v1280 = vsel %vm1248, 1, 0
        %vm1281 = vcmp.eq.s32.totalorder %v1249, 1
        %vm1282 = vcmp.eq.s32.totalorder %v1250, 1
        %vm1283 = vcmp.eq.s32.totalorder %v1251, 1
        %vm1284 = vcmp.eq.s32.totalorder %v1252, 1
        %vm1285 = vcmp.eq.s32.totalorder %v1253, 1
        %vm1286 = vcmp.eq.s32.totalorder %v1254, 1
        %vm1287 = vcmp.eq.s32.totalorder %v1255, 1
        %vm1288 = vcmp.eq.s32.totalorder %v1256, 1
        %vm1289 = vcmp.eq.s32.totalorder %v1257, 1
        %vm1290 = vcmp.eq.s32.totalorder %v1258, 1
        %vm1291 = vcmp.eq.s32.totalorder %v1259, 1
        %vm1292 = vcmp.eq.s32.totalorder %v1260, 1
        %vm1293 = vcmp.eq.s32.totalorder %v1261, 1
        %vm1294 = vcmp.eq.s32.totalorder %v1262, 1
        %vm1295 = vcmp.eq.s32.totalorder %v1263, 1
        %vm1296 = vcmp.eq.s32.totalorder %v1264, 1
        %vm1297 = vcmp.eq.s32.totalorder %v1265, 1
        %vm1298 = vcmp.eq.s32.totalorder %v1266, 1
        %vm1299 = vcmp.eq.s32.totalorder %v1267, 1
        %vm1300 = vcmp.eq.s32.totalorder %v1268, 1
        %vm1301 = vcmp.eq.s32.totalorder %v1269, 1
        %vm1302 = vcmp.eq.s32.totalorder %v1270, 1
        %vm1303 = vcmp.eq.s32.totalorder %v1271, 1
        %vm1304 = vcmp.eq.s32.totalorder %v1272, 1
        %vm1305 = vcmp.eq.s32.totalorder %v1273, 1
        %vm1306 = vcmp.eq.s32.totalorder %v1274, 1
        %vm1307 = vcmp.eq.s32.totalorder %v1275, 1
        %vm1308 = vcmp.eq.s32.totalorder %v1276, 1
        %vm1309 = vcmp.eq.s32.totalorder %v1277, 1
        %vm1310 = vcmp.eq.s32.totalorder %v1278, 1
        %vm1311 = vcmp.eq.s32.totalorder %v1279, 1
        %vm1312 = vcmp.eq.s32.totalorder %v1280, 1
        %vm1313 = vmpackc.low %vm1281, %vm1281
        %vm1314 = vmpackc.low %vm1282, %vm1282
        %vm1315 = vmpackc.low %vm1283, %vm1283
        %vm1316 = vmpackc.low %vm1284, %vm1284
        %vm1317 = vmpackc.low %vm1285, %vm1285
        %vm1318 = vmpackc.low %vm1286, %vm1286
        %vm1319 = vmpackc.low %vm1287, %vm1287
        %vm1320 = vmpackc.low %vm1288, %vm1288
        %vm1321 = vmpackc.low %vm1289, %vm1289
        %vm1322 = vmpackc.low %vm1290, %vm1290
        %vm1323 = vmpackc.low %vm1291, %vm1291
        %vm1324 = vmpackc.low %vm1292, %vm1292
        %vm1325 = vmpackc.low %vm1293, %vm1293
        %vm1326 = vmpackc.low %vm1294, %vm1294
        %vm1327 = vmpackc.low %vm1295, %vm1295
        %vm1328 = vmpackc.low %vm1296, %vm1296
        %vm1329 = vmpackc.low %vm1297, %vm1297
        %vm1330 = vmpackc.low %vm1298, %vm1298
        %vm1331 = vmpackc.low %vm1299, %vm1299
        %vm1332 = vmpackc.low %vm1300, %vm1300
        %vm1333 = vmpackc.low %vm1301, %vm1301
        %vm1334 = vmpackc.low %vm1302, %vm1302
        %vm1335 = vmpackc.low %vm1303, %vm1303
        %vm1336 = vmpackc.low %vm1304, %vm1304
        %vm1337 = vmpackc.low %vm1305, %vm1305
        %vm1338 = vmpackc.low %vm1306, %vm1306
        %vm1339 = vmpackc.low %vm1307, %vm1307
        %vm1340 = vmpackc.low %vm1308, %vm1308
        %vm1341 = vmpackc.low %vm1309, %vm1309
        %vm1342 = vmpackc.low %vm1310, %vm1310
        %vm1343 = vmpackc.low %vm1311, %vm1311
        %vm1344 = vmpackc.low %vm1312, %vm1312
        %v1345 = vsel %vm1313, 65537, 0
        %v1346 = vsel %vm1314, 65537, 0
        %v1347 = vsel %vm1315, 65537, 0
        %v1348 = vsel %vm1316, 65537, 0
        %v1349 = vsel %vm1317, 65537, 0
        %v1350 = vsel %vm1318, 65537, 0
        %v1351 = vsel %vm1319, 65537, 0
        %v1352 = vsel %vm1320, 65537, 0
        %v1353 = vsel %vm1321, 65537, 0
        %v1354 = vsel %vm1322, 65537, 0
        %v1355 = vsel %vm1323, 65537, 0
        %v1356 = vsel %vm1324, 65537, 0
        %v1357 = vsel %vm1325, 65537, 0
        %v1358 = vsel %vm1326, 65537, 0
        %v1359 = vsel %vm1327, 65537, 0
        %v1360 = vsel %vm1328, 65537, 0
        %v1361 = vsel %vm1329, 65537, 0
        %v1362 = vsel %vm1330, 65537, 0
        %v1363 = vsel %vm1331, 65537, 0
        %v1364 = vsel %vm1332, 65537, 0
        %v1365 = vsel %vm1333, 65537, 0
        %v1366 = vsel %vm1334, 65537, 0
        %v1367 = vsel %vm1335, 65537, 0
        %v1368 = vsel %vm1336, 65537, 0
        %v1369 = vsel %vm1337, 65537, 0
        %v1370 = vsel %vm1338, 65537, 0
        %v1371 = vsel %vm1339, 65537, 0
        %v1372 = vsel %vm1340, 65537, 0
        %v1373 = vsel %vm1341, 65537, 0
        %v1374 = vsel %vm1342, 65537, 0
        %v1375 = vsel %vm1343, 65537, 0
        %v1376 = vsel %vm1344, 65537, 0
        %v1377 = vunpack.c.l.b16 %v1345
        %v1378 = vunpack.c.l.b16 %v1346
        %v1379 = vunpack.c.l.b16 %v1347
        %v1380 = vunpack.c.l.b16 %v1348
        %v1381 = vunpack.c.l.b16 %v1349
        %v1382 = vunpack.c.l.b16 %v1350
        %v1383 = vunpack.c.l.b16 %v1351
        %v1384 = vunpack.c.l.b16 %v1352
        %v1385 = vunpack.c.l.b16 %v1353
        %v1386 = vunpack.c.l.b16 %v1354
        %v1387 = vunpack.c.l.b16 %v1355
        %v1388 = vunpack.c.l.b16 %v1356
        %v1389 = vunpack.c.l.b16 %v1357
        %v1390 = vunpack.c.l.b16 %v1358
        %v1391 = vunpack.c.l.b16 %v1359
        %v1392 = vunpack.c.l.b16 %v1360
        %v1393 = vunpack.c.l.b16 %v1361
        %v1394 = vunpack.c.l.b16 %v1362
        %v1395 = vunpack.c.l.b16 %v1363
        %v1396 = vunpack.c.l.b16 %v1364
        %v1397 = vunpack.c.l.b16 %v1365
        %v1398 = vunpack.c.l.b16 %v1366
        %v1399 = vunpack.c.l.b16 %v1367
        %v1400 = vunpack.c.l.b16 %v1368
        %v1401 = vunpack.c.l.b16 %v1369
        %v1402 = vunpack.c.l.b16 %v1370
        %v1403 = vunpack.c.l.b16 %v1371
        %v1404 = vunpack.c.l.b16 %v1372
        %v1405 = vunpack.c.l.b16 %v1373
        %v1406 = vunpack.c.l.b16 %v1374
        %v1407 = vunpack.c.l.b16 %v1375
        %v1408 = vunpack.c.l.b16 %v1376
        %v1409 = vpack.c.b16 %v1378, %v1377
        %v1410 = vpack.c.b16 %v1380, %v1379
        %v1411 = vpack.c.b16 %v1382, %v1381
        %v1412 = vpack.c.b16 %v1384, %v1383
        %v1413 = vpack.c.b16 %v1386, %v1385
        %v1414 = vpack.c.b16 %v1388, %v1387
        %v1415 = vpack.c.b16 %v1390, %v1389
        %v1416 = vpack.c.b16 %v1392, %v1391
        %v1417 = vpack.c.b16 %v1394, %v1393
        %v1418 = vpack.c.b16 %v1396, %v1395
        %v1419 = vpack.c.b16 %v1398, %v1397
        %v1420 = vpack.c.b16 %v1400, %v1399
        %v1421 = vpack.c.b16 %v1402, %v1401
        %v1422 = vpack.c.b16 %v1404, %v1403
        %v1423 = vpack.c.b16 %v1406, %v1405
        %v1424 = vpack.c.b16 %v1408, %v1407
        %vm1425 = vcmp.ne.s16.totalorder %v1409, 0
        %vm1426 = vcmp.ne.s16.totalorder %v1410, 0
        %vm1427 = vcmp.ne.s16.totalorder %v1411, 0
        %vm1428 = vcmp.ne.s16.totalorder %v1412, 0
        %vm1429 = vcmp.ne.s16.totalorder %v1413, 0
        %vm1430 = vcmp.ne.s16.totalorder %v1414, 0
        %vm1431 = vcmp.ne.s16.totalorder %v1415, 0
        %vm1432 = vcmp.ne.s16.totalorder %v1416, 0
        %vm1433 = vcmp.ne.s16.totalorder %v1417, 0
        %vm1434 = vcmp.ne.s16.totalorder %v1418, 0
        %vm1435 = vcmp.ne.s16.totalorder %v1419, 0
        %vm1436 = vcmp.ne.s16.totalorder %v1420, 0
        %vm1437 = vcmp.ne.s16.totalorder %v1421, 0
        %vm1438 = vcmp.ne.s16.totalorder %v1422, 0
        %vm1439 = vcmp.ne.s16.totalorder %v1423, 0
        %vm1440 = vcmp.ne.s16.totalorder %v1424, 0
        %v1441 = vsel %vm1425, %v914, 0
        %v1442 = vsel %vm1426, %v917, 0
        %v1443 = vsel %vm1427, %v920, 0
        %v1444 = vsel %vm1428, %v923, 0
        %v1445 = vsel %vm1429, %v926, 0
        %v1446 = vsel %vm1430, %v929, 0
        %v1447 = vsel %vm1431, %v932, 0
        %v1448 = vsel %vm1432, %v935, 0
        %v1449 = vsel %vm1433, %v938, 0
        %v1450 = vsel %vm1434, %v941, 0
        %v1451 = vsel %vm1435, %v944, 0
        %v1452 = vsel %vm1436, %v947, 0
        %v1453 = vsel %vm1437, %v950, 0
        %v1454 = vsel %vm1438, %v953, 0
        %v1455 = vsel %vm1439, %v956, 0
        %v1456 = vsel %vm1440, %v976, 0
        %vm1457 = vcmask 97280
        %1458 = vst.msk [vmem:[#allocation2] sm:$0xff] %vm1457, 0
        %1459 = vst.msk [vmem:[#allocation2 + $0x88] sm:$0xff] %vm1457, 0
        %1460 = vrot.lane.b32.xlu0 %v747, 4
        %v1461 = vpop.permute.xlu0 %1460
        %1462 = vrot.lane.b32.xlu0 %v748, 4
        %v1463 = vpop.permute.xlu0 %1462
        %1464 = vrot.lane.b32.xlu0 %v749, 4
        %v1465 = vpop.permute.xlu0 %1464
        %1466 = vrot.lane.b32.xlu0 %v750, 4
        %v1467 = vpop.permute.xlu0 %1466
        %1468 = vrot.lane.b32.xlu0 %v751, 4
        %v1469 = vpop.permute.xlu0 %1468
        %1470 = vrot.lane.b32.xlu0 %v752, 4
        %v1471 = vpop.permute.xlu0 %1470
        %1472 = vrot.lane.b32.xlu0 %v753, 4
        %v1473 = vpop.permute.xlu0 %1472
        %1474 = vrot.lane.b32.xlu0 %v754, 4
        %v1475 = vpop.permute.xlu0 %1474
        %1476 = vrot.lane.b32.xlu0 %v755, 4
        %v1477 = vpop.permute.xlu0 %1476
        %1478 = vrot.lane.b32.xlu0 %v756, 4
        %v1479 = vpop.permute.xlu0 %1478
        %1480 = vrot.lane.b32.xlu0 %v757, 4
        %v1481 = vpop.permute.xlu0 %1480
        %1482 = vrot.lane.b32.xlu0 %v758, 4
        %v1483 = vpop.permute.xlu0 %1482
        %1484 = vrot.lane.b32.xlu0 %v759, 4
        %v1485 = vpop.permute.xlu0 %1484
        %1486 = vrot.lane.b32.xlu0 %v760, 4
        %v1487 = vpop.permute.xlu0 %1486
        %1488 = vrot.lane.b32.xlu0 %v761, 4
        %v1489 = vpop.permute.xlu0 %1488
        %1490 = vrot.lane.b32.xlu0 %v762, 4
        %v1491 = vpop.permute.xlu0 %1490
        %1508 = vrot.lane.b32.xlu0 %v1441, 8
        %v1509 = vpop.permute.xlu0 %1508
        %1510 = vrot.lane.b32.xlu0 %v1442, 8
        %v1511 = vpop.permute.xlu0 %1510
        %1512 = vrot.lane.b32.xlu0 %v1443, 8
        %v1513 = vpop.permute.xlu0 %1512
        %1514 = vrot.lane.b32.xlu0 %v1444, 8
        %v1515 = vpop.permute.xlu0 %1514
        %1516 = vrot.lane.b32.xlu0 %v1445, 8
        %v1517 = vpop.permute.xlu0 %1516
        %1518 = vrot.lane.b32.xlu0 %v1446, 8
        %v1519 = vpop.permute.xlu0 %1518
        %1520 = vrot.lane.b32.xlu0 %v1447, 8
        %v1521 = vpop.permute.xlu0 %1520
        %1522 = vrot.lane.b32.xlu0 %v1448, 8
        %v1523 = vpop.permute.xlu0 %1522
        %1524 = vrot.lane.b32.xlu0 %v1449, 8
        %v1525 = vpop.permute.xlu0 %1524
        %1526 = vrot.lane.b32.xlu0 %v1450, 8
        %v1527 = vpop.permute.xlu0 %1526
        %1528 = vrot.lane.b32.xlu0 %v1451, 8
        %v1529 = vpop.permute.xlu0 %1528
        %1530 = vrot.lane.b32.xlu0 %v1452, 8
        %v1531 = vpop.permute.xlu0 %1530
        %1532 = vrot.lane.b32.xlu0 %v1453, 8
        %v1533 = vpop.permute.xlu0 %1532
        %1534 = vrot.lane.b32.xlu0 %v1454, 8
        %v1535 = vpop.permute.xlu0 %1534
        %1536 = vrot.lane.b32.xlu0 %v1455, 8
        %v1537 = vpop.permute.xlu0 %1536
        %1538 = vrot.lane.b32.xlu0 %v1456, 8
        %v1539 = vpop.permute.xlu0 %1538
        %vm1540 = vcmask 31744
        %v1543 = vsel %vm1540, %v1201, %v1461
        %v1546 = vsel %vm1540, %v1202, %v1463
        %v1549 = vsel %vm1540, %v1203, %v1465
        %v1552 = vsel %vm1540, %v1204, %v1467
        %v1555 = vsel %vm1540, %v1205, %v1469
        %v1558 = vsel %vm1540, %v1206, %v1471
        %v1561 = vsel %vm1540, %v1207, %v1473
        %v1564 = vsel %vm1540, %v1208, %v1475
        %v1567 = vsel %vm1540, %v1209, %v1477
        %v1570 = vsel %vm1540, %v1210, %v1479
        %v1573 = vsel %vm1540, %v1211, %v1481
        %v1576 = vsel %vm1540, %v1212, %v1483
        %v1579 = vsel %vm1540, %v1213, %v1485
        %v1582 = vsel %vm1540, %v1214, %v1487
        %v1585 = vsel %vm1540, %v1215, %v1489
        %v1588 = vsel %vm1540, %v1216, %v1491
        %vm1589 = vcmask 64512
        %v1591 = vsel %vm1589, %v1543, %v1509
        %v1594 = vsel %vm1589, %v1546, %v1511
        %v1597 = vsel %vm1589, %v1549, %v1513
        %v1600 = vsel %vm1589, %v1552, %v1515
        %v1603 = vsel %vm1589, %v1555, %v1517
        %v1606 = vsel %vm1589, %v1558, %v1519
        %v1609 = vsel %vm1589, %v1561, %v1521
        %v1612 = vsel %vm1589, %v1564, %v1523
        %v1615 = vsel %vm1589, %v1567, %v1525
        %v1618 = vsel %vm1589, %v1570, %v1527
        %v1621 = vsel %vm1589, %v1573, %v1529
        %v1624 = vsel %vm1589, %v1576, %v1531
        %v1627 = vsel %vm1589, %v1579, %v1533
        %v1630 = vsel %vm1589, %v1582, %v1535
        %v1633 = vsel %vm1589, %v1585, %v1537
        %v1636 = vsel %vm1589, %v1588, %v1539
        %1638 = vst.msk [vmem:[#allocation2 + $0x8] sm:$0xff] %vm1457, %v1591
        %1639 = vst.msk [vmem:[#allocation2 + $0x10] sm:$0xff] %vm1457, %v1594
        %1640 = vst.msk [vmem:[#allocation2 + $0x18] sm:$0xff] %vm1457, %v1597
        %1641 = vst.msk [vmem:[#allocation2 + $0x20] sm:$0xff] %vm1457, %v1600
        %1642 = vst.msk [vmem:[#allocation2 + $0x28] sm:$0xff] %vm1457, %v1603
        %1643 = vst.msk [vmem:[#allocation2 + $0x30] sm:$0xff] %vm1457, %v1606
        %1644 = vst.msk [vmem:[#allocation2 + $0x38] sm:$0xff] %vm1457, %v1609
        %1645 = vst.msk [vmem:[#allocation2 + $0x40] sm:$0xff] %vm1457, %v1612
        %1646 = vst.msk [vmem:[#allocation2 + $0x48] sm:$0xff] %vm1457, %v1615
        %1647 = vst.msk [vmem:[#allocation2 + $0x50] sm:$0xff] %vm1457, %v1618
        %1648 = vst.msk [vmem:[#allocation2 + $0x58] sm:$0xff] %vm1457, %v1621
        %1649 = vst.msk [vmem:[#allocation2 + $0x60] sm:$0xff] %vm1457, %v1624
        %1650 = vst.msk [vmem:[#allocation2 + $0x68] sm:$0xff] %vm1457, %v1627
        %1651 = vst.msk [vmem:[#allocation2 + $0x70] sm:$0xff] %vm1457, %v1630
        %1652 = vst.msk [vmem:[#allocation2 + $0x78] sm:$0xff] %vm1457, %v1633
        %1653 = vst.msk [vmem:[#allocation2 + $0x80] sm:$0xff] %vm1457, %v1636
      $region32: #{basic_block_forward.6} parent=27 // pred_fallthru
        _
      %v1654 = vld [vmem:[#allocation2] sm:$0xff]
      %v1655 = vld [vmem:[#allocation2 + $0x8] sm:$0xff]
      %v1656 = vld [vmem:[#allocation2 + $0x10] sm:$0xff]
      %v1657 = vld [vmem:[#allocation2 + $0x18] sm:$0xff]
      %v1658 = vld [vmem:[#allocation2 + $0x20] sm:$0xff]
      %v1659 = vld [vmem:[#allocation2 + $0x28] sm:$0xff]
      %v1660 = vld [vmem:[#allocation2 + $0x30] sm:$0xff]
      %v1661 = vld [vmem:[#allocation2 + $0x38] sm:$0xff]
      %v1662 = vld [vmem:[#allocation2 + $0x40] sm:$0xff]
      %v1663 = vld [vmem:[#allocation2 + $0x48] sm:$0xff]
      %v1664 = vld [vmem:[#allocation2 + $0x50] sm:$0xff]
      %v1665 = vld [vmem:[#allocation2 + $0x58] sm:$0xff]
      %v1666 = vld [vmem:[#allocation2 + $0x60] sm:$0xff]
      %v1667 = vld [vmem:[#allocation2 + $0x68] sm:$0xff]
      %v1668 = vld [vmem:[#allocation2 + $0x70] sm:$0xff]
      %v1669 = vld [vmem:[#allocation2 + $0x78] sm:$0xff]
      %v1670 = vld [vmem:[%s211] sm:$0xf]
      %v1671 = vld [vmem:[%s211 + $0x4] sm:$0x3]
      %v1672 = vld [vmem:[#allocation2 + $0x80] sm:$0xff]
      %s1673 = scalar_lea.vmem %s211, 8
      %v1674 = vld [vmem:[%s1673] sm:$0xf]
      %v1675 = vld [vmem:[%s1673 + $0x4] sm:$0x3]
      %v1678 = vunpack.c.l.b16 %v1674
      %v1679 = vunpack.c.l.b16 %v1675
      %v1680 = vpack.c.b16 %v1679, %v1678
      %vm1681 = vcmask 97280
      %v1683 = vsel %vm1681, %v1655, 0
      %v1686 = vsel %vm1681, %v1656, 0
      %v1689 = vsel %vm1681, %v1657, 0
      %v1692 = vsel %vm1681, %v1658, 0
      %v1695 = vsel %vm1681, %v1659, 0
      %v1698 = vsel %vm1681, %v1660, 0
      %v1701 = vsel %vm1681, %v1661, 0
      %v1704 = vsel %vm1681, %v1662, 0
      %v1707 = vsel %vm1681, %v1663, 0
      %v1710 = vsel %vm1681, %v1664, 0
      %v1713 = vsel %vm1681, %v1665, 0
      %v1716 = vsel %vm1681, %v1666, 0
      %v1719 = vsel %vm1681, %v1667, 0
      %v1722 = vsel %vm1681, %v1668, 0
      %v1725 = vsel %vm1681, %v1669, 0
      %v1728 = vsel %vm1681, %v1672, 0
      %vm1730 = vcmask 1045504
      %v1732 = vsel %vm1730, %v1680, 0
      %1734 = vmatprep.subr.bf16.mxu0 0
      %1735 = vmatpush1.bf16.msra.mxu0 %v1732
      %1736 = vmatprep.subr.bf16.mxu0 0
      %1737 = vmatpush1.bf16.msra.mxu0 0
      %1738 = vmatprep.subr.bf16.mxu0 0
      %1739 = vmatpush1.bf16.msra.mxu0 0
      %1740 = vmatprep.subr.bf16.mxu0 0
      %1741 = vmatpush1.bf16.msra.mxu0 0
      %1742 = vmatprep.subr.bf16.mxu0 0
      %1743 = vmatpush1.bf16.msra.mxu0 0
      %1744 = vmatprep.subr.bf16.mxu0 0
      %1745 = vmatpush1.bf16.msra.mxu0 0
      %1746 = vmatprep.subr.bf16.mxu0 0
      %1747 = vmatpush1.bf16.msra.mxu0 0
      %1748 = vmatprep.subr.bf16.mxu0 0
      %1749 = vmatpush1.bf16.msra.mxu0 0
      %1750 = vmatprep.subr.bf16.mxu0 0
      %1751 = vmatpush1.bf16.msra.mxu0 0
      %1752 = vmatprep.subr.bf16.mxu0 0
      %1753 = vmatpush1.bf16.msra.mxu0 0
      %1754 = vmatprep.subr.bf16.mxu0 0
      %1755 = vmatpush1.bf16.msra.mxu0 0
      %1756 = vmatprep.subr.bf16.mxu0 0
      %1757 = vmatpush1.bf16.msra.mxu0 0
      %1758 = vmatprep.subr.bf16.mxu0 0
      %1759 = vmatpush1.bf16.msra.mxu0 0
      %1760 = vmatprep.subr.bf16.mxu0 0
      %1761 = vmatpush1.bf16.msra.mxu0 0
      %1762 = vmatprep.subr.bf16.mxu0 0
      %1763 = vmatpush1.bf16.msra.mxu0 0
      %1764 = vmatprep.subr.bf16.mxu0 0
      %1765 = vmatpush1.bf16.msra.mxu0 0
      %1766 = vmatprep.mubr.bf16.mxu0 0
      %1767 = vmatmul.mubr.bf16.gmra.mrb[0].mxu0 %v1683
      %v1768 = vpop.f32.mrb[0].mxu0
      %v1769 = vadd.f32 0.0, %v1768
      %v1770 = vpop.f32.mrb[0].mxu0
      %v1771 = vpop.f32.mrb[0].mxu0
      %v1772 = vadd.f32 0.0, %v1771
      %v1773 = vpop.f32.mrb[0].mxu0
      %1774 = vmatprep.mubr.bf16.mxu0 0
      %1775 = vmatmul.mubr.bf16.gmra.mrb[0].mxu0 %v1686
      %v1776 = vpop.f32.mrb[0].mxu0
      %v1777 = vadd.f32 0.0, %v1776
      %v1778 = vpop.f32.mrb[0].mxu0
      %v1779 = vpop.f32.mrb[0].mxu0
      %v1780 = vadd.f32 0.0, %v1779
      %v1781 = vpop.f32.mrb[0].mxu0
      %1782 = vmatprep.mubr.bf16.mxu0 0
      %1783 = vmatmul.mubr.bf16.gmra.mrb[0].mxu0 %v1689
      %v1784 = vpop.f32.mrb[0].mxu0
      %v1785 = vadd.f32 0.0, %v1784
      %v1786 = vpop.f32.mrb[0].mxu0
      %v1787 = vpop.f32.mrb[0].mxu0
      %v1788 = vadd.f32 0.0, %v1787
      %v1789 = vpop.f32.mrb[0].mxu0
      %1790 = vmatprep.mubr.bf16.mxu0 0
      %1791 = vmatmul.mubr.bf16.gmra.mrb[0].mxu0 %v1692
      %v1792 = vpop.f32.mrb[0].mxu0
      %v1793 = vadd.f32 0.0, %v1792
      %v1794 = vpop.f32.mrb[0].mxu0
      %v1795 = vpop.f32.mrb[0].mxu0
      %v1796 = vadd.f32 0.0, %v1795
      %v1797 = vpop.f32.mrb[0].mxu0
      %1798 = vmatprep.mubr.bf16.mxu0 0
      %1799 = vmatmul.mubr.bf16.gmra.mrb[0].mxu0 %v1695
      %v1800 = vpop.f32.mrb[0].mxu0
      %v1801 = vadd.f32 0.0, %v1800
      %v1802 = vpop.f32.mrb[0].mxu0
      %v1803 = vpop.f32.mrb[0].mxu0
      %v1804 = vadd.f32 0.0, %v1803
      %v1805 = vpop.f32.mrb[0].mxu0
      %1806 = vmatprep.mubr.bf16.mxu0 0
      %1807 = vmatmul.mubr.bf16.gmra.mrb[0].mxu0 %v1698
      %v1808 = vpop.f32.mrb[0].mxu0
      %v1809 = vadd.f32 0.0, %v1808
      %v1810 = vpop.f32.mrb[0].mxu0
      %v1811 = vpop.f32.mrb[0].mxu0
      %v1812 = vadd.f32 0.0, %v1811
      %v1813 = vpop.f32.mrb[0].mxu0
      %1814 = vmatprep.mubr.bf16.mxu0 0
      %1815 = vmatmul.mubr.bf16.gmra.mrb[0].mxu0 %v1701
      %v1816 = vpop.f32.mrb[0].mxu0
      %v1817 = vadd.f32 0.0, %v1816
      %v1818 = vpop.f32.mrb[0].mxu0
      %v1819 = vpop.f32.mrb[0].mxu0
      %v1820 = vadd.f32 0.0, %v1819
      %v1821 = vpop.f32.mrb[0].mxu0
      %1822 = vmatprep.mubr.bf16.mxu0 0
      %1823 = vmatmul.mubr.bf16.gmra.mrb[0].mxu0 %v1704
      %v1824 = vpop.f32.mrb[0].mxu0
      %v1825 = vadd.f32 0.0, %v1824
      %v1826 = vpop.f32.mrb[0].mxu0
      %v1827 = vpop.f32.mrb[0].mxu0
      %v1828 = vadd.f32 0.0, %v1827
      %v1829 = vpop.f32.mrb[0].mxu0
      %1830 = vmatprep.mubr.bf16.mxu0 0
      %1831 = vmatmul.mubr.bf16.gmra.mrb[0].mxu0 %v1707
      %v1832 = vpop.f32.mrb[0].mxu0
      %v1833 = vadd.f32 0.0, %v1832
      %v1834 = vpop.f32.mrb[0].mxu0
      %v1835 = vpop.f32.mrb[0].mxu0
      %v1836 = vadd.f32 0.0, %v1835
      %v1837 = vpop.f32.mrb[0].mxu0
      %1838 = vmatprep.mubr.bf16.mxu0 0
      %1839 = vmatmul.mubr.bf16.gmra.mrb[0].mxu0 %v1710
      %v1840 = vpop.f32.mrb[0].mxu0
      %v1841 = vadd.f32 0.0, %v1840
      %v1842 = vpop.f32.mrb[0].mxu0
      %v1843 = vpop.f32.mrb[0].mxu0
      %v1844 = vadd.f32 0.0, %v1843
      %v1845 = vpop.f32.mrb[0].mxu0
      %1846 = vmatprep.mubr.bf16.mxu0 0
      %1847 = vmatmul.mubr.bf16.gmra.mrb[0].mxu0 %v1713
      %v1848 = vpop.f32.mrb[0].mxu0
      %v1849 = vadd.f32 0.0, %v1848
      %v1850 = vpop.f32.mrb[0].mxu0
      %v1851 = vpop.f32.mrb[0].mxu0
      %v1852 = vadd.f32 0.0, %v1851
      %v1853 = vpop.f32.mrb[0].mxu0
      %1854 = vmatprep.mubr.bf16.mxu0 0
      %1855 = vmatmul.mubr.bf16.gmra.mrb[0].mxu0 %v1716
      %v1856 = vpop.f32.mrb[0].mxu0
      %v1857 = vadd.f32 0.0, %v1856
      %v1858 = vpop.f32.mrb[0].mxu0
      %v1859 = vpop.f32.mrb[0].mxu0
      %v1860 = vadd.f32 0.0, %v1859
      %v1861 = vpop.f32.mrb[0].mxu0
      %1862 = vmatprep.mubr.bf16.mxu0 0
      %1863 = vmatmul.mubr.bf16.gmra.mrb[0].mxu0 %v1719
      %v1864 = vpop.f32.mrb[0].mxu0
      %v1865 = vadd.f32 0.0, %v1864
      %v1866 = vpop.f32.mrb[0].mxu0
      %v1867 = vpop.f32.mrb[0].mxu0
      %v1868 = vadd.f32 0.0, %v1867
      %v1869 = vpop.f32.mrb[0].mxu0
      %1870 = vmatprep.mubr.bf16.mxu0 0
      %1871 = vmatmul.mubr.bf16.gmra.mrb[0].mxu0 %v1722
      %v1872 = vpop.f32.mrb[0].mxu0
      %v1873 = vadd.f32 0.0, %v1872
      %v1874 = vpop.f32.mrb[0].mxu0
      %v1875 = vpop.f32.mrb[0].mxu0
      %v1876 = vadd.f32 0.0, %v1875
      %v1877 = vpop.f32.mrb[0].mxu0
      %1878 = vmatprep.mubr.bf16.mxu0 0
      %1879 = vmatmul.mubr.bf16.gmra.mrb[0].mxu0 %v1725
      %v1880 = vpop.f32.mrb[0].mxu0
      %v1881 = vadd.f32 0.0, %v1880
      %v1882 = vpop.f32.mrb[0].mxu0
      %v1883 = vpop.f32.mrb[0].mxu0
      %v1884 = vadd.f32 0.0, %v1883
      %v1885 = vpop.f32.mrb[0].mxu0
      %1886 = vmatprep.mubr.bf16.mxu0 0
      %1887 = vmatmul.mubr.bf16.gmra.mrb[0].mxu0 %v1728
      %v1888 = vpop.f32.mrb[0].mxu0
      %v1889 = vadd.f32 0.0, %v1888
      %v1890 = vpop.f32.mrb[0].mxu0
      %v1891 = vpop.f32.mrb[0].mxu0
      %v1892 = vadd.f32 0.0, %v1891
      %v1893 = vpop.f32.mrb[0].mxu0
      %1894 = vdwg.mxu0
      %v1897 = vunpack.c.l.b16 %v1670
      %v1898 = vunpack.c.l.b16 %v1671
      %v1899 = vpack.c.b16 %v1898, %v1897
      %v1901 = vsel %vm1681, %v1654, 0
      %v1904 = vsel %vm1730, %v1899, 0
      %1906 = vmatprep.subr.bf16.mxu0 0
      %1907 = vmatpush1.bf16.msra.mxu0 %v1904
      %1908 = vmatprep.subr.bf16.mxu0 0
      %1909 = vmatpush1.bf16.msra.mxu0 0
      %1910 = vmatprep.subr.bf16.mxu0 0
      %1911 = vmatpush1.bf16.msra.mxu0 0
      %1912 = vmatprep.subr.bf16.mxu0 0
      %1913 = vmatpush1.bf16.msra.mxu0 0
      %1914 = vmatprep.subr.bf16.mxu0 0
      %1915 = vmatpush1.bf16.msra.mxu0 0
      %1916 = vmatprep.subr.bf16.mxu0 0
      %1917 = vmatpush1.bf16.msra.mxu0 0
      %1918 = vmatprep.subr.bf16.mxu0 0
      %1919 = vmatpush1.bf16.msra.mxu0 0
      %1920 = vmatprep.subr.bf16.mxu0 0
      %1921 = vmatpush1.bf16.msra.mxu0 0
      %1922 = vmatprep.subr.bf16.mxu0 0
      %1923 = vmatpush1.bf16.msra.mxu0 0
      %1924 = vmatprep.subr.bf16.mxu0 0
      %1925 = vmatpush1.bf16.msra.mxu0 0
      %1926 = vmatprep.subr.bf16.mxu0 0
      %1927 = vmatpush1.bf16.msra.mxu0 0
      %1928 = vmatprep.subr.bf16.mxu0 0
      %1929 = vmatpush1.bf16.msra.mxu0 0
      %1930 = vmatprep.subr.bf16.mxu0 0
      %1931 = vmatpush1.bf16.msra.mxu0 0
      %1932 = vmatprep.subr.bf16.mxu0 0
      %1933 = vmatpush1.bf16.msra.mxu0 0
      %1934 = vmatprep.subr.bf16.mxu0 0
      %1935 = vmatpush1.bf16.msra.mxu0 0
      %1936 = vmatprep.subr.bf16.mxu0 0
      %1937 = vmatpush1.bf16.msra.mxu0 0
      %1938 = vmatprep.mubr.bf16.mxu0 0
      %1939 = vmatmul.mubr.bf16.gmra.mrb[0].mxu0 %v1901
      %v1940 = vpop.f32.mrb[0].mxu0
      %v1941 = vadd.f32 %v1769, %v1940
      %v1942 = vpop.f32.mrb[0].mxu0
      %v1943 = vpop.f32.mrb[0].mxu0
      %v1944 = vadd.f32 %v1772, %v1943
      %v1945 = vpop.f32.mrb[0].mxu0
      %1946 = vmatprep.mubr.bf16.mxu0 0
      %1947 = vmatmul.mubr.bf16.gmra.mrb[0].mxu0 %v1683
      %v1948 = vpop.f32.mrb[0].mxu0
      %v1949 = vadd.f32 %v1777, %v1948
      %v1950 = vpop.f32.mrb[0].mxu0
      %v1951 = vpop.f32.mrb[0].mxu0
      %v1952 = vadd.f32 %v1780, %v1951
      %v1953 = vpop.f32.mrb[0].mxu0
      %1954 = vmatprep.mubr.bf16.mxu0 0
      %1955 = vmatmul.mubr.bf16.gmra.mrb[0].mxu0 %v1686
      %v1956 = vpop.f32.mrb[0].mxu0
      %v1957 = vadd.f32 %v1785, %v1956
      %v1958 = vpop.f32.mrb[0].mxu0
      %v1959 = vpop.f32.mrb[0].mxu0
      %v1960 = vadd.f32 %v1788, %v1959
      %v1961 = vpop.f32.mrb[0].mxu0
      %1962 = vmatprep.mubr.bf16.mxu0 0
      %1963 = vmatmul.mubr.bf16.gmra.mrb[0].mxu0 %v1689
      %v1964 = vpop.f32.mrb[0].mxu0
      %v1965 = vadd.f32 %v1793, %v1964
      %v1966 = vpop.f32.mrb[0].mxu0
      %v1967 = vpop.f32.mrb[0].mxu0
      %v1968 = vadd.f32 %v1796, %v1967
      %v1969 = vpop.f32.mrb[0].mxu0
      %1970 = vmatprep.mubr.bf16.mxu0 0
      %1971 = vmatmul.mubr.bf16.gmra.mrb[0].mxu0 %v1692
      %v1972 = vpop.f32.mrb[0].mxu0
      %v1973 = vadd.f32 %v1801, %v1972
      %v1974 = vpop.f32.mrb[0].mxu0
      %v1975 = vpop.f32.mrb[0].mxu0
      %v1976 = vadd.f32 %v1804, %v1975
      %v1977 = vpop.f32.mrb[0].mxu0
      %1978 = vmatprep.mubr.bf16.mxu0 0
      %1979 = vmatmul.mubr.bf16.gmra.mrb[0].mxu0 %v1695
      %v1980 = vpop.f32.mrb[0].mxu0
      %v1981 = vadd.f32 %v1809, %v1980
      %v1982 = vpop.f32.mrb[0].mxu0
      %v1983 = vpop.f32.mrb[0].mxu0
      %v1984 = vadd.f32 %v1812, %v1983
      %v1985 = vpop.f32.mrb[0].mxu0
      %1986 = vmatprep.mubr.bf16.mxu0 0
      %1987 = vmatmul.mubr.bf16.gmra.mrb[0].mxu0 %v1698
      %v1988 = vpop.f32.mrb[0].mxu0
      %v1989 = vadd.f32 %v1817, %v1988
      %v1990 = vpop.f32.mrb[0].mxu0
      %v1991 = vpop.f32.mrb[0].mxu0
      %v1992 = vadd.f32 %v1820, %v1991
      %v1993 = vpop.f32.mrb[0].mxu0
      %1994 = vmatprep.mubr.bf16.mxu0 0
      %1995 = vmatmul.mubr.bf16.gmra.mrb[0].mxu0 %v1701
      %v1996 = vpop.f32.mrb[0].mxu0
      %v1997 = vadd.f32 %v1825, %v1996
      %v1998 = vpop.f32.mrb[0].mxu0
      %v1999 = vpop.f32.mrb[0].mxu0
      %v2000 = vadd.f32 %v1828, %v1999
      %v2001 = vpop.f32.mrb[0].mxu0
      %2002 = vmatprep.mubr.bf16.mxu0 0
      %2003 = vmatmul.mubr.bf16.gmra.mrb[0].mxu0 %v1704
      %v2004 = vpop.f32.mrb[0].mxu0
      %v2005 = vadd.f32 %v1833, %v2004
      %v2006 = vpop.f32.mrb[0].mxu0
      %v2007 = vpop.f32.mrb[0].mxu0
      %v2008 = vadd.f32 %v1836, %v2007
      %v2009 = vpop.f32.mrb[0].mxu0
      %2010 = vmatprep.mubr.bf16.mxu0 0
      %2011 = vmatmul.mubr.bf16.gmra.mrb[0].mxu0 %v1707
      %v2012 = vpop.f32.mrb[0].mxu0
      %v2013 = vadd.f32 %v1841, %v2012
      %v2014 = vpop.f32.mrb[0].mxu0
      %v2015 = vpop.f32.mrb[0].mxu0
      %v2016 = vadd.f32 %v1844, %v2015
      %v2017 = vpop.f32.mrb[0].mxu0
      %2018 = vmatprep.mubr.bf16.mxu0 0
      %2019 = vmatmul.mubr.bf16.gmra.mrb[0].mxu0 %v1710
      %v2020 = vpop.f32.mrb[0].mxu0
      %v2021 = vadd.f32 %v1849, %v2020
      %v2022 = vpop.f32.mrb[0].mxu0
      %v2023 = vpop.f32.mrb[0].mxu0
      %v2024 = vadd.f32 %v1852, %v2023
      %v2025 = vpop.f32.mrb[0].mxu0
      %2026 = vmatprep.mubr.bf16.mxu0 0
      %2027 = vmatmul.mubr.bf16.gmra.mrb[0].mxu0 %v1713
      %v2028 = vpop.f32.mrb[0].mxu0
      %v2029 = vadd.f32 %v1857, %v2028
      %v2030 = vpop.f32.mrb[0].mxu0
      %v2031 = vpop.f32.mrb[0].mxu0
      %v2032 = vadd.f32 %v1860, %v2031
      %v2033 = vpop.f32.mrb[0].mxu0
      %2034 = vmatprep.mubr.bf16.mxu0 0
      %2035 = vmatmul.mubr.bf16.gmra.mrb[0].mxu0 %v1716
      %v2036 = vpop.f32.mrb[0].mxu0
      %v2037 = vadd.f32 %v1865, %v2036
      %v2038 = vpop.f32.mrb[0].mxu0
      %v2039 = vpop.f32.mrb[0].mxu0
      %v2040 = vadd.f32 %v1868, %v2039
      %v2041 = vpop.f32.mrb[0].mxu0
      %2042 = vmatprep.mubr.bf16.mxu0 0
      %2043 = vmatmul.mubr.bf16.gmra.mrb[0].mxu0 %v1719
      %v2044 = vpop.f32.mrb[0].mxu0
      %v2045 = vadd.f32 %v1873, %v2044
      %v2046 = vpop.f32.mrb[0].mxu0
      %v2047 = vpop.f32.mrb[0].mxu0
      %v2048 = vadd.f32 %v1876, %v2047
      %v2049 = vpop.f32.mrb[0].mxu0
      %2050 = vmatprep.mubr.bf16.mxu0 0
      %2051 = vmatmul.mubr.bf16.gmra.mrb[0].mxu0 %v1722
      %v2052 = vpop.f32.mrb[0].mxu0
      %v2053 = vadd.f32 %v1881, %v2052
      %v2054 = vpop.f32.mrb[0].mxu0
      %v2055 = vpop.f32.mrb[0].mxu0
      %v2056 = vadd.f32 %v1884, %v2055
      %v2057 = vpop.f32.mrb[0].mxu0
      %2058 = vmatprep.mubr.bf16.mxu0 0
      %2059 = vmatmul.mubr.bf16.gmra.mrb[0].mxu0 %v1725
      %v2060 = vpop.f32.mrb[0].mxu0
      %v2061 = vadd.f32 %v1889, %v2060
      %v2062 = vpop.f32.mrb[0].mxu0
      %v2063 = vpop.f32.mrb[0].mxu0
      %v2064 = vadd.f32 %v1892, %v2063
      %v2065 = vpop.f32.mrb[0].mxu0
      %2066 = vdwg.mxu0
      %v2067 = vld [vmem:[#allocation2 + $0x10] sm:$0xff]
      %v2068 = vld [vmem:[#allocation2 + $0x18] sm:$0xff]
      %v2069 = vld [vmem:[#allocation2 + $0x20] sm:$0xff]
      %v2070 = vld [vmem:[#allocation2 + $0x28] sm:$0xff]
      %v2071 = vld [vmem:[#allocation2 + $0x30] sm:$0xff]
      %v2072 = vld [vmem:[#allocation2 + $0x38] sm:$0xff]
      %v2073 = vld [vmem:[#allocation2 + $0x40] sm:$0xff]
      %v2074 = vld [vmem:[#allocation2 + $0x48] sm:$0xff]
      %v2075 = vld [vmem:[#allocation2 + $0x50] sm:$0xff]
      %v2076 = vld [vmem:[#allocation2 + $0x58] sm:$0xff]
      %v2077 = vld [vmem:[#allocation2 + $0x60] sm:$0xff]
      %v2078 = vld [vmem:[#allocation2 + $0x68] sm:$0xff]
      %v2079 = vld [vmem:[#allocation2 + $0x70] sm:$0xff]
      %v2080 = vld [vmem:[#allocation2 + $0x78] sm:$0xff]
      %v2081 = vld [vmem:[#allocation2 + $0x80] sm:$0xff]
      %v2082 = vld [vmem:[#allocation2 + $0x88] sm:$0xff]
      %s2083 = scalar_lea.vmem %s211, 16
      %v2084 = vld [vmem:[%s2083] sm:$0xf]
      %v2085 = vld [vmem:[%s2083 + $0x4] sm:$0x3]
      %v2088 = vunpack.c.l.b16 %v2084
      %v2089 = vunpack.c.l.b16 %v2085
      %v2090 = vpack.c.b16 %v2089, %v2088
      %v2092 = vsel %vm1681, %v2067, 0
      %v2095 = vsel %vm1681, %v2068, 0
      %v2098 = vsel %vm1681, %v2069, 0
      %v2101 = vsel %vm1681, %v2070, 0
      %v2104 = vsel %vm1681, %v2071, 0
      %v2107 = vsel %vm1681, %v2072, 0
      %v2110 = vsel %vm1681, %v2073, 0
      %v2113 = vsel %vm1681, %v2074, 0
      %v2116 = vsel %vm1681, %v2075, 0
      %v2119 = vsel %vm1681, %v2076, 0
      %v2122 = vsel %vm1681, %v2077, 0
      %v2125 = vsel %vm1681, %v2078, 0
      %v2128 = vsel %vm1681, %v2079, 0
      %v2131 = vsel %vm1681, %v2080, 0
      %v2134 = vsel %vm1681, %v2081, 0
      %v2137 = vsel %vm1681, %v2082, 0
      %v2140 = vsel %vm1730, %v2090, 0
      %2142 = vmatprep.subr.bf16.mxu0 0
      %2143 = vmatpush1.bf16.msra.mxu0 %v2140
      %2144 = vmatprep.subr.bf16.mxu0 0
      %2145 = vmatpush1.bf16.msra.mxu0 0
      %2146 = vmatprep.subr.bf16.mxu0 0
      %2147 = vmatpush1.bf16.msra.mxu0 0
      %2148 = vmatprep.subr.bf16.mxu0 0
      %2149 = vmatpush1.bf16.msra.mxu0 0
      %2150 = vmatprep.subr.bf16.mxu0 0
      %2151 = vmatpush1.bf16.msra.mxu0 0
      %2152 = vmatprep.subr.bf16.mxu0 0
      %2153 = vmatpush1.bf16.msra.mxu0 0
      %2154 = vmatprep.subr.bf16.mxu0 0
      %2155 = vmatpush1.bf16.msra.mxu0 0
      %2156 = vmatprep.subr.bf16.mxu0 0
      %2157 = vmatpush1.bf16.msra.mxu0 0
      %2158 = vmatprep.subr.bf16.mxu0 0
      %2159 = vmatpush1.bf16.msra.mxu0 0
      %2160 = vmatprep.subr.bf16.mxu0 0
      %2161 = vmatpush1.bf16.msra.mxu0 0
      %2162 = vmatprep.subr.bf16.mxu0 0
      %2163 = vmatpush1.bf16.msra.mxu0 0
      %2164 = vmatprep.subr.bf16.mxu0 0
      %2165 = vmatpush1.bf16.msra.mxu0 0
      %2166 = vmatprep.subr.bf16.mxu0 0
      %2167 = vmatpush1.bf16.msra.mxu0 0
      %2168 = vmatprep.subr.bf16.mxu0 0
      %2169 = vmatpush1.bf16.msra.mxu0 0
      %2170 = vmatprep.subr.bf16.mxu0 0
      %2171 = vmatpush1.bf16.msra.mxu0 0
      %2172 = vmatprep.subr.bf16.mxu0 0
      %2173 = vmatpush1.bf16.msra.mxu0 0
      %2174 = vmatprep.mubr.bf16.mxu0 0
      %2175 = vmatmul.mubr.bf16.gmra.mrb[0].mxu0 %v2092
      %v2176 = vpop.f32.mrb[0].mxu0
      %v2177 = vadd.f32 0.0, %v2176
      %v2178 = vpop.f32.mrb[0].mxu0
      %v2179 = vpop.f32.mrb[0].mxu0
      %v2180 = vadd.f32 0.0, %v2179
      %v2181 = vpop.f32.mrb[0].mxu0
      %2182 = vmatprep.mubr.bf16.mxu0 0
      %2183 = vmatmul.mubr.bf16.gmra.mrb[0].mxu0 %v2095
      %v2184 = vpop.f32.mrb[0].mxu0
      %v2185 = vadd.f32 0.0, %v2184
      %v2186 = vpop.f32.mrb[0].mxu0
      %v2187 = vpop.f32.mrb[0].mxu0
      %v2188 = vadd.f32 0.0, %v2187
      %v2189 = vpop.f32.mrb[0].mxu0
      %2190 = vmatprep.mubr.bf16.mxu0 0
      %2191 = vmatmul.mubr.bf16.gmra.mrb[0].mxu0 %v2098
      %v2192 = vpop.f32.mrb[0].mxu0
      %v2193 = vadd.f32 0.0, %v2192
      %v2194 = vpop.f32.mrb[0].mxu0
      %v2195 = vpop.f32.mrb[0].mxu0
      %v2196 = vadd.f32 0.0, %v2195
      %v2197 = vpop.f32.mrb[0].mxu0
      %2198 = vmatprep.mubr.bf16.mxu0 0
      %2199 = vmatmul.mubr.bf16.gmra.mrb[0].mxu0 %v2101
      %v2200 = vpop.f32.mrb[0].mxu0
      %v2201 = vadd.f32 0.0, %v2200
      %v2202 = vpop.f32.mrb[0].mxu0
      %v2203 = vpop.f32.mrb[0].mxu0
      %v2204 = vadd.f32 0.0, %v2203
      %v2205 = vpop.f32.mrb[0].mxu0
      %2206 = vmatprep.mubr.bf16.mxu0 0
      %2207 = vmatmul.mubr.bf16.gmra.mrb[0].mxu0 %v2104
      %v2208 = vpop.f32.mrb[0].mxu0
      %v2209 = vadd.f32 0.0, %v2208
      %v2210 = vpop.f32.mrb[0].mxu0
      %v2211 = vpop.f32.mrb[0].mxu0
      %v2212 = vadd.f32 0.0, %v2211
      %v2213 = vpop.f32.mrb[0].mxu0
      %2214 = vmatprep.mubr.bf16.mxu0 0
      %2215 = vmatmul.mubr.bf16.gmra.mrb[0].mxu0 %v2107
      %v2216 = vpop.f32.mrb[0].mxu0
      %v2217 = vadd.f32 0.0, %v2216
      %v2218 = vpop.f32.mrb[0].mxu0
      %v2219 = vpop.f32.mrb[0].mxu0
      %v2220 = vadd.f32 0.0, %v2219
      %v2221 = vpop.f32.mrb[0].mxu0
      %2222 = vmatprep.mubr.bf16.mxu0 0
      %2223 = vmatmul.mubr.bf16.gmra.mrb[0].mxu0 %v2110
      %v2224 = vpop.f32.mrb[0].mxu0
      %v2225 = vadd.f32 0.0, %v2224
      %v2226 = vpop.f32.mrb[0].mxu0
      %v2227 = vpop.f32.mrb[0].mxu0
      %v2228 = vadd.f32 0.0, %v2227
      %v2229 = vpop.f32.mrb[0].mxu0
      %2230 = vmatprep.mubr.bf16.mxu0 0
      %2231 = vmatmul.mubr.bf16.gmra.mrb[0].mxu0 %v2113
      %v2232 = vpop.f32.mrb[0].mxu0
      %v2233 = vadd.f32 0.0, %v2232
      %v2234 = vpop.f32.mrb[0].mxu0
      %v2235 = vpop.f32.mrb[0].mxu0
      %v2236 = vadd.f32 0.0, %v2235
      %v2237 = vpop.f32.mrb[0].mxu0
      %2238 = vmatprep.mubr.bf16.mxu0 0
      %2239 = vmatmul.mubr.bf16.gmra.mrb[0].mxu0 %v2116
      %v2240 = vpop.f32.mrb[0].mxu0
      %v2241 = vadd.f32 0.0, %v2240
      %v2242 = vpop.f32.mrb[0].mxu0
      %v2243 = vpop.f32.mrb[0].mxu0
      %v2244 = vadd.f32 0.0, %v2243
      %v2245 = vpop.f32.mrb[0].mxu0
      %2246 = vmatprep.mubr.bf16.mxu0 0
      %2247 = vmatmul.mubr.bf16.gmra.mrb[0].mxu0 %v2119
      %v2248 = vpop.f32.mrb[0].mxu0
      %v2249 = vadd.f32 0.0, %v2248
      %v2250 = vpop.f32.mrb[0].mxu0
      %v2251 = vpop.f32.mrb[0].mxu0
      %v2252 = vadd.f32 0.0, %v2251
      %v2253 = vpop.f32.mrb[0].mxu0
      %2254 = vmatprep.mubr.bf16.mxu0 0
      %2255 = vmatmul.mubr.bf16.gmra.mrb[0].mxu0 %v2122
      %v2256 = vpop.f32.mrb[0].mxu0
      %v2257 = vadd.f32 0.0, %v2256
      %v2258 = vpop.f32.mrb[0].mxu0
      %v2259 = vpop.f32.mrb[0].mxu0
      %v2260 = vadd.f32 0.0, %v2259
      %v2261 = vpop.f32.mrb[0].mxu0
      %2262 = vmatprep.mubr.bf16.mxu0 0
      %2263 = vmatmul.mubr.bf16.gmra.mrb[0].mxu0 %v2125
      %v2264 = vpop.f32.mrb[0].mxu0
      %v2265 = vadd.f32 0.0, %v2264
      %v2266 = vpop.f32.mrb[0].mxu0
      %v2267 = vpop.f32.mrb[0].mxu0
      %v2268 = vadd.f32 0.0, %v2267
      %v2269 = vpop.f32.mrb[0].mxu0
      %2270 = vmatprep.mubr.bf16.mxu0 0
      %2271 = vmatmul.mubr.bf16.gmra.mrb[0].mxu0 %v2128
      %v2272 = vpop.f32.mrb[0].mxu0
      %v2273 = vadd.f32 0.0, %v2272
      %v2274 = vpop.f32.mrb[0].mxu0
      %v2275 = vpop.f32.mrb[0].mxu0
      %v2276 = vadd.f32 0.0, %v2275
      %v2277 = vpop.f32.mrb[0].mxu0
      %2278 = vmatprep.mubr.bf16.mxu0 0
      %2279 = vmatmul.mubr.bf16.gmra.mrb[0].mxu0 %v2131
      %v2280 = vpop.f32.mrb[0].mxu0
      %v2281 = vadd.f32 0.0, %v2280
      %v2282 = vpop.f32.mrb[0].mxu0
      %v2283 = vpop.f32.mrb[0].mxu0
      %v2284 = vadd.f32 0.0, %v2283
      %v2285 = vpop.f32.mrb[0].mxu0
      %2286 = vmatprep.mubr.bf16.mxu0 0
      %2287 = vmatmul.mubr.bf16.gmra.mrb[0].mxu0 %v2134
      %v2288 = vpop.f32.mrb[0].mxu0
      %v2289 = vadd.f32 0.0, %v2288
      %v2290 = vpop.f32.mrb[0].mxu0
      %v2291 = vpop.f32.mrb[0].mxu0
      %v2292 = vadd.f32 0.0, %v2291
      %v2293 = vpop.f32.mrb[0].mxu0
      %2294 = vmatprep.mubr.bf16.mxu0 0
      %2295 = vmatmul.mubr.bf16.gmra.mrb[0].mxu0 %v2137
      %v2296 = vpop.f32.mrb[0].mxu0
      %v2297 = vadd.f32 0.0, %v2296
      %v2298 = vpop.f32.mrb[0].mxu0
      %v2299 = vpop.f32.mrb[0].mxu0
      %v2300 = vadd.f32 0.0, %v2299
      %v2301 = vpop.f32.mrb[0].mxu0
      %2302 = vdwg.mxu0
      %v2303 = vadd.f32 %v1941, %v2177
      %v2304 = vadd.f32 %v1944, %v2180
      %v2305 = vadd.f32 %v1949, %v2185
      %v2306 = vadd.f32 %v1952, %v2188
      %v2307 = vadd.f32 %v1957, %v2193
      %v2308 = vadd.f32 %v1960, %v2196
      %v2309 = vadd.f32 %v1965, %v2201
      %v2310 = vadd.f32 %v1968, %v2204
      %v2311 = vadd.f32 %v1973, %v2209
      %v2312 = vadd.f32 %v1976, %v2212
      %v2313 = vadd.f32 %v1981, %v2217
      %v2314 = vadd.f32 %v1984, %v2220
      %v2315 = vadd.f32 %v1989, %v2225
      %v2316 = vadd.f32 %v1992, %v2228
      %v2317 = vadd.f32 %v1997, %v2233
      %v2318 = vadd.f32 %v2000, %v2236
      %v2319 = vadd.f32 %v2005, %v2241
      %v2320 = vadd.f32 %v2008, %v2244
      %v2321 = vadd.f32 %v2013, %v2249
      %v2322 = vadd.f32 %v2016, %v2252
      %v2323 = vadd.f32 %v2021, %v2257
      %v2324 = vadd.f32 %v2024, %v2260
      %v2325 = vadd.f32 %v2029, %v2265
      %v2326 = vadd.f32 %v2032, %v2268
      %v2327 = vadd.f32 %v2037, %v2273
      %v2328 = vadd.f32 %v2040, %v2276
      %v2329 = vadd.f32 %v2045, %v2281
      %v2330 = vadd.f32 %v2048, %v2284
      %v2331 = vadd.f32 %v2053, %v2289
      %v2332 = vadd.f32 %v2056, %v2292
      %v2333 = vadd.f32 %v2061, %v2297
      %v2334 = vadd.f32 %v2064, %v2300
      %v2335 = vpack.c.bf16 %v2304, %v2303
      %v2336 = vpack.c.bf16 %v2306, %v2305
      %v2337 = vpack.c.bf16 %v2308, %v2307
      %v2338 = vpack.c.bf16 %v2310, %v2309
      %v2339 = vpack.c.bf16 %v2312, %v2311
      %v2340 = vpack.c.bf16 %v2314, %v2313
      %v2341 = vpack.c.bf16 %v2316, %v2315
      %v2342 = vpack.c.bf16 %v2318, %v2317
      %v2343 = vpack.c.bf16 %v2320, %v2319
      %v2344 = vpack.c.bf16 %v2322, %v2321
      %v2345 = vpack.c.bf16 %v2324, %v2323
      %v2346 = vpack.c.bf16 %v2326, %v2325
      %v2347 = vpack.c.bf16 %v2328, %v2327
      %v2348 = vpack.c.bf16 %v2330, %v2329
      %v2349 = vpack.c.bf16 %v2332, %v2331
      %v2350 = vpack.c.bf16 %v2334, %v2333
      %v2367 = vunpack.c.l.b16 %v2335
      %v2368 = vunpack.c.h.b16 %v2335
      %v2369 = vunpack.c.l.b16 %v2336
      %v2370 = vunpack.c.h.b16 %v2336
      %v2371 = vunpack.c.l.b16 %v2337
      %v2372 = vunpack.c.h.b16 %v2337
      %v2373 = vunpack.c.l.b16 %v2338
      %v2374 = vunpack.c.h.b16 %v2338
      %v2375 = vunpack.c.l.b16 %v2339
      %v2376 = vunpack.c.h.b16 %v2339
      %v2377 = vunpack.c.l.b16 %v2340
      %v2378 = vunpack.c.h.b16 %v2340
      %v2379 = vunpack.c.l.b16 %v2341
      %v2380 = vunpack.c.h.b16 %v2341
      %v2381 = vunpack.c.l.b16 %v2342
      %v2382 = vunpack.c.h.b16 %v2342
      %v2383 = vunpack.c.l.b16 %v2343
      %v2384 = vunpack.c.h.b16 %v2343
      %v2385 = vunpack.c.l.b16 %v2344
      %v2386 = vunpack.c.h.b16 %v2344
      %v2387 = vunpack.c.l.b16 %v2345
      %v2388 = vunpack.c.h.b16 %v2345
      %v2389 = vunpack.c.l.b16 %v2346
      %v2390 = vunpack.c.h.b16 %v2346
      %v2391 = vunpack.c.l.b16 %v2347
      %v2392 = vunpack.c.h.b16 %v2347
      %v2393 = vunpack.c.l.b16 %v2348
      %v2394 = vunpack.c.h.b16 %v2348
      %v2395 = vunpack.c.l.b16 %v2349
      %v2396 = vunpack.c.h.b16 %v2349
      %v2397 = vunpack.c.l.b16 %v2350
      %v2398 = vunpack.c.h.b16 %v2350
      %v2399 = vpack.c.b16 %v2367, %v2367
      %v2400 = vpack.c.b16 %v2368, %v2368
      %v2401 = vpack.c.b16 %v2369, %v2369
      %v2402 = vpack.c.b16 %v2370, %v2370
      %v2403 = vpack.c.b16 %v2371, %v2371
      %v2404 = vpack.c.b16 %v2372, %v2372
      %v2405 = vpack.c.b16 %v2373, %v2373
      %v2406 = vpack.c.b16 %v2374, %v2374
      %v2407 = vpack.c.b16 %v2375, %v2375
      %v2408 = vpack.c.b16 %v2376, %v2376
      %v2409 = vpack.c.b16 %v2377, %v2377
      %v2410 = vpack.c.b16 %v2378, %v2378
      %v2411 = vpack.c.b16 %v2379, %v2379
      %v2412 = vpack.c.b16 %v2380, %v2380
      %v2413 = vpack.c.b16 %v2381, %v2381
      %v2414 = vpack.c.b16 %v2382, %v2382
      %v2415 = vpack.c.b16 %v2383, %v2383
      %v2416 = vpack.c.b16 %v2384, %v2384
      %v2417 = vpack.c.b16 %v2385, %v2385
      %v2418 = vpack.c.b16 %v2386, %v2386
      %v2419 = vpack.c.b16 %v2387, %v2387
      %v2420 = vpack.c.b16 %v2388, %v2388
      %v2421 = vpack.c.b16 %v2389, %v2389
      %v2422 = vpack.c.b16 %v2390, %v2390
      %v2423 = vpack.c.b16 %v2391, %v2391
      %v2424 = vpack.c.b16 %v2392, %v2392
      %v2425 = vpack.c.b16 %v2393, %v2393
      %v2426 = vpack.c.b16 %v2394, %v2394
      %v2427 = vpack.c.b16 %v2395, %v2395
      %v2428 = vpack.c.b16 %v2396, %v2396
      %v2429 = vpack.c.b16 %v2397, %v2397
      %v2430 = vpack.c.b16 %v2398, %v2398
      %vm2463 = vcmask 27648
      %2464 = vst.msk [vmem:[%s219] sm:$0xf] %vm2463, %v2399
      %2465 = vst.msk [vmem:[%s219 + $0x4] sm:$0xf] %vm2463, %v2400
      %2466 = vst.msk [vmem:[%s219 + $0x8] sm:$0xf] %vm2463, %v2401
      %2467 = vst.msk [vmem:[%s219 + $0xc] sm:$0xf] %vm2463, %v2402
      %2468 = vst.msk [vmem:[%s219 + $0x10] sm:$0xf] %vm2463, %v2403
      %2469 = vst.msk [vmem:[%s219 + $0x14] sm:$0xf] %vm2463, %v2404
      %2470 = vst.msk [vmem:[%s219 + $0x18] sm:$0xf] %vm2463, %v2405
      %2471 = vst.msk [vmem:[%s219 + $0x1c] sm:$0xf] %vm2463, %v2406
      %2472 = vst.msk [vmem:[%s219 + $0x20] sm:$0xf] %vm2463, %v2407
      %2473 = vst.msk [vmem:[%s219 + $0x24] sm:$0xf] %vm2463, %v2408
      %2474 = vst.msk [vmem:[%s219 + $0x28] sm:$0xf] %vm2463, %v2409
      %2475 = vst.msk [vmem:[%s219 + $0x2c] sm:$0xf] %vm2463, %v2410
      %2476 = vst.msk [vmem:[%s219 + $0x30] sm:$0xf] %vm2463, %v2411
      %2477 = vst.msk [vmem:[%s219 + $0x34] sm:$0xf] %vm2463, %v2412
      %2478 = vst.msk [vmem:[%s219 + $0x38] sm:$0xf] %vm2463, %v2413
      %2479 = vst.msk [vmem:[%s219 + $0x3c] sm:$0xf] %vm2463, %v2414
      %2480 = vst.msk [vmem:[%s219 + $0x40] sm:$0xf] %vm2463, %v2415
      %2481 = vst.msk [vmem:[%s219 + $0x44] sm:$0xf] %vm2463, %v2416
      %2482 = vst.msk [vmem:[%s219 + $0x48] sm:$0xf] %vm2463, %v2417
      %2483 = vst.msk [vmem:[%s219 + $0x4c] sm:$0xf] %vm2463, %v2418
      %2484 = vst.msk [vmem:[%s219 + $0x50] sm:$0xf] %vm2463, %v2419
      %2485 = vst.msk [vmem:[%s219 + $0x54] sm:$0xf] %vm2463, %v2420
      %2486 = vst.msk [vmem:[%s219 + $0x58] sm:$0xf] %vm2463, %v2421
      %2487 = vst.msk [vmem:[%s219 + $0x5c] sm:$0xf] %vm2463, %v2422
      %2488 = vst.msk [vmem:[%s219 + $0x60] sm:$0xf] %vm2463, %v2423
      %2489 = vst.msk [vmem:[%s219 + $0x64] sm:$0xf] %vm2463, %v2424
      %2490 = vst.msk [vmem:[%s219 + $0x68] sm:$0xf] %vm2463, %v2425
      %2491 = vst.msk [vmem:[%s219 + $0x6c] sm:$0xf] %vm2463, %v2426
      %2492 = vst.msk [vmem:[%s219 + $0x70] sm:$0xf] %vm2463, %v2427
      %2493 = vst.msk [vmem:[%s219 + $0x74] sm:$0xf] %vm2463, %v2428
      %2494 = vst.msk [vmem:[%s219 + $0x78] sm:$0xf] %vm2463, %v2429
      %2495 = vst.msk [vmem:[%s219 + $0x7c] sm:$0xf] %vm2463, %v2430
      %vm2496 = vcmask 31744
      %v2497 = vsel %vm2496, %v2303, 0.0
      %v2498 = vsel %vm2496, %v2304, 0.0
      %v2499 = vadd.f32 %v2497, %v2498
      %v2500 = vsel %vm2496, %v2305, 0.0
      %v2501 = vadd.f32 %v2499, %v2500
      %v2502 = vsel %vm2496, %v2306, 0.0
      %v2503 = vadd.f32 %v2501, %v2502
      %v2504 = vsel %vm2496, %v2307, 0.0
      %v2505 = vadd.f32 %v2503, %v2504
      %v2506 = vsel %vm2496, %v2308, 0.0
      %v2507 = vadd.f32 %v2505, %v2506
      %v2508 = vsel %vm2496, %v2309, 0.0
      %v2509 = vadd.f32 %v2507, %v2508
      %v2510 = vsel %vm2496, %v2310, 0.0
      %v2511 = vadd.f32 %v2509, %v2510
      %v2512 = vsel %vm2496, %v2311, 0.0
      %v2513 = vadd.f32 %v2511, %v2512
      %v2514 = vsel %vm2496, %v2312, 0.0
      %v2515 = vadd.f32 %v2513, %v2514
      %v2516 = vsel %vm2496, %v2313, 0.0
      %v2517 = vadd.f32 %v2515, %v2516
      %v2518 = vsel %vm2496, %v2314, 0.0
      %v2519 = vadd.f32 %v2517, %v2518
      %v2520 = vsel %vm2496, %v2315, 0.0
      %v2521 = vadd.f32 %v2519, %v2520
      %v2522 = vsel %vm2496, %v2316, 0.0
      %v2523 = vadd.f32 %v2521, %v2522
      %v2524 = vsel %vm2496, %v2317, 0.0
      %v2525 = vadd.f32 %v2523, %v2524
      %v2526 = vsel %vm2496, %v2318, 0.0
      %v2527 = vadd.f32 %v2525, %v2526
      %v2528 = vsel %vm2496, %v2319, 0.0
      %v2529 = vadd.f32 %v2527, %v2528
      %v2530 = vsel %vm2496, %v2320, 0.0
      %v2531 = vadd.f32 %v2529, %v2530
      %v2532 = vsel %vm2496, %v2321, 0.0
      %v2533 = vadd.f32 %v2531, %v2532
      %v2534 = vsel %vm2496, %v2322, 0.0
      %v2535 = vadd.f32 %v2533, %v2534
      %v2536 = vsel %vm2496, %v2323, 0.0
      %v2537 = vadd.f32 %v2535, %v2536
      %v2538 = vsel %vm2496, %v2324, 0.0
      %v2539 = vadd.f32 %v2537, %v2538
      %v2540 = vsel %vm2496, %v2325, 0.0
      %v2541 = vadd.f32 %v2539, %v2540
      %v2542 = vsel %vm2496, %v2326, 0.0
      %v2543 = vadd.f32 %v2541, %v2542
      %v2544 = vsel %vm2496, %v2327, 0.0
      %v2545 = vadd.f32 %v2543, %v2544
      %v2546 = vsel %vm2496, %v2328, 0.0
      %v2547 = vadd.f32 %v2545, %v2546
      %v2548 = vsel %vm2496, %v2329, 0.0
      %v2549 = vadd.f32 %v2547, %v2548
      %v2550 = vsel %vm2496, %v2330, 0.0
      %v2551 = vadd.f32 %v2549, %v2550
      %v2552 = vsel %vm2496, %v2331, 0.0
      %v2553 = vadd.f32 %v2551, %v2552
      %v2554 = vsel %vm2496, %v2332, 0.0
      %v2555 = vadd.f32 %v2553, %v2554
      %v2556 = vsel %vm2496, %v2333, 0.0
      %v2557 = vadd.f32 %v2555, %v2556
      %v2558 = vsel %vm2496, %v2334, 0.0
      %v2559 = vadd.f32 %v2557, %v2558
      %v2560 = vrot.slane %v2559, 4
      %v2561 = vadd.f32 %v2559, %v2560
      %v2562 = vrot.slane %v2561, 2
      %v2563 = vadd.f32 %v2561, %v2562
      %v2564 = vrot.slane %v2563, 1
      %v2565 = vadd.f32 %v2563, %v2564
      %vm2566 = vcmask 24576
      %2567 = vst.msk [vmem:[%s226] sm:$0x1] %vm2566, %v2565
      %v2568 = vmul.f32 %v2303, %v2303
      %v2569 = vmul.f32 %v2304, %v2304
      %v2570 = vmul.f32 %v2305, %v2305
      %v2571 = vmul.f32 %v2306, %v2306
      %v2572 = vmul.f32 %v2307, %v2307
      %v2573 = vmul.f32 %v2308, %v2308
      %v2574 = vmul.f32 %v2309, %v2309
      %v2575 = vmul.f32 %v2310, %v2310
      %v2576 = vmul.f32 %v2311, %v2311
      %v2577 = vmul.f32 %v2312, %v2312
      %v2578 = vmul.f32 %v2313, %v2313
      %v2579 = vmul.f32 %v2314, %v2314
      %v2580 = vmul.f32 %v2315, %v2315
      %v2581 = vmul.f32 %v2316, %v2316
      %v2582 = vmul.f32 %v2317, %v2317
      %v2583 = vmul.f32 %v2318, %v2318
      %v2584 = vmul.f32 %v2319, %v2319
      %v2585 = vmul.f32 %v2320, %v2320
      %v2586 = vmul.f32 %v2321, %v2321
      %v2587 = vmul.f32 %v2322, %v2322
      %v2588 = vmul.f32 %v2323, %v2323
      %v2589 = vmul.f32 %v2324, %v2324
      %v2590 = vmul.f32 %v2325, %v2325
      %v2591 = vmul.f32 %v2326, %v2326
      %v2592 = vmul.f32 %v2327, %v2327
      %v2593 = vmul.f32 %v2328, %v2328
      %v2594 = vmul.f32 %v2329, %v2329
      %v2595 = vmul.f32 %v2330, %v2330
      %v2596 = vmul.f32 %v2331, %v2331
      %v2597 = vmul.f32 %v2332, %v2332
      %v2598 = vmul.f32 %v2333, %v2333
      %v2599 = vmul.f32 %v2334, %v2334
      %v2600 = vsel %vm2496, %v2568, 0.0
      %v2601 = vsel %vm2496, %v2569, 0.0
      %v2602 = vadd.f32 %v2600, %v2601
      %v2603 = vsel %vm2496, %v2570, 0.0
      %v2604 = vadd.f32 %v2602, %v2603
      %v2605 = vsel %vm2496, %v2571, 0.0
      %v2606 = vadd.f32 %v2604, %v2605
      %v2607 = vsel %vm2496, %v2572, 0.0
      %v2608 = vadd.f32 %v2606, %v2607
      %v2609 = vsel %vm2496, %v2573, 0.0
      %v2610 = vadd.f32 %v2608, %v2609
      %v2611 = vsel %vm2496, %v2574, 0.0
      %v2612 = vadd.f32 %v2610, %v2611
      %v2613 = vsel %vm2496, %v2575, 0.0
      %v2614 = vadd.f32 %v2612, %v2613
      %v2615 = vsel %vm2496, %v2576, 0.0
      %v2616 = vadd.f32 %v2614, %v2615
      %v2617 = vsel %vm2496, %v2577, 0.0
      %v2618 = vadd.f32 %v2616, %v2617
      %v2619 = vsel %vm2496, %v2578, 0.0
      %v2620 = vadd.f32 %v2618, %v2619
      %v2621 = vsel %vm2496, %v2579, 0.0
      %v2622 = vadd.f32 %v2620, %v2621
      %v2623 = vsel %vm2496, %v2580, 0.0
      %v2624 = vadd.f32 %v2622, %v2623
      %v2625 = vsel %vm2496, %v2581, 0.0
      %v2626 = vadd.f32 %v2624, %v2625
      %v2627 = vsel %vm2496, %v2582, 0.0
      %v2628 = vadd.f32 %v2626, %v2627
      %v2629 = vsel %vm2496, %v2583, 0.0
      %v2630 = vadd.f32 %v2628, %v2629
      %v2631 = vsel %vm2496, %v2584, 0.0
      %v2632 = vadd.f32 %v2630, %v2631
      %v2633 = vsel %vm2496, %v2585, 0.0
      %v2634 = vadd.f32 %v2632, %v2633
      %v2635 = vsel %vm2496, %v2586, 0.0
      %v2636 = vadd.f32 %v2634, %v2635
      %v2637 = vsel %vm2496, %v2587, 0.0
      %v2638 = vadd.f32 %v2636, %v2637
      %v2639 = vsel %vm2496, %v2588, 0.0
      %v2640 = vadd.f32 %v2638, %v2639
      %v2641 = vsel %vm2496, %v2589, 0.0
      %v2642 = vadd.f32 %v2640, %v2641
      %v2643 = vsel %vm2496, %v2590, 0.0
      %v2644 = vadd.f32 %v2642, %v2643
      %v2645 = vsel %vm2496, %v2591, 0.0
      %v2646 = vadd.f32 %v2644, %v2645
      %v2647 = vsel %vm2496, %v2592, 0.0
      %v2648 = vadd.f32 %v2646, %v2647
      %v2649 = vsel %vm2496, %v2593, 0.0
      %v2650 = vadd.f32 %v2648, %v2649
      %v2651 = vsel %vm2496, %v2594, 0.0
      %v2652 = vadd.f32 %v2650, %v2651
      %v2653 = vsel %vm2496, %v2595, 0.0
      %v2654 = vadd.f32 %v2652, %v2653
      %v2655 = vsel %vm2496, %v2596, 0.0
      %v2656 = vadd.f32 %v2654, %v2655
      %v2657 = vsel %vm2496, %v2597, 0.0
      %v2658 = vadd.f32 %v2656, %v2657
      %v2659 = vsel %vm2496, %v2598, 0.0
      %v2660 = vadd.f32 %v2658, %v2659
      %v2661 = vsel %vm2496, %v2599, 0.0
      %v2662 = vadd.f32 %v2660, %v2661
      %v2663 = vrot.slane %v2662, 4
      %v2664 = vadd.f32 %v2662, %v2663
      %v2665 = vrot.slane %v2664, 2
      %v2666 = vadd.f32 %v2664, %v2665
      %v2667 = vrot.slane %v2666, 1
      %v2668 = vadd.f32 %v2666, %v2667
      %2669 = vst.msk [vmem:[%s226 + $0x1] sm:$0x1] %vm2566, %v2668
      %p2670 = scmp.lt.s32.totalorder %s19, 1
      %s2671 = scalar_select %p2670, %s19, 1
      %p2672 = scmp.lt.s32.totalorder %s20, 0
      %s2673 = scalar_select %p2672, %s20, 0
      %s2674 = smul.addr %s2671, 32
      %s2675 = sadd.s32 %s2673, %s2674
      %s2676 = smul.addr %s2675, 4
      %s2677 = scalar_lea.vmem %s2, %s2676
      %p2678 = scmp.lt.s32.totalorder %s19, 1
      %s2679 = scalar_select %p2678, %s19, 1
      %p2680 = scmp.lt.s32.totalorder %s20, 0
      %s2681 = scalar_select %p2680, %s20, 0
      %s2682 = sadd.s32 %s2681, %s2679
      %s2683 = smul.addr %s2682, 2
      %s2684 = scalar_lea.vmem %s3, %s2683
      // Predicated region
      $region33: #{basic_block_forward.6} parent=27 // pred_check
        %p2685 = pneg %p99
      $region34: #{basic_block_forward.6} parent=27 // pred_check_branch
        %2687 = sbr.rel (%p2685) target = $region36
      $region35: #{basic_block_forward.6} parent=27 // pred_region
        _
      $region36: #{basic_block_forward.6} parent=27 // pred_fallthru
        _
      // Predicated region
      $region37: #{basic_block_forward.6} parent=27 // pred_check
        %p2688 = pneg %p127
      $region38: #{basic_block_forward.6} parent=27 // pred_check_branch
        %2690 = sbr.rel (%p2688) target = $region40
      $region39: #{basic_block_forward.6} parent=27 // pred_region
        _
      $region40: #{basic_block_forward.6} parent=27 // pred_fallthru
        _
    $region28: #{basic_block_forward.6} parent=5 // pred_fallthru
      _
    %p2691 = scmp.le.s32.totalorder 2, %s10
    // Predicated region
    $region41: #{basic_block_forward.6} parent=5 // pred_check
      %p2692 = pneg %p2691
    $region42: #{basic_block_forward.6} parent=5 // pred_check_branch
      %2694 = sbr.rel (%p2692) target = $region44
    $region43: #{basic_block_forward.6} parent=5 // pred_region
      %s2695 = ssub.s32 %s10, 2
      // Predicated region
      $region45: #{basic_block_forward.6} parent=43 // pred_check
        %p2696 = pneg %p105
      $region46: #{basic_block_forward.6} parent=43 // pred_check_branch
        %2698 = sbr.rel (%p2696) target = $region48
      $region47: #{basic_block_forward.6} parent=43 // pred_region
        %p2699 = scmp.lt.s32.totalorder %s21, 1
        %s2700 = scalar_select %p2699, %s21, 1
        %p2701 = scmp.lt.s32.totalorder %s22, 0
        %s2702 = scalar_select %p2701, %s22, 0
        %s2703 = smul.addr %s2700, 32
        %s2704 = sadd.s32 %s2702, %s2703
        %s2705 = smul.addr %s2704, 4
        %s2706 = scalar_lea.vmem %s2, %s2705
      $region48: #{basic_block_forward.6} parent=43 // pred_fallthru
        _
      // Predicated region
      $region49: #{basic_block_forward.6} parent=43 // pred_check
        %p2707 = pneg %p133
      $region50: #{basic_block_forward.6} parent=43 // pred_check_branch
        %2709 = sbr.rel (%p2707) target = $region52
      $region51: #{basic_block_forward.6} parent=43 // pred_region
        %p2710 = scmp.lt.s32.totalorder %s21, 1
        %s2711 = scalar_select %p2710, %s21, 1
        %p2712 = scmp.lt.s32.totalorder %s22, 0
        %s2713 = scalar_select %p2712, %s22, 0
        %s2714 = sadd.s32 %s2713, %s2711
        %s2715 = smul.addr %s2714, 2
        %s2716 = scalar_lea.vmem %s3, %s2715
      $region52: #{basic_block_forward.6} parent=43 // pred_fallthru
        _
    $region44: #{basic_block_forward.6} parent=5 // pred_fallthru
      _
  $region6: #{basic_block_forward.6} parent=0 // loop_footer
    %s14 = sadd.s32 1, %s10
  $region7: #{basic_block_forward.6} parent=0 // loop_footer_branch
    %9 = sbr.rel target = $region3
  $region8: #{basic_block_forward.6} parent=0 // loop_exit
    _

</llo_original>
